<compile_context>
chip_gen: v7x
topology: tpu7x:2x2x1
jax: 0.10.0
libtpu: 0.0.40
codegen_flags: <defaults>
</compile_context>

<pallas_src>
import functools

import jax
import jax.numpy as jnp
from jax.experimental import pallas as pl
from jax.experimental.pallas import tpu as pltpu


# ----------------------------- Pallas kernel --------------------------------

def _convlstm_cell_kernel(xh_ref, c_ref, w_ref, b_ref, h_out_ref, c_out_ref,
                          *, frame, wp, cout):
    """One ConvLSTMCell step for a single batch element.

    xh_ref    : (1, P, Cin+Cout)   zero-padded, row-flattened conv input
    c_ref     : (1, F, Cout)       previous cell state (frame layout)
    w_ref     : (9, Cin+Cout, 4*Cout)  one (Cin_tot, 4*Cout) matrix per 3x3 tap
    b_ref     : (1, 4*Cout)
    h_out_ref : (1, F, Cout)       new hidden state (frame layout)
    c_out_ref : (1, F, Cout)       new cell state   (frame layout)
    """
    # 3x3 conv as 9 shifted matmuls, accumulated in f32 on the MXU.
    acc = jnp.zeros((frame, 4 * cout), jnp.float32)
    for tap in range(9):                      # static -> fully unrolled
        dy, dx = tap // 3, tap % 3
        off = dy * wp + dx                    # static row offset into padded input
        patch = xh_ref[0, off:off + frame, :].astype(jnp.float32)
        acc = acc + jnp.dot(patch, w_ref[tap].astype(jnp.float32),
                            preferred_element_type=jnp.float32)
    acc = acc + b_ref[...].astype(jnp.float32)      # (1, 4*Cout) broadcasts

    i = jax.nn.sigmoid(acc[:, 0 * cout:1 * cout])
    f = jax.nn.sigmoid(acc[:, 1 * cout:2 * cout])
    g = jnp.tanh(acc[:, 2 * cout:3 * cout])
    o = jax.nn.sigmoid(acc[:, 3 * cout:4 * cout])

    c_prev = c_ref[0].astype(jnp.float32)
    c_new = f * c_prev + i * g
    h_new = o * jnp.tanh(c_new)

    c_out_ref[0] = c_new.astype(c_out_ref.dtype)
    h_out_ref[0] = h_new.astype(h_out_ref.dtype)


def _convlstm_cell_step(xh_pf, c_frame, w9, b2, *, wp, frame, cout):
    """Run the fused cell kernel over the batch (grid = batch)."""
    B, P, ctot = xh_pf.shape
    dtype = xh_pf.dtype
    kernel = functools.partial(_convlstm_cell_kernel,
                               frame=frame, wp=wp, cout=cout)
    return pl.pallas_call(
        kernel,
        out_shape=(jax.ShapeDtypeStruct((B, frame, cout), dtype),
                   jax.ShapeDtypeStruct((B, frame, cout), dtype)),
        grid_spec=pltpu.PrefetchScalarGridSpec(
            num_scalar_prefetch=0,
            grid=(B,),
            in_specs=[
                pl.BlockSpec((1, P, ctot), lambda b: (b, 0, 0)),
                pl.BlockSpec((1, frame, cout), lambda b: (b, 0, 0)),
                pl.BlockSpec((9, ctot, 4 * cout), lambda b: (0, 0, 0)),
                pl.BlockSpec((1, 4 * cout), lambda b: (0, 0)),
            ],
            out_specs=[
                pl.BlockSpec((1, frame, cout), lambda b: (b, 0, 0)),
                pl.BlockSpec((1, frame, cout), lambda b: (b, 0, 0)),
            ],
        ),
        # Batch axis is independent -> megacore split on v7x; no-op on v5e/v6e.
        compiler_params=pltpu.CompilerParams(
            dimension_semantics=("parallel",)),
    )(xh_pf, c_frame, w9, b2)


# --------------------------- layout helpers (XLA) ---------------------------

def _to_frame(a, H, W):
    # (B,H,W,C) -> (B, H*(W+2), C); frame row y*(W+2)+x holds a[:,y,x,:].
    B, C = a.shape[0], a.shape[-1]
    ap = jnp.pad(a, ((0, 0), (0, 0), (0, 2), (0, 0)))
    return ap.reshape(B, H * (W + 2), C)


def _from_frame(a, H, W):
    # inverse of _to_frame; drops the garbage columns x in {W, W+1}.
    B, C = a.shape[0], a.shape[-1]
    return a.reshape(B, H, W + 2, C)[:, :, :W, :]


def _to_padded_flat(a, H, W):
    # zero-pad ((1,2),(1,1)) spatially, then flatten rows: padded row
    # (y+dy)*(W+2)+(x+dx) is the conv input needed by output q=y*(W+2)+x, tap (dy,dx).
    B, C = a.shape[0], a.shape[-1]
    ap = jnp.pad(a, ((0, 0), (1, 2), (1, 1), (0, 0)))
    return ap.reshape(B, (H + 3) * (W + 2), C)


# ----------------------------- ConvLSTM forward -----------------------------

def conv_lstm_forward(x, weights, biases, out_channels, state=None):
    """x: (B, T, Cin, H, W); weights[l]: (4*Cout, Cin_l+Cout, 3, 3); biases[l]: (4*Cout,).

    Returns (out, (h, c)) with out: (B, T, Cout, H, W), h/c: (B, Cout*L, H, W),
    matching the PyTorch ConvLSTM.forward semantics.
    """
    B, T, _, H, W = x.shape
    L = len(weights)
    cout = out_channels
    wp = W + 2
    frame = H * wp
    dtype = x.dtype

    x_cl = jnp.transpose(x, (0, 1, 3, 4, 2))          # (B, T, H, W, Cin)

    if state is None:
        h_sp = [jnp.zeros((B, H, W, cout), dtype) for _ in range(L)]
        c_sp = [jnp.zeros((B, H, W, cout), dtype) for _ in range(L)]
    else:
        h_all, c_all = state
        h_sp = [jnp.transpose(a, (0, 2, 3, 1)) for a in jnp.split(h_all, L, axis=1)]
        c_sp = [jnp.transpose(a, (0, 2, 3, 1)) for a in jnp.split(c_all, L, axis=1)]
    c_frame = [_to_frame(c_, H, W) for c_ in c_sp]     # carried in frame layout

    # PyTorch conv weight (O, I, kh, kw) -> per-tap matrices (9, I, O).
    w9 = [jnp.transpose(w, (2, 3, 1, 0)).reshape(9, w.shape[1], 4 * cout)
          for w in weights]
    b2 = [b.reshape(1, 4 * cout) for b in biases]

    outs = []
    for t in range(T):
        inp = x_cl[:, t]
        for l in range(L):
            xh = jnp.concatenate([inp, h_sp[l]], axis=-1)      # (B, H, W, Cin_l+Cout)
            xh_pf = _to_padded_flat(xh, H, W)                  # (B, (H+3)*(W+2), C)
            h_frame, c_frame[l] = _convlstm_cell_step(
                xh_pf, c_frame[l], w9[l], b2[l], wp=wp, frame=frame, cout=cout)
            h_sp[l] = _from_frame(h_frame, H, W)
            inp = h_sp[l]
        outs.append(h_sp[-1])

    out = jnp.stack(outs, axis=1)                       # (B, T, H, W, Cout)
    out = jnp.transpose(out, (0, 1, 4, 2, 3))           # (B, T, Cout, H, W)
    h_all = jnp.concatenate([jnp.transpose(a, (0, 3, 1, 2)) for a in h_sp], axis=1)
    c_all = jnp.concatenate(
        [jnp.transpose(_from_frame(cf, H, W), (0, 3, 1, 2)) for cf in c_frame],
        axis=1)
    return out, (h_all, c_all)


# ------------------------------ pure-JAX reference --------------------------

def _reference_conv_lstm(x, weights, biases, out_channels, state=None):
    B, T, _, H, W = x.shape
    L = len(weights)
    cout = out_channels
    if state is None:
        h_all = jnp.zeros((B, cout * L, H, W), x.dtype)
        c_all = jnp.zeros_like(h_all)
    else:
        h_all, c_all = state
    h = list(jnp.split(h_all, L, axis=1))
    c = list(jnp.split(c_all, L, axis=1))

    def cell(inp, h_, c_, w, b):
        xh = jnp.concatenate([inp, h_], axis=1)
        y = jax.lax.conv_general_dilated(
            xh, w, window_strides=(1, 1), padding=((1, 1), (1, 1)),
            dimension_numbers=("NCHW", "OIHW", "NCHW"))
        y = y + b[None, :, None, None]
        i, f, g, o = jnp.split(y, 4, axis=1)
        i, f, o = jax.nn.sigmoid(i), jax.nn.sigmoid(f), jax.nn.sigmoid(o)
        g = jnp.tanh(g)
        c_new = c_ * f + i * g
        h_new = o * jnp.tanh(c_new)
        return h_new, c_new

    outs = []
    for t in range(T):
        inp = x[:, t]
        for l in range(L):
            h[l], c[l] = cell(inp, h[l], c[l], weights[l], biases[l])
            inp = h[l]
        outs.append(h[-1])
    out = jnp.stack(outs, axis=1)
    return out, (jnp.concatenate(h, axis=1), jnp.concatenate(c, axis=1))


# ------------------------------------ main -----------------------------------

if __name__ == "__main__":
    key = jax.random.PRNGKey(0)
    B, T, Cin, H, W = 2, 8, 4, 16, 16
    Cout, L = 32, 1

    keys = jax.random.split(key, 1 + 2 * L)
    x = jax.random.normal(keys[0], (B, T, Cin, H, W), dtype=jnp.float32)
    weights, biases = [], []
    for l in range(L):
        cin_l = Cin if l == 0 else Cout
        fan_in = 9 * (cin_l + Cout)
        w = jax.random.normal(keys[1 + 2 * l], (4 * Cout, cin_l + Cout, 3, 3),
                              dtype=jnp.float32) / jnp.sqrt(fan_in)
        b = 0.1 * jax.random.normal(keys[2 + 2 * l], (4 * Cout,), dtype=jnp.float32)
        weights.append(w)
        biases.append(b)

    fwd = jax.jit(functools.partial(conv_lstm_forward, out_channels=Cout))
    out, (h, c) = fwd(x, weights, biases)
    jax.block_until_ready((out, h, c))

    ref_out, (ref_h, ref_c) = _reference_conv_lstm(x, weights, biases, Cout)

    assert out.shape == (B, T, Cout, H, W), out.shape
    assert h.shape == (B, Cout * L, H, W) and c.shape == h.shape
    # Tolerance allows for different MXU f32 precision modes between the Pallas
    # matmul path and XLA's conv; real implementation bugs are >> this.
    tol = dict(atol=2e-2, rtol=2e-2)
    assert jnp.allclose(out, ref_out, **tol), float(jnp.max(jnp.abs(out - ref_out)))
    assert jnp.allclose(h, ref_h, **tol), float(jnp.max(jnp.abs(h - ref_h)))
    assert jnp.allclose(c, ref_c, **tol), float(jnp.max(jnp.abs(c - ref_c)))

    print("KERNEL_OK")
</pallas_src>

<mosaic_0001>
module attributes {stable_mosaic.version = 11 : i64} {
  func.func @_convlstm_cell_kernel(%arg0: i32, %arg1: memref<1x342x36xf32, #tpu.memory_space<vmem>>, %arg2: memref<1x288x32xf32, #tpu.memory_space<vmem>>, %arg3: memref<9x36x128xf32, #tpu.memory_space<vmem>>, %arg4: memref<1x128xf32, #tpu.memory_space<vmem>>, %arg5: memref<1x288x32xf32, #tpu.memory_space<vmem>>, %arg6: memref<1x288x32xf32, #tpu.memory_space<vmem>>) attributes {dimension_semantics = [#tpu.dimension_semantics<parallel>], iteration_bounds = array<i64: 2>, scalar_prefetch = 0 : i64, scratch_operands = 0 : i64, tpu.core_type = #tpu.core_type<tc>, window_params = [{transform_indices = @transform_0, window_bounds = array<i64: 1, 342, 36>}, {transform_indices = @transform_1, window_bounds = array<i64: 1, 288, 32>}, {pipeline_mode = #tpu.pipeline_mode<synchronous>, transform_indices = @transform_2, window_bounds = array<i64: 9, 36, 128>}, {pipeline_mode = #tpu.pipeline_mode<synchronous>, transform_indices = @transform_3, window_bounds = array<i64: 1, 128>}, {transform_indices = @transform_4, window_bounds = array<i64: 1, 288, 32>}, {transform_indices = @transform_5, window_bounds = array<i64: 1, 288, 32>}]} {
    %cst = arith.constant 0.000000e+00 : f32
    %0 = vector.broadcast %cst : f32 to vector<288x128xf32>
    %c0 = arith.constant 0 : index
    %c0_0 = arith.constant 0 : index
    %c0_1 = arith.constant 0 : index
    %1 = vector.load %arg1[%c0, %c0_0, %c0_1] : memref<1x342x36xf32, #tpu.memory_space<vmem>>, vector<1x288x36xf32>
    %2 = vector.shape_cast %1 : vector<1x288x36xf32> to vector<288x36xf32>
    %c0_2 = arith.constant 0 : index
    %c0_3 = arith.constant 0 : index
    %c0_4 = arith.constant 0 : index
    %3 = vector.load %arg3[%c0_2, %c0_3, %c0_4] : memref<9x36x128xf32, #tpu.memory_space<vmem>>, vector<1x36x128xf32>
    %4 = vector.shape_cast %3 : vector<1x36x128xf32> to vector<36x128xf32>
    %cst_5 = arith.constant dense<0.000000e+00> : vector<288x128xf32>
    %5 = tpu.matmul %2, %4, %cst_5 {dimension_numbers = #tpu.dot_dimension_numbers<[1], [0], [0], [1], [0, 0, 1, 1], [], []>} : vector<288x36xf32>, vector<36x128xf32>, vector<288x128xf32> -> vector<288x128xf32>
    %6 = arith.addf %0, %5 : vector<288x128xf32>
    %c0_6 = arith.constant 0 : index
    %c1 = arith.constant 1 : index
    %c0_7 = arith.constant 0 : index
    %7 = vector.load %arg1[%c0_6, %c1, %c0_7] : memref<1x342x36xf32, #tpu.memory_space<vmem>>, vector<1x288x36xf32>
    %8 = vector.shape_cast %7 : vector<1x288x36xf32> to vector<288x36xf32>
    %c1_8 = arith.constant 1 : index
    %c0_9 = arith.constant 0 : index
    %c0_10 = arith.constant 0 : index
    %9 = vector.load %arg3[%c1_8, %c0_9, %c0_10] : memref<9x36x128xf32, #tpu.memory_space<vmem>>, vector<1x36x128xf32>
    %10 = vector.shape_cast %9 : vector<1x36x128xf32> to vector<36x128xf32>
    %cst_11 = arith.constant dense<0.000000e+00> : vector<288x128xf32>
    %11 = tpu.matmul %8, %10, %cst_11 {dimension_numbers = #tpu.dot_dimension_numbers<[1], [0], [0], [1], [0, 0, 1, 1], [], []>} : vector<288x36xf32>, vector<36x128xf32>, vector<288x128xf32> -> vector<288x128xf32>
    %12 = arith.addf %6, %11 : vector<288x128xf32>
    %c0_12 = arith.constant 0 : index
    %c2 = arith.constant 2 : index
    %c0_13 = arith.constant 0 : index
    %13 = vector.load %arg1[%c0_12, %c2, %c0_13] : memref<1x342x36xf32, #tpu.memory_space<vmem>>, vector<1x288x36xf32>
    %14 = vector.shape_cast %13 : vector<1x288x36xf32> to vector<288x36xf32>
    %c2_14 = arith.constant 2 : index
    %c0_15 = arith.constant 0 : index
    %c0_16 = arith.constant 0 : index
    %15 = vector.load %arg3[%c2_14, %c0_15, %c0_16] : memref<9x36x128xf32, #tpu.memory_space<vmem>>, vector<1x36x128xf32>
    %16 = vector.shape_cast %15 : vector<1x36x128xf32> to vector<36x128xf32>
    %cst_17 = arith.constant dense<0.000000e+00> : vector<288x128xf32>
    %17 = tpu.matmul %14, %16, %cst_17 {dimension_numbers = #tpu.dot_dimension_numbers<[1], [0], [0], [1], [0, 0, 1, 1], [], []>} : vector<288x36xf32>, vector<36x128xf32>, vector<288x128xf32> -> vector<288x128xf32>
    %18 = arith.addf %12, %17 : vector<288x128xf32>
    %c0_18 = arith.constant 0 : index
    %c18 = arith.constant 18 : index
    %c0_19 = arith.constant 0 : index
    %19 = vector.load %arg1[%c0_18, %c18, %c0_19] : memref<1x342x36xf32, #tpu.memory_space<vmem>>, vector<1x288x36xf32>
    %20 = vector.shape_cast %19 : vector<1x288x36xf32> to vector<288x36xf32>
    %c3 = arith.constant 3 : index
    %c0_20 = arith.constant 0 : index
    %c0_21 = arith.constant 0 : index
    %21 = vector.load %arg3[%c3, %c0_20, %c0_21] : memref<9x36x128xf32, #tpu.memory_space<vmem>>, vector<1x36x128xf32>
    %22 = vector.shape_cast %21 : vector<1x36x128xf32> to vector<36x128xf32>
    %cst_22 = arith.constant dense<0.000000e+00> : vector<288x128xf32>
    %23 = tpu.matmul %20, %22, %cst_22 {dimension_numbers = #tpu.dot_dimension_numbers<[1], [0], [0], [1], [0, 0, 1, 1], [], []>} : vector<288x36xf32>, vector<36x128xf32>, vector<288x128xf32> -> vector<288x128xf32>
    %24 = arith.addf %18, %23 : vector<288x128xf32>
    %c0_23 = arith.constant 0 : index
    %c19 = arith.constant 19 : index
    %c0_24 = arith.constant 0 : index
    %25 = vector.load %arg1[%c0_23, %c19, %c0_24] : memref<1x342x36xf32, #tpu.memory_space<vmem>>, vector<1x288x36xf32>
    %26 = vector.shape_cast %25 : vector<1x288x36xf32> to vector<288x36xf32>
    %c4 = arith.constant 4 : index
    %c0_25 = arith.constant 0 : index
    %c0_26 = arith.constant 0 : index
    %27 = vector.load %arg3[%c4, %c0_25, %c0_26] : memref<9x36x128xf32, #tpu.memory_space<vmem>>, vector<1x36x128xf32>
    %28 = vector.shape_cast %27 : vector<1x36x128xf32> to vector<36x128xf32>
    %cst_27 = arith.constant dense<0.000000e+00> : vector<288x128xf32>
    %29 = tpu.matmul %26, %28, %cst_27 {dimension_numbers = #tpu.dot_dimension_numbers<[1], [0], [0], [1], [0, 0, 1, 1], [], []>} : vector<288x36xf32>, vector<36x128xf32>, vector<288x128xf32> -> vector<288x128xf32>
    %30 = arith.addf %24, %29 : vector<288x128xf32>
    %c0_28 = arith.constant 0 : index
    %c20 = arith.constant 20 : index
    %c0_29 = arith.constant 0 : index
    %31 = vector.load %arg1[%c0_28, %c20, %c0_29] : memref<1x342x36xf32, #tpu.memory_space<vmem>>, vector<1x288x36xf32>
    %32 = vector.shape_cast %31 : vector<1x288x36xf32> to vector<288x36xf32>
    %c5 = arith.constant 5 : index
    %c0_30 = arith.constant 0 : index
    %c0_31 = arith.constant 0 : index
    %33 = vector.load %arg3[%c5, %c0_30, %c0_31] : memref<9x36x128xf32, #tpu.memory_space<vmem>>, vector<1x36x128xf32>
    %34 = vector.shape_cast %33 : vector<1x36x128xf32> to vector<36x128xf32>
    %cst_32 = arith.constant dense<0.000000e+00> : vector<288x128xf32>
    %35 = tpu.matmul %32, %34, %cst_32 {dimension_numbers = #tpu.dot_dimension_numbers<[1], [0], [0], [1], [0, 0, 1, 1], [], []>} : vector<288x36xf32>, vector<36x128xf32>, vector<288x128xf32> -> vector<288x128xf32>
    %36 = arith.addf %30, %35 : vector<288x128xf32>
    %c0_33 = arith.constant 0 : index
    %c36 = arith.constant 36 : index
    %c0_34 = arith.constant 0 : index
    %37 = vector.load %arg1[%c0_33, %c36, %c0_34] : memref<1x342x36xf32, #tpu.memory_space<vmem>>, vector<1x288x36xf32>
    %38 = vector.shape_cast %37 : vector<1x288x36xf32> to vector<288x36xf32>
    %c6 = arith.constant 6 : index
    %c0_35 = arith.constant 0 : index
    %c0_36 = arith.constant 0 : index
    %39 = vector.load %arg3[%c6, %c0_35, %c0_36] : memref<9x36x128xf32, #tpu.memory_space<vmem>>, vector<1x36x128xf32>
    %40 = vector.shape_cast %39 : vector<1x36x128xf32> to vector<36x128xf32>
    %cst_37 = arith.constant dense<0.000000e+00> : vector<288x128xf32>
    %41 = tpu.matmul %38, %40, %cst_37 {dimension_numbers = #tpu.dot_dimension_numbers<[1], [0], [0], [1], [0, 0, 1, 1], [], []>} : vector<288x36xf32>, vector<36x128xf32>, vector<288x128xf32> -> vector<288x128xf32>
    %42 = arith.addf %36, %41 : vector<288x128xf32>
    %c0_38 = arith.constant 0 : index
    %c37 = arith.constant 37 : index
    %c0_39 = arith.constant 0 : index
    %43 = vector.load %arg1[%c0_38, %c37, %c0_39] : memref<1x342x36xf32, #tpu.memory_space<vmem>>, vector<1x288x36xf32>
    %44 = vector.shape_cast %43 : vector<1x288x36xf32> to vector<288x36xf32>
    %c7 = arith.constant 7 : index
    %c0_40 = arith.constant 0 : index
    %c0_41 = arith.constant 0 : index
    %45 = vector.load %arg3[%c7, %c0_40, %c0_41] : memref<9x36x128xf32, #tpu.memory_space<vmem>>, vector<1x36x128xf32>
    %46 = vector.shape_cast %45 : vector<1x36x128xf32> to vector<36x128xf32>
    %cst_42 = arith.constant dense<0.000000e+00> : vector<288x128xf32>
    %47 = tpu.matmul %44, %46, %cst_42 {dimension_numbers = #tpu.dot_dimension_numbers<[1], [0], [0], [1], [0, 0, 1, 1], [], []>} : vector<288x36xf32>, vector<36x128xf32>, vector<288x128xf32> -> vector<288x128xf32>
    %48 = arith.addf %42, %47 : vector<288x128xf32>
    %c0_43 = arith.constant 0 : index
    %c38 = arith.constant 38 : index
    %c0_44 = arith.constant 0 : index
    %49 = vector.load %arg1[%c0_43, %c38, %c0_44] : memref<1x342x36xf32, #tpu.memory_space<vmem>>, vector<1x288x36xf32>
    %50 = vector.shape_cast %49 : vector<1x288x36xf32> to vector<288x36xf32>
    %c8 = arith.constant 8 : index
    %c0_45 = arith.constant 0 : index
    %c0_46 = arith.constant 0 : index
    %51 = vector.load %arg3[%c8, %c0_45, %c0_46] : memref<9x36x128xf32, #tpu.memory_space<vmem>>, vector<1x36x128xf32>
    %52 = vector.shape_cast %51 : vector<1x36x128xf32> to vector<36x128xf32>
    %cst_47 = arith.constant dense<0.000000e+00> : vector<288x128xf32>
    %53 = tpu.matmul %50, %52, %cst_47 {dimension_numbers = #tpu.dot_dimension_numbers<[1], [0], [0], [1], [0, 0, 1, 1], [], []>} : vector<288x36xf32>, vector<36x128xf32>, vector<288x128xf32> -> vector<288x128xf32>
    %54 = arith.addf %48, %53 : vector<288x128xf32>
    %c0_48 = arith.constant 0 : index
    %c0_49 = arith.constant 0 : index
    %55 = vector.load %arg4[%c0_48, %c0_49] : memref<1x128xf32, #tpu.memory_space<vmem>>, vector<1x128xf32>
    %56 = vector.broadcast %55 : vector<1x128xf32> to vector<288x128xf32>
    %57 = arith.addf %54, %56 : vector<288x128xf32>
    %58 = vector.extract_strided_slice %57 {offsets = [0, 0], sizes = [288, 32], strides = [1, 1]} : vector<288x128xf32> to vector<288x32xf32>
    %59 = arith.negf %58 : vector<288x32xf32>
    %60 = math.exp %59 : vector<288x32xf32>
    %cst_50 = arith.constant 1.000000e+00 : f32
    %61 = vector.broadcast %cst_50 : f32 to vector<288x32xf32>
    %62 = arith.addf %61, %60 : vector<288x32xf32>
    %63 = arith.divf %61, %62 : vector<288x32xf32>
    %64 = vector.extract_strided_slice %57 {offsets = [0, 32], sizes = [288, 32], strides = [1, 1]} : vector<288x128xf32> to vector<288x32xf32>
    %65 = arith.negf %64 : vector<288x32xf32>
    %66 = math.exp %65 : vector<288x32xf32>
    %cst_51 = arith.constant 1.000000e+00 : f32
    %67 = vector.broadcast %cst_51 : f32 to vector<288x32xf32>
    %68 = arith.addf %67, %66 : vector<288x32xf32>
    %69 = arith.divf %67, %68 : vector<288x32xf32>
    %70 = vector.extract_strided_slice %57 {offsets = [0, 64], sizes = [288, 32], strides = [1, 1]} : vector<288x128xf32> to vector<288x32xf32>
    %71 = math.tanh %70 : vector<288x32xf32>
    %72 = vector.extract_strided_slice %57 {offsets = [0, 96], sizes = [288, 32], strides = [1, 1]} : vector<288x128xf32> to vector<288x32xf32>
    %73 = arith.negf %72 : vector<288x32xf32>
    %74 = math.exp %73 : vector<288x32xf32>
    %cst_52 = arith.constant 1.000000e+00 : f32
    %75 = vector.broadcast %cst_52 : f32 to vector<288x32xf32>
    %76 = arith.addf %75, %74 : vector<288x32xf32>
    %77 = arith.divf %75, %76 : vector<288x32xf32>
    %c0_53 = arith.constant 0 : index
    %c0_54 = arith.constant 0 : index
    %c0_55 = arith.constant 0 : index
    %78 = vector.load %arg2[%c0_53, %c0_54, %c0_55] : memref<1x288x32xf32, #tpu.memory_space<vmem>>, vector<1x288x32xf32>
    %79 = vector.shape_cast %78 : vector<1x288x32xf32> to vector<288x32xf32>
    %80 = arith.mulf %69, %79 : vector<288x32xf32>
    %81 = arith.mulf %63, %71 : vector<288x32xf32>
    %82 = arith.addf %80, %81 : vector<288x32xf32>
    %83 = math.tanh %82 : vector<288x32xf32>
    %84 = arith.mulf %77, %83 : vector<288x32xf32>
    %c0_56 = arith.constant 0 : index
    %c0_57 = arith.constant 0 : index
    %c0_58 = arith.constant 0 : index
    %85 = vector.load %arg6[%c0_56, %c0_57, %c0_58] : memref<1x288x32xf32, #tpu.memory_space<vmem>>, vector<1x288x32xf32>
    %86 = vector.shape_cast %85 : vector<1x288x32xf32> to vector<288x32xf32>
    %87 = vector.shape_cast %82 : vector<288x32xf32> to vector<1x288x32xf32>
    tpu.vector_store %arg6[%c0_56, %c0_57, %c0_58], %87 {strides = array<i32>} : memref<1x288x32xf32, #tpu.memory_space<vmem>>, vector<1x288x32xf32>,
    %c0_59 = arith.constant 0 : index
    %c0_60 = arith.constant 0 : index
    %c0_61 = arith.constant 0 : index
    %88 = vector.load %arg5[%c0_59, %c0_60, %c0_61] : memref<1x288x32xf32, #tpu.memory_space<vmem>>, vector<1x288x32xf32>
    %89 = vector.shape_cast %88 : vector<1x288x32xf32> to vector<288x32xf32>
    %90 = vector.shape_cast %84 : vector<288x32xf32> to vector<1x288x32xf32>
    tpu.vector_store %arg5[%c0_59, %c0_60, %c0_61], %90 {strides = array<i32>} : memref<1x288x32xf32, #tpu.memory_space<vmem>>, vector<1x288x32xf32>,
    return
  }
  func.func @transform_0(%arg0: i32) -> (i32, i32, i32) {
    %c0_i32 = arith.constant 0 : i32
    %c0_i32_0 = arith.constant 0 : i32
    %c0_i32_1 = arith.constant 0 : i32
    return %arg0, %c0_i32, %c0_i32_0 : i32, i32, i32
  }
  func.func @transform_1(%arg0: i32) -> (i32, i32, i32) {
    %c0_i32 = arith.constant 0 : i32
    %c0_i32_0 = arith.constant 0 : i32
    %c0_i32_1 = arith.constant 0 : i32
    return %arg0, %c0_i32, %c0_i32_0 : i32, i32, i32
  }
  func.func @transform_2(%arg0: i32) -> (i32, i32, i32) {
    %c0_i32 = arith.constant 0 : i32
    %c0_i32_0 = arith.constant 0 : i32
    %c0_i32_1 = arith.constant 0 : i32
    %c0_i32_2 = arith.constant 0 : i32
    return %c0_i32, %c0_i32_0, %c0_i32_1 : i32, i32, i32
  }
  func.func @transform_3(%arg0: i32) -> (i32, i32) {
    %c0_i32 = arith.constant 0 : i32
    %c0_i32_0 = arith.constant 0 : i32
    %c0_i32_1 = arith.constant 0 : i32
    return %c0_i32, %c0_i32_0 : i32, i32
  }
  func.func @transform_4(%arg0: i32) -> (i32, i32, i32) {
    %c0_i32 = arith.constant 0 : i32
    %c0_i32_0 = arith.constant 0 : i32
    %c0_i32_1 = arith.constant 0 : i32
    return %arg0, %c0_i32, %c0_i32_0 : i32, i32, i32
  }
  func.func @transform_5(%arg0: i32) -> (i32, i32, i32) {
    %c0_i32 = arith.constant 0 : i32
    %c0_i32_0 = arith.constant 0 : i32
    %c0_i32_1 = arith.constant 0 : i32
    return %arg0, %c0_i32, %c0_i32_0 : i32, i32, i32
  }
}

</mosaic_0001>

<llo_original>
// kernel: conv_lstm_forward.8
$region0: #{conv_lstm_forward.8}
  #allocation0 [shape = 'u32[]', space=smem, size = 0x4, offset = 0x4, fixed_abs, tag = 'smem constant byte address 0x4 - core index']
  #allocation1 [shape = 'u32[144,128]{1,0:T(1,128)}', space=vmem, size = 0x12000, scoped, tag = 'internal scratch']
  %s0 = inlined_call_operand.vmem [shape: f32[2,342,36], index: 0, kind: input, shape index: {}]
  %s1 = inlined_call_operand.vmem [shape: f32[2,288,32], index: 1, kind: input, shape index: {}]
  %s2 = inlined_call_operand.vmem [shape: f32[9,36,128], index: 2, kind: input, shape index: {}]
  %s3 = inlined_call_operand.vmem [shape: f32[1,128], index: 3, kind: input, shape index: {}]
  %s4 = inlined_call_operand.vmem [shape: f32[2,288,32], index: 4, kind: output, shape index: {0}]
  %s5 = inlined_call_operand.vmem [shape: f32[2,288,32], index: 5, kind: output, shape index: {1}]
  %6 = xla_tuple %s4, %s5
  %s7 = sld [smem:[#allocation0]]
  $region57: #{conv_lstm_forward.8} parent=0
    _
  %s9 = ssub.s32 1, %s7
  %s10 = scalar_select 0, %s9, %s7
  loop: start=0, step=1, limit=4
  $region2: #{conv_lstm_forward.8} parent=0 // loop_pre_header
    _
  $region3: #{conv_lstm_forward.8} parent=0 // loop_header
    %s12 = sphi 0, %s16
    %p13 = scmp.ge.s32.totalorder %s12, 4
    %s22 = sphi 0, %s24
    %s25 = sphi 0, %s22
    %s26 = sphi 0, %s25
    %s42 = sphi 0, %s26
    %s48 = sphi 0, %s50
    %s51 = sphi 0, %s48
    %s52 = sphi 0, %s51
    %s68 = sphi 0, %s52
    %s72 = sphi 0, %s72
    %s74 = sphi 0, %s72
    %s75 = sphi 0, %s74
    %s89 = sphi 0, %s75
    %s93 = sphi 0, %s93
    %s95 = sphi 0, %s93
    %s96 = sphi 0, %s95
    %s110 = sphi 0, %s96
    %s116 = sphi 0, %s118
    %s119 = sphi 0, %s116
    %s120 = sphi 0, %s119
    %s136 = sphi 0, %s120
    %s142 = sphi 0, %s144
    %s145 = sphi 0, %s142
    %s146 = sphi 0, %s145
    %s162 = sphi 0, %s146
  $region4: #{conv_lstm_forward.8} parent=0 // loop_header_branch
    %15 = sbr.rel (%p13) target = $region8
  $region5: #{conv_lstm_forward.8} parent=0 // loop_body
    %s17 = ssub.s32 %s12, 1
    %s18 = ssub.s32 %s12, 2
    %s19 = sadd.s32 %s12, 1
    %s20 = ssub.s32 %s12, %s19
    %p21 = scmp.eq.s32.totalorder %s20, 0
    %s23 = sadd.s32 %s22, 1
    %s24 = scalar_select %p21, %s22, %s23
    %p27 = pneg %p21
    %p28 = scmp.eq.s32.totalorder %s12, 1
    %p29 = por %p27, %p28
    %p30 = scmp.ne.s32.totalorder %s22, %s25
    %p31 = scmp.eq.s32.totalorder %s12, 0
    %p32 = por %p30, %p31
    %p33 = scmp.ne.s32.totalorder %s22, %s25
    %p34 = scmp.eq.s32.totalorder %s17, 1
    %p35 = por %p33, %p34
    %p36 = scmp.ne.s32.totalorder %s25, %s26
    %p37 = scmp.eq.s32.totalorder %s17, 0
    %p38 = por %p36, %p37
    %p39 = scmp.ne.s32.totalorder %s25, %s26
    %p40 = scmp.eq.s32.totalorder %s18, 1
    %p41 = por %p39, %p40
    %p43 = scmp.ne.s32.totalorder %s26, %s42
    %p44 = scmp.eq.s32.totalorder %s18, 0
    %p45 = por %p43, %p44
    %s46 = ssub.s32 %s12, %s19
    %p47 = scmp.eq.s32.totalorder %s46, 0
    %s49 = sadd.s32 %s48, 1
    %s50 = scalar_select %p47, %s48, %s49
    %p53 = pneg %p47
    %p54 = scmp.eq.s32.totalorder %s12, 1
    %p55 = por %p53, %p54
    %p56 = scmp.ne.s32.totalorder %s48, %s51
    %p57 = scmp.eq.s32.totalorder %s12, 0
    %p58 = por %p56, %p57
    %p59 = scmp.ne.s32.totalorder %s48, %s51
    %p60 = scmp.eq.s32.totalorder %s17, 1
    %p61 = por %p59, %p60
    %p62 = scmp.ne.s32.totalorder %s51, %s52
    %p63 = scmp.eq.s32.totalorder %s17, 0
    %p64 = por %p62, %p63
    %p65 = scmp.ne.s32.totalorder %s51, %s52
    %p66 = scmp.eq.s32.totalorder %s18, 1
    %p67 = por %p65, %p66
    %p69 = scmp.ne.s32.totalorder %s52, %s68
    %p70 = scmp.eq.s32.totalorder %s18, 0
    %p71 = por %p69, %p70
    %s73 = sadd.s32 %s72, 1
    %p76 = scmp.eq.s32.totalorder %s12, 1
    %p77 = scmp.ne.s32.totalorder %s72, %s74
    %p78 = scmp.eq.s32.totalorder %s12, 0
    %p79 = por %p77, %p78
    %p80 = scmp.ne.s32.totalorder %s72, %s74
    %p81 = scmp.eq.s32.totalorder %s17, 1
    %p82 = por %p80, %p81
    %p83 = scmp.ne.s32.totalorder %s74, %s75
    %p84 = scmp.eq.s32.totalorder %s17, 0
    %p85 = por %p83, %p84
    %p86 = scmp.ne.s32.totalorder %s74, %s75
    %p87 = scmp.eq.s32.totalorder %s18, 1
    %p88 = por %p86, %p87
    %p90 = scmp.ne.s32.totalorder %s75, %s89
    %p91 = scmp.eq.s32.totalorder %s18, 0
    %p92 = por %p90, %p91
    %s94 = sadd.s32 %s93, 1
    %p97 = scmp.eq.s32.totalorder %s12, 1
    %p98 = scmp.ne.s32.totalorder %s93, %s95
    %p99 = scmp.eq.s32.totalorder %s12, 0
    %p100 = por %p98, %p99
    %p101 = scmp.ne.s32.totalorder %s93, %s95
    %p102 = scmp.eq.s32.totalorder %s17, 1
    %p103 = por %p101, %p102
    %p104 = scmp.ne.s32.totalorder %s95, %s96
    %p105 = scmp.eq.s32.totalorder %s17, 0
    %p106 = por %p104, %p105
    %p107 = scmp.ne.s32.totalorder %s95, %s96
    %p108 = scmp.eq.s32.totalorder %s18, 1
    %p109 = por %p107, %p108
    %p111 = scmp.ne.s32.totalorder %s96, %s110
    %p112 = scmp.eq.s32.totalorder %s18, 0
    %p113 = por %p111, %p112
    %s114 = ssub.s32 %s12, %s19
    %p115 = scmp.eq.s32.totalorder %s114, 0
    %s117 = sadd.s32 %s116, 1
    %s118 = scalar_select %p115, %s116, %s117
    %p121 = pneg %p115
    %p122 = scmp.eq.s32.totalorder %s12, 1
    %p123 = por %p121, %p122
    %p124 = scmp.ne.s32.totalorder %s116, %s119
    %p125 = scmp.eq.s32.totalorder %s12, 0
    %p126 = por %p124, %p125
    %p127 = scmp.ne.s32.totalorder %s116, %s119
    %p128 = scmp.eq.s32.totalorder %s17, 1
    %p129 = por %p127, %p128
    %p130 = scmp.ne.s32.totalorder %s119, %s120
    %p131 = scmp.eq.s32.totalorder %s17, 0
    %p132 = por %p130, %p131
    %p133 = scmp.ne.s32.totalorder %s119, %s120
    %p134 = scmp.eq.s32.totalorder %s18, 1
    %p135 = por %p133, %p134
    %p137 = scmp.ne.s32.totalorder %s120, %s136
    %p138 = scmp.eq.s32.totalorder %s18, 0
    %p139 = por %p137, %p138
    %s140 = ssub.s32 %s12, %s19
    %p141 = scmp.eq.s32.totalorder %s140, 0
    %s143 = sadd.s32 %s142, 1
    %s144 = scalar_select %p141, %s142, %s143
    %p147 = pneg %p141
    %p148 = scmp.eq.s32.totalorder %s12, 1
    %p149 = por %p147, %p148
    %p150 = scmp.ne.s32.totalorder %s142, %s145
    %p151 = scmp.eq.s32.totalorder %s12, 0
    %p152 = por %p150, %p151
    %p153 = scmp.ne.s32.totalorder %s142, %s145
    %p154 = scmp.eq.s32.totalorder %s17, 1
    %p155 = por %p153, %p154
    %p156 = scmp.ne.s32.totalorder %s145, %s146
    %p157 = scmp.eq.s32.totalorder %s17, 0
    %p158 = por %p156, %p157
    %p159 = scmp.ne.s32.totalorder %s145, %s146
    %p160 = scmp.eq.s32.totalorder %s18, 1
    %p161 = por %p159, %p160
    %p163 = scmp.ne.s32.totalorder %s146, %s162
    %p164 = scmp.eq.s32.totalorder %s18, 0
    %p165 = por %p163, %p164
    %p166 = scmp.le.s32.totalorder 1, %s12
    %p167 = scmp.lt.s32.totalorder %s12, 3
    %p168 = pnand %p166, %p167
    %p169 = pneg %p168
    // Predicated region
    $region9: #{conv_lstm_forward.8} parent=5 // pred_check
      _
    $region10: #{conv_lstm_forward.8} parent=5 // pred_check_branch
      %171 = sbr.rel (%p168) target = $region12
    $region11: #{conv_lstm_forward.8} parent=5 // pred_region
      %s172 = ssub.s32 %s12, 1
      // Predicated region
      $region13: #{conv_lstm_forward.8} parent=11 // pred_check
        %p173 = pneg %p85
      $region14: #{conv_lstm_forward.8} parent=11 // pred_check_branch
        %175 = sbr.rel (%p173) target = $region16
      $region15: #{conv_lstm_forward.8} parent=11 // pred_region
        _
      $region16: #{conv_lstm_forward.8} parent=11 // pred_fallthru
        _
      // Predicated region
      $region17: #{conv_lstm_forward.8} parent=11 // pred_check
        %p176 = pneg %p106
      $region18: #{conv_lstm_forward.8} parent=11 // pred_check_branch
        %178 = sbr.rel (%p176) target = $region20
      $region19: #{conv_lstm_forward.8} parent=11 // pred_region
        _
      $region20: #{conv_lstm_forward.8} parent=11 // pred_fallthru
        _
    $region12: #{conv_lstm_forward.8} parent=5 // pred_fallthru
      _
    %p179 = scmp.lt.s32.totalorder %s12, 2
    // Predicated region
    $region21: #{conv_lstm_forward.8} parent=5 // pred_check
      %p180 = pneg %p179
    $region22: #{conv_lstm_forward.8} parent=5 // pred_check_branch
      %182 = sbr.rel (%p180) target = $region24
    $region23: #{conv_lstm_forward.8} parent=5 // pred_region
      // Predicated region
      $region25: #{conv_lstm_forward.8} parent=23 // pred_check
        %p183 = pneg %p32
      $region26: #{conv_lstm_forward.8} parent=23 // pred_check_branch
        %185 = sbr.rel (%p183) target = $region28
      $region27: #{conv_lstm_forward.8} parent=23 // pred_region
        %p186 = scmp.lt.s32.totalorder %s12, 1
        %s187 = scalar_select %p186, %s12, 1
        %s188 = smul.addr %s187, 43
        %s189 = smul.addr %s188, 8
        %s190 = scalar_lea.vmem %s0, %s189
      $region28: #{conv_lstm_forward.8} parent=23 // pred_fallthru
        _
      // Predicated region
      $region29: #{conv_lstm_forward.8} parent=23 // pred_check
        %p191 = pneg %p58
      $region30: #{conv_lstm_forward.8} parent=23 // pred_check_branch
        %193 = sbr.rel (%p191) target = $region32
      $region31: #{conv_lstm_forward.8} parent=23 // pred_region
        %p194 = scmp.lt.s32.totalorder %s12, 1
        %s195 = scalar_select %p194, %s12, 1
        %s196 = smul.addr %s195, 36
        %s197 = smul.addr %s196, 8
        %s198 = scalar_lea.vmem %s1, %s197
      $region32: #{conv_lstm_forward.8} parent=23 // pred_fallthru
        _
    $region24: #{conv_lstm_forward.8} parent=5 // pred_fallthru
      _
    %p199 = scmp.le.s32.totalorder 1, %s12
    %p200 = scmp.lt.s32.totalorder %s12, 3
    %p201 = pnand %p199, %p200
    %p202 = pneg %p201
    // Predicated region
    $region33: #{conv_lstm_forward.8} parent=5 // pred_check
      _
    $region34: #{conv_lstm_forward.8} parent=5 // pred_check_branch
      %204 = sbr.rel (%p201) target = $region36
    $region35: #{conv_lstm_forward.8} parent=5 // pred_region
      %s205 = ssub.s32 %s12, 1
      %p206 = scmp.lt.s32.totalorder %s17, 1
      %s207 = scalar_select %p206, %s17, 1
      %s208 = smul.addr %s207, 43
      %s209 = smul.addr %s208, 8
      %s210 = scalar_lea.vmem %s0, %s209
      %p211 = pneg %p38
      %p212 = pneg %p35
      %p213 = scmp.lt.s32.totalorder %s17, 1
      %s214 = scalar_select %p213, %s17, 1
      %s215 = smul.addr %s214, 36
      %s216 = smul.addr %s215, 8
      %s217 = scalar_lea.vmem %s1, %s216
      %p218 = pneg %p64
      %p219 = pneg %p61
      %p220 = pneg %p85
      %p221 = pneg %p82
      %p222 = pneg %p106
      %p223 = pneg %p103
      %p224 = pneg %p132
      %p225 = pneg %p129
      %p226 = scmp.lt.s32.totalorder %s17, 1
      %s227 = scalar_select %p226, %s17, 1
      %s228 = smul.addr %s227, 36
      %s229 = smul.addr %s228, 8
      %s230 = scalar_lea.vmem %s4, %s229
      %p231 = pneg %p158
      %p232 = pneg %p155
      %p233 = scmp.lt.s32.totalorder %s17, 1
      %s234 = scalar_select %p233, %s17, 1
      %s235 = smul.addr %s234, 36
      %s236 = smul.addr %s235, 8
      %s237 = scalar_lea.vmem %s5, %s236
      %p238 = scmp.lt.s32.totalorder %s17, 1
      %s239 = scalar_select %p238, %s17, 1
      %s240 = smul.addr %s239, 43
      %s241 = smul.addr %s240, 8
      %s242 = scalar_lea.vmem %s0, %s241
      %p243 = scmp.lt.s32.totalorder %s17, 1
      %s244 = scalar_select %p243, %s17, 1
      %s245 = smul.addr %s244, 36
      %s246 = smul.addr %s245, 8
      %s247 = scalar_lea.vmem %s1, %s246
      %p248 = scmp.lt.s32.totalorder %s17, 1
      %s249 = scalar_select %p248, %s17, 1
      %s250 = smul.addr %s249, 36
      %s251 = smul.addr %s250, 8
      %s252 = scalar_lea.vmem %s4, %s251
      %p253 = scmp.lt.s32.totalorder %s17, 1
      %s254 = scalar_select %p253, %s17, 1
      %s255 = smul.addr %s254, 36
      %s256 = smul.addr %s255, 8
      %s257 = scalar_lea.vmem %s5, %s256
      %v258 = vld [vmem:[%s242] sm:$0xff]
      %v259 = vld [vmem:[%s242 + $0x8] sm:$0xff]
      %v260 = vld [vmem:[%s242 + $0x10] sm:$0xff]
      %v261 = vld [vmem:[%s242 + $0x18] sm:$0xff]
      %v262 = vld [vmem:[%s242 + $0x20] sm:$0xff]
      %v263 = vld [vmem:[%s242 + $0x28] sm:$0xff]
      %v264 = vld [vmem:[%s242 + $0x30] sm:$0xff]
      %v265 = vld [vmem:[%s242 + $0x38] sm:$0xff]
      %v266 = vld [vmem:[%s242 + $0x40] sm:$0xff]
      %v267 = vld [vmem:[%s242 + $0x48] sm:$0xff]
      %v268 = vld [vmem:[%s242 + $0x50] sm:$0xff]
      %v269 = vld [vmem:[%s242 + $0x58] sm:$0xff]
      %v270 = vld [vmem:[%s242 + $0x60] sm:$0xff]
      %v271 = vld [vmem:[%s242 + $0x68] sm:$0xff]
      %v272 = vld [vmem:[%s242 + $0x70] sm:$0xff]
      %v273 = vld [vmem:[%s242 + $0x78] sm:$0xff]
      %v274 = vld [vmem:[%s242 + $0x80] sm:$0xff]
      %v275 = vld [vmem:[%s242 + $0x88] sm:$0xff]
      %v276 = vld [vmem:[%s242 + $0x90] sm:$0xff]
      %v277 = vld [vmem:[%s242 + $0x98] sm:$0xff]
      %v278 = vld [vmem:[%s242 + $0xa0] sm:$0xff]
      %v279 = vld [vmem:[%s242 + $0xa8] sm:$0xff]
      %v280 = vld [vmem:[%s242 + $0xb0] sm:$0xff]
      %v281 = vld [vmem:[%s242 + $0xb8] sm:$0xff]
      %v282 = vld [vmem:[%s242 + $0xc0] sm:$0xff]
      %v283 = vld [vmem:[%s242 + $0xc8] sm:$0xff]
      %v284 = vld [vmem:[%s242 + $0xd0] sm:$0xff]
      %v285 = vld [vmem:[%s242 + $0xd8] sm:$0xff]
      %v286 = vld [vmem:[%s242 + $0xe0] sm:$0xff]
      %v287 = vld [vmem:[%s242 + $0xe8] sm:$0xff]
      %v288 = vld [vmem:[%s242 + $0xf0] sm:$0xff]
      %v289 = vld [vmem:[%s242 + $0xf8] sm:$0xff]
      %v290 = vld [vmem:[%s242 + $0x100] sm:$0xff]
      %v291 = vld [vmem:[%s242 + $0x108] sm:$0xff]
      %v292 = vld [vmem:[%s242 + $0x110] sm:$0xff]
      %v293 = vld [vmem:[%s242 + $0x118] sm:$0xff]
      %v294 = vld [vmem:[%s2] sm:$0xff]
      %v295 = vld [vmem:[%s2 + $0x8] sm:$0xff]
      %v296 = vld [vmem:[%s2 + $0x10] sm:$0xff]
      %v297 = vld [vmem:[%s2 + $0x18] sm:$0xff]
      %v298 = vld [vmem:[%s2 + $0x20] sm:$0xf]
      %v299 = vld [vmem:[%s242 + $0x1] sm:$0xff]
      %v300 = vld [vmem:[%s242 + $0x9] sm:$0xff]
      %v301 = vld [vmem:[%s242 + $0x11] sm:$0xff]
      %v302 = vld [vmem:[%s242 + $0x19] sm:$0xff]
      %v303 = vld [vmem:[%s242 + $0x21] sm:$0xff]
      %v304 = vld [vmem:[%s242 + $0x29] sm:$0xff]
      %v305 = vld [vmem:[%s242 + $0x31] sm:$0xff]
      %v306 = vld [vmem:[%s242 + $0x39] sm:$0xff]
      %v307 = vld [vmem:[%s242 + $0x41] sm:$0xff]
      %v308 = vld [vmem:[%s242 + $0x49] sm:$0xff]
      %v309 = vld [vmem:[%s242 + $0x51] sm:$0xff]
      %v310 = vld [vmem:[%s242 + $0x59] sm:$0xff]
      %v311 = vld [vmem:[%s242 + $0x61] sm:$0xff]
      %v312 = vld [vmem:[%s242 + $0x69] sm:$0xff]
      %v313 = vld [vmem:[%s242 + $0x71] sm:$0xff]
      %v314 = vld [vmem:[%s242 + $0x79] sm:$0xff]
      %v315 = vld [vmem:[%s242 + $0x81] sm:$0xff]
      %v316 = vld [vmem:[%s242 + $0x89] sm:$0xff]
      %v317 = vld [vmem:[%s242 + $0x91] sm:$0xff]
      %v318 = vld [vmem:[%s242 + $0x99] sm:$0xff]
      %v319 = vld [vmem:[%s242 + $0xa1] sm:$0xff]
      %v320 = vld [vmem:[%s242 + $0xa9] sm:$0xff]
      %v321 = vld [vmem:[%s242 + $0xb1] sm:$0xff]
      %v322 = vld [vmem:[%s242 + $0xb9] sm:$0xff]
      %v323 = vld [vmem:[%s242 + $0xc1] sm:$0xff]
      %v324 = vld [vmem:[%s242 + $0xc9] sm:$0xff]
      %v325 = vld [vmem:[%s242 + $0xd1] sm:$0xff]
      %v326 = vld [vmem:[%s242 + $0xd9] sm:$0xff]
      %v327 = vld [vmem:[%s242 + $0xe1] sm:$0xff]
      %v328 = vld [vmem:[%s242 + $0xe9] sm:$0xff]
      %v329 = vld [vmem:[%s242 + $0xf1] sm:$0xff]
      %v330 = vld [vmem:[%s242 + $0xf9] sm:$0xff]
      %v331 = vld [vmem:[%s242 + $0x101] sm:$0xff]
      %v332 = vld [vmem:[%s242 + $0x109] sm:$0xff]
      %v333 = vld [vmem:[%s242 + $0x111] sm:$0xff]
      %v334 = vld [vmem:[%s242 + $0x119] sm:$0xff]
      %s335 = scalar_lea.vmem %s2, 40
      %v336 = vld [vmem:[%s335] sm:$0xff]
      %v337 = vld [vmem:[%s335 + $0x8] sm:$0xff]
      %v338 = vld [vmem:[%s335 + $0x10] sm:$0xff]
      %v339 = vld [vmem:[%s335 + $0x18] sm:$0xff]
      %v340 = vld [vmem:[%s335 + $0x20] sm:$0xf]
      %vm341 = vcmask 293888
      %v343 = vsel %vm341, %v299, 0
      %v346 = vsel %vm341, %v300, 0
      %v349 = vsel %vm341, %v301, 0
      %v352 = vsel %vm341, %v302, 0
      %v355 = vsel %vm341, %v303, 0
      %v358 = vsel %vm341, %v304, 0
      %v361 = vsel %vm341, %v305, 0
      %v364 = vsel %vm341, %v306, 0
      %v367 = vsel %vm341, %v307, 0
      %v370 = vsel %vm341, %v308, 0
      %v373 = vsel %vm341, %v309, 0
      %v376 = vsel %vm341, %v310, 0
      %v379 = vsel %vm341, %v311, 0
      %v382 = vsel %vm341, %v312, 0
      %v385 = vsel %vm341, %v313, 0
      %v388 = vsel %vm341, %v314, 0
      %v391 = vsel %vm341, %v315, 0
      %v394 = vsel %vm341, %v316, 0
      %v397 = vsel %vm341, %v317, 0
      %v400 = vsel %vm341, %v318, 0
      %v403 = vsel %vm341, %v319, 0
      %v406 = vsel %vm341, %v320, 0
      %v409 = vsel %vm341, %v321, 0
      %v412 = vsel %vm341, %v322, 0
      %v415 = vsel %vm341, %v323, 0
      %v418 = vsel %vm341, %v324, 0
      %v421 = vsel %vm341, %v325, 0
      %v424 = vsel %vm341, %v326, 0
      %v427 = vsel %vm341, %v327, 0
      %v430 = vsel %vm341, %v328, 0
      %v433 = vsel %vm341, %v329, 0
      %v436 = vsel %vm341, %v330, 0
      %v439 = vsel %vm341, %v331, 0
      %v442 = vsel %vm341, %v332, 0
      %v445 = vsel %vm341, %v333, 0
      %v448 = vsel %vm341, %v334, 0
      %vm450 = vcmask 1043456
      %v452 = vsel %vm450, %v340, 0
      %454 = vmatprep.subr.mxu0 0.0
      %455 = vmatpush1.msra.mxu0 %v336
      %456 = vmatprep.subr.mxu0 0.0
      %457 = vmatpush1.msra.mxu0 %v337
      %458 = vmatprep.subr.mxu0 0.0
      %459 = vmatpush1.msra.mxu0 %v338
      %460 = vmatprep.subr.mxu0 0.0
      %461 = vmatpush1.msra.mxu0 %v339
      %462 = vmatprep.subr.mxu0 0.0
      %463 = vmatpush1.msra.mxu0 %v452
      %464 = vmatprep.subr.mxu0 0.0
      %465 = vmatpush1.msra.mxu0 0.0
      %466 = vmatprep.subr.mxu0 0.0
      %467 = vmatpush1.msra.mxu0 0.0
      %468 = vmatprep.subr.mxu0 0.0
      %469 = vmatpush1.msra.mxu0 0.0
      %470 = vmatprep.subr.mxu0 0.0
      %471 = vmatpush1.msra.mxu0 0.0
      %472 = vmatprep.subr.mxu0 0.0
      %473 = vmatpush1.msra.mxu0 0.0
      %474 = vmatprep.subr.mxu0 0.0
      %475 = vmatpush1.msra.mxu0 0.0
      %476 = vmatprep.subr.mxu0 0.0
      %477 = vmatpush1.msra.mxu0 0.0
      %478 = vmatprep.subr.mxu0 0.0
      %479 = vmatpush1.msra.mxu0 0.0
      %480 = vmatprep.subr.mxu0 0.0
      %481 = vmatpush1.msra.mxu0 0.0
      %482 = vmatprep.subr.mxu0 0.0
      %483 = vmatpush1.msra.mxu0 0.0
      %484 = vmatprep.subr.mxu0 0.0
      %485 = vmatpush1.msra.mxu0 0.0
      %486 = vmatprep.subr.mxu0 0.0
      %487 = vmatpush1.msra.mxu0 0.0
      %488 = vmatprep.subr.mxu0 0.0
      %489 = vmatpush1.msra.mxu0 0.0
      %490 = vmatprep.subr.mxu0 0.0
      %491 = vmatpush1.msra.mxu0 0.0
      %492 = vmatprep.subr.mxu0 0.0
      %493 = vmatpush1.msra.mxu0 0.0
      %494 = vmatprep.subr.mxu0 0.0
      %495 = vmatpush1.msra.mxu0 0.0
      %496 = vmatprep.subr.mxu0 0.0
      %497 = vmatpush1.msra.mxu0 0.0
      %498 = vmatprep.subr.mxu0 0.0
      %499 = vmatpush1.msra.mxu0 0.0
      %500 = vmatprep.subr.mxu0 0.0
      %501 = vmatpush1.msra.mxu0 0.0
      %502 = vmatprep.subr.mxu0 0.0
      %503 = vmatpush1.msra.mxu0 0.0
      %504 = vmatprep.subr.mxu0 0.0
      %505 = vmatpush1.msra.mxu0 0.0
      %506 = vmatprep.subr.mxu0 0.0
      %507 = vmatpush1.msra.mxu0 0.0
      %508 = vmatprep.subr.mxu0 0.0
      %509 = vmatpush1.msra.mxu0 0.0
      %510 = vmatprep.subr.mxu0 0.0
      %511 = vmatpush1.msra.mxu0 0.0
      %512 = vmatprep.subr.mxu0 0.0
      %513 = vmatpush1.msra.mxu0 0.0
      %514 = vmatprep.subr.mxu0 0.0
      %515 = vmatpush1.msra.mxu0 0.0
      %516 = vmatprep.subr.mxu0 0.0
      %517 = vmatpush1.msra.mxu0 0.0
      %518 = vmatprep.mubr.f32.mxu0 0.0
      %519 = vmatmul.mubr.f32.gmra.mrb[0].mxu0 %v343
      %v520 = vpop.f32.mrb[0].mxu0
      %v521 = vadd.f32 0.0, %v520
      %v522 = vpop.f32.mrb[0].mxu0
      %523 = vmatprep.mubr.f32.mxu0 0.0
      %524 = vmatmul.mubr.f32.gmra.mrb[0].mxu0 %v346
      %v525 = vpop.f32.mrb[0].mxu0
      %v526 = vadd.f32 0.0, %v525
      %v527 = vpop.f32.mrb[0].mxu0
      %528 = vmatprep.mubr.f32.mxu0 0.0
      %529 = vmatmul.mubr.f32.gmra.mrb[0].mxu0 %v349
      %v530 = vpop.f32.mrb[0].mxu0
      %v531 = vadd.f32 0.0, %v530
      %v532 = vpop.f32.mrb[0].mxu0
      %533 = vmatprep.mubr.f32.mxu0 0.0
      %534 = vmatmul.mubr.f32.gmra.mrb[0].mxu0 %v352
      %v535 = vpop.f32.mrb[0].mxu0
      %v536 = vadd.f32 0.0, %v535
      %v537 = vpop.f32.mrb[0].mxu0
      %538 = vmatprep.mubr.f32.mxu0 0.0
      %539 = vmatmul.mubr.f32.gmra.mrb[0].mxu0 %v355
      %v540 = vpop.f32.mrb[0].mxu0
      %v541 = vadd.f32 0.0, %v540
      %v542 = vpop.f32.mrb[0].mxu0
      %543 = vmatprep.mubr.f32.mxu0 0.0
      %544 = vmatmul.mubr.f32.gmra.mrb[0].mxu0 %v358
      %v545 = vpop.f32.mrb[0].mxu0
      %v546 = vadd.f32 0.0, %v545
      %v547 = vpop.f32.mrb[0].mxu0
      %548 = vmatprep.mubr.f32.mxu0 0.0
      %549 = vmatmul.mubr.f32.gmra.mrb[0].mxu0 %v361
      %v550 = vpop.f32.mrb[0].mxu0
      %v551 = vadd.f32 0.0, %v550
      %v552 = vpop.f32.mrb[0].mxu0
      %553 = vmatprep.mubr.f32.mxu0 0.0
      %554 = vmatmul.mubr.f32.gmra.mrb[0].mxu0 %v364
      %v555 = vpop.f32.mrb[0].mxu0
      %v556 = vadd.f32 0.0, %v555
      %v557 = vpop.f32.mrb[0].mxu0
      %558 = vmatprep.mubr.f32.mxu0 0.0
      %559 = vmatmul.mubr.f32.gmra.mrb[0].mxu0 %v367
      %v560 = vpop.f32.mrb[0].mxu0
      %v561 = vadd.f32 0.0, %v560
      %v562 = vpop.f32.mrb[0].mxu0
      %563 = vmatprep.mubr.f32.mxu0 0.0
      %564 = vmatmul.mubr.f32.gmra.mrb[0].mxu0 %v370
      %v565 = vpop.f32.mrb[0].mxu0
      %v566 = vadd.f32 0.0, %v565
      %v567 = vpop.f32.mrb[0].mxu0
      %568 = vmatprep.mubr.f32.mxu0 0.0
      %569 = vmatmul.mubr.f32.gmra.mrb[0].mxu0 %v373
      %v570 = vpop.f32.mrb[0].mxu0
      %v571 = vadd.f32 0.0, %v570
      %v572 = vpop.f32.mrb[0].mxu0
      %573 = vmatprep.mubr.f32.mxu0 0.0
      %574 = vmatmul.mubr.f32.gmra.mrb[0].mxu0 %v376
      %v575 = vpop.f32.mrb[0].mxu0
      %v576 = vadd.f32 0.0, %v575
      %v577 = vpop.f32.mrb[0].mxu0
      %578 = vmatprep.mubr.f32.mxu0 0.0
      %579 = vmatmul.mubr.f32.gmra.mrb[0].mxu0 %v379
      %v580 = vpop.f32.mrb[0].mxu0
      %v581 = vadd.f32 0.0, %v580
      %v582 = vpop.f32.mrb[0].mxu0
      %583 = vmatprep.mubr.f32.mxu0 0.0
      %584 = vmatmul.mubr.f32.gmra.mrb[0].mxu0 %v382
      %v585 = vpop.f32.mrb[0].mxu0
      %v586 = vadd.f32 0.0, %v585
      %v587 = vpop.f32.mrb[0].mxu0
      %588 = vmatprep.mubr.f32.mxu0 0.0
      %589 = vmatmul.mubr.f32.gmra.mrb[0].mxu0 %v385
      %v590 = vpop.f32.mrb[0].mxu0
      %v591 = vadd.f32 0.0, %v590
      %v592 = vpop.f32.mrb[0].mxu0
      %593 = vmatprep.mubr.f32.mxu0 0.0
      %594 = vmatmul.mubr.f32.gmra.mrb[0].mxu0 %v388
      %v595 = vpop.f32.mrb[0].mxu0
      %v596 = vadd.f32 0.0, %v595
      %v597 = vpop.f32.mrb[0].mxu0
      %598 = vmatprep.mubr.f32.mxu0 0.0
      %599 = vmatmul.mubr.f32.gmra.mrb[0].mxu0 %v391
      %v600 = vpop.f32.mrb[0].mxu0
      %v601 = vadd.f32 0.0, %v600
      %v602 = vpop.f32.mrb[0].mxu0
      %603 = vmatprep.mubr.f32.mxu0 0.0
      %604 = vmatmul.mubr.f32.gmra.mrb[0].mxu0 %v394
      %v605 = vpop.f32.mrb[0].mxu0
      %v606 = vadd.f32 0.0, %v605
      %v607 = vpop.f32.mrb[0].mxu0
      %608 = vmatprep.mubr.f32.mxu0 0.0
      %609 = vmatmul.mubr.f32.gmra.mrb[0].mxu0 %v397
      %v610 = vpop.f32.mrb[0].mxu0
      %v611 = vadd.f32 0.0, %v610
      %v612 = vpop.f32.mrb[0].mxu0
      %613 = vmatprep.mubr.f32.mxu0 0.0
      %614 = vmatmul.mubr.f32.gmra.mrb[0].mxu0 %v400
      %v615 = vpop.f32.mrb[0].mxu0
      %v616 = vadd.f32 0.0, %v615
      %v617 = vpop.f32.mrb[0].mxu0
      %618 = vmatprep.mubr.f32.mxu0 0.0
      %619 = vmatmul.mubr.f32.gmra.mrb[0].mxu0 %v403
      %v620 = vpop.f32.mrb[0].mxu0
      %v621 = vadd.f32 0.0, %v620
      %v622 = vpop.f32.mrb[0].mxu0
      %623 = vmatprep.mubr.f32.mxu0 0.0
      %624 = vmatmul.mubr.f32.gmra.mrb[0].mxu0 %v406
      %v625 = vpop.f32.mrb[0].mxu0
      %v626 = vadd.f32 0.0, %v625
      %v627 = vpop.f32.mrb[0].mxu0
      %628 = vmatprep.mubr.f32.mxu0 0.0
      %629 = vmatmul.mubr.f32.gmra.mrb[0].mxu0 %v409
      %v630 = vpop.f32.mrb[0].mxu0
      %v631 = vadd.f32 0.0, %v630
      %v632 = vpop.f32.mrb[0].mxu0
      %633 = vmatprep.mubr.f32.mxu0 0.0
      %634 = vmatmul.mubr.f32.gmra.mrb[0].mxu0 %v412
      %v635 = vpop.f32.mrb[0].mxu0
      %v636 = vadd.f32 0.0, %v635
      %v637 = vpop.f32.mrb[0].mxu0
      %638 = vmatprep.mubr.f32.mxu0 0.0
      %639 = vmatmul.mubr.f32.gmra.mrb[0].mxu0 %v415
      %v640 = vpop.f32.mrb[0].mxu0
      %v641 = vadd.f32 0.0, %v640
      %v642 = vpop.f32.mrb[0].mxu0
      %643 = vmatprep.mubr.f32.mxu0 0.0
      %644 = vmatmul.mubr.f32.gmra.mrb[0].mxu0 %v418
      %v645 = vpop.f32.mrb[0].mxu0
      %v646 = vadd.f32 0.0, %v645
      %v647 = vpop.f32.mrb[0].mxu0
      %648 = vmatprep.mubr.f32.mxu0 0.0
      %649 = vmatmul.mubr.f32.gmra.mrb[0].mxu0 %v421
      %v650 = vpop.f32.mrb[0].mxu0
      %v651 = vadd.f32 0.0, %v650
      %v652 = vpop.f32.mrb[0].mxu0
      %653 = vmatprep.mubr.f32.mxu0 0.0
      %654 = vmatmul.mubr.f32.gmra.mrb[0].mxu0 %v424
      %v655 = vpop.f32.mrb[0].mxu0
      %v656 = vadd.f32 0.0, %v655
      %v657 = vpop.f32.mrb[0].mxu0
      %658 = vmatprep.mubr.f32.mxu0 0.0
      %659 = vmatmul.mubr.f32.gmra.mrb[0].mxu0 %v427
      %v660 = vpop.f32.mrb[0].mxu0
      %v661 = vadd.f32 0.0, %v660
      %v662 = vpop.f32.mrb[0].mxu0
      %663 = vmatprep.mubr.f32.mxu0 0.0
      %664 = vmatmul.mubr.f32.gmra.mrb[0].mxu0 %v430
      %v665 = vpop.f32.mrb[0].mxu0
      %v666 = vadd.f32 0.0, %v665
      %v667 = vpop.f32.mrb[0].mxu0
      %668 = vmatprep.mubr.f32.mxu0 0.0
      %669 = vmatmul.mubr.f32.gmra.mrb[0].mxu0 %v433
      %v670 = vpop.f32.mrb[0].mxu0
      %v671 = vadd.f32 0.0, %v670
      %v672 = vpop.f32.mrb[0].mxu0
      %673 = vmatprep.mubr.f32.mxu0 0.0
      %674 = vmatmul.mubr.f32.gmra.mrb[0].mxu0 %v436
      %v675 = vpop.f32.mrb[0].mxu0
      %v676 = vadd.f32 0.0, %v675
      %v677 = vpop.f32.mrb[0].mxu0
      %678 = vmatprep.mubr.f32.mxu0 0.0
      %679 = vmatmul.mubr.f32.gmra.mrb[0].mxu0 %v439
      %v680 = vpop.f32.mrb[0].mxu0
      %v681 = vadd.f32 0.0, %v680
      %v682 = vpop.f32.mrb[0].mxu0
      %683 = vmatprep.mubr.f32.mxu0 0.0
      %684 = vmatmul.mubr.f32.gmra.mrb[0].mxu0 %v442
      %v685 = vpop.f32.mrb[0].mxu0
      %v686 = vadd.f32 0.0, %v685
      %v687 = vpop.f32.mrb[0].mxu0
      %688 = vmatprep.mubr.f32.mxu0 0.0
      %689 = vmatmul.mubr.f32.gmra.mrb[0].mxu0 %v445
      %v690 = vpop.f32.mrb[0].mxu0
      %v691 = vadd.f32 0.0, %v690
      %v692 = vpop.f32.mrb[0].mxu0
      %693 = vmatprep.mubr.f32.mxu0 0.0
      %694 = vmatmul.mubr.f32.gmra.mrb[0].mxu0 %v448
      %v695 = vpop.f32.mrb[0].mxu0
      %v696 = vadd.f32 0.0, %v695
      %v697 = vpop.f32.mrb[0].mxu0
      %698 = vdwg.mxu0
      %v700 = vsel %vm341, %v258, 0
      %v703 = vsel %vm341, %v259, 0
      %v706 = vsel %vm341, %v260, 0
      %v709 = vsel %vm341, %v261, 0
      %v712 = vsel %vm341, %v262, 0
      %v715 = vsel %vm341, %v263, 0
      %v718 = vsel %vm341, %v264, 0
      %v721 = vsel %vm341, %v265, 0
      %v724 = vsel %vm341, %v266, 0
      %v727 = vsel %vm341, %v267, 0
      %v730 = vsel %vm341, %v268, 0
      %v733 = vsel %vm341, %v269, 0
      %v736 = vsel %vm341, %v270, 0
      %v739 = vsel %vm341, %v271, 0
      %v742 = vsel %vm341, %v272, 0
      %v745 = vsel %vm341, %v273, 0
      %v748 = vsel %vm341, %v274, 0
      %v751 = vsel %vm341, %v275, 0
      %v754 = vsel %vm341, %v276, 0
      %v757 = vsel %vm341, %v277, 0
      %v760 = vsel %vm341, %v278, 0
      %v763 = vsel %vm341, %v279, 0
      %v766 = vsel %vm341, %v280, 0
      %v769 = vsel %vm341, %v281, 0
      %v772 = vsel %vm341, %v282, 0
      %v775 = vsel %vm341, %v283, 0
      %v778 = vsel %vm341, %v284, 0
      %v781 = vsel %vm341, %v285, 0
      %v784 = vsel %vm341, %v286, 0
      %v787 = vsel %vm341, %v287, 0
      %v790 = vsel %vm341, %v288, 0
      %v793 = vsel %vm341, %v289, 0
      %v796 = vsel %vm341, %v290, 0
      %v799 = vsel %vm341, %v291, 0
      %v802 = vsel %vm341, %v292, 0
      %v805 = vsel %vm341, %v293, 0
      %v808 = vsel %vm450, %v298, 0
      %810 = vmatprep.subr.mxu0 0.0
      %811 = vmatpush1.msra.mxu0 %v294
      %812 = vmatprep.subr.mxu0 0.0
      %813 = vmatpush1.msra.mxu0 %v295
      %814 = vmatprep.subr.mxu0 0.0
      %815 = vmatpush1.msra.mxu0 %v296
      %816 = vmatprep.subr.mxu0 0.0
      %817 = vmatpush1.msra.mxu0 %v297
      %818 = vmatprep.subr.mxu0 0.0
      %819 = vmatpush1.msra.mxu0 %v808
      %820 = vmatprep.subr.mxu0 0.0
      %821 = vmatpush1.msra.mxu0 0.0
      %822 = vmatprep.subr.mxu0 0.0
      %823 = vmatpush1.msra.mxu0 0.0
      %824 = vmatprep.subr.mxu0 0.0
      %825 = vmatpush1.msra.mxu0 0.0
      %826 = vmatprep.subr.mxu0 0.0
      %827 = vmatpush1.msra.mxu0 0.0
      %828 = vmatprep.subr.mxu0 0.0
      %829 = vmatpush1.msra.mxu0 0.0
      %830 = vmatprep.subr.mxu0 0.0
      %831 = vmatpush1.msra.mxu0 0.0
      %832 = vmatprep.subr.mxu0 0.0
      %833 = vmatpush1.msra.mxu0 0.0
      %834 = vmatprep.subr.mxu0 0.0
      %835 = vmatpush1.msra.mxu0 0.0
      %836 = vmatprep.subr.mxu0 0.0
      %837 = vmatpush1.msra.mxu0 0.0
      %838 = vmatprep.subr.mxu0 0.0
      %839 = vmatpush1.msra.mxu0 0.0
      %840 = vmatprep.subr.mxu0 0.0
      %841 = vmatpush1.msra.mxu0 0.0
      %842 = vmatprep.subr.mxu0 0.0
      %843 = vmatpush1.msra.mxu0 0.0
      %844 = vmatprep.subr.mxu0 0.0
      %845 = vmatpush1.msra.mxu0 0.0
      %846 = vmatprep.subr.mxu0 0.0
      %847 = vmatpush1.msra.mxu0 0.0
      %848 = vmatprep.subr.mxu0 0.0
      %849 = vmatpush1.msra.mxu0 0.0
      %850 = vmatprep.subr.mxu0 0.0
      %851 = vmatpush1.msra.mxu0 0.0
      %852 = vmatprep.subr.mxu0 0.0
      %853 = vmatpush1.msra.mxu0 0.0
      %854 = vmatprep.subr.mxu0 0.0
      %855 = vmatpush1.msra.mxu0 0.0
      %856 = vmatprep.subr.mxu0 0.0
      %857 = vmatpush1.msra.mxu0 0.0
      %858 = vmatprep.subr.mxu0 0.0
      %859 = vmatpush1.msra.mxu0 0.0
      %860 = vmatprep.subr.mxu0 0.0
      %861 = vmatpush1.msra.mxu0 0.0
      %862 = vmatprep.subr.mxu0 0.0
      %863 = vmatpush1.msra.mxu0 0.0
      %864 = vmatprep.subr.mxu0 0.0
      %865 = vmatpush1.msra.mxu0 0.0
      %866 = vmatprep.subr.mxu0 0.0
      %867 = vmatpush1.msra.mxu0 0.0
      %868 = vmatprep.subr.mxu0 0.0
      %869 = vmatpush1.msra.mxu0 0.0
      %870 = vmatprep.subr.mxu0 0.0
      %871 = vmatpush1.msra.mxu0 0.0
      %872 = vmatprep.subr.mxu0 0.0
      %873 = vmatpush1.msra.mxu0 0.0
      %874 = vmatprep.mubr.f32.mxu0 0.0
      %875 = vmatmul.mubr.f32.gmra.mrb[0].mxu0 %v700
      %v876 = vpop.f32.mrb[0].mxu0
      %v877 = vadd.f32 %v521, %v876
      %v878 = vpop.f32.mrb[0].mxu0
      %879 = vmatprep.mubr.f32.mxu0 0.0
      %880 = vmatmul.mubr.f32.gmra.mrb[0].mxu0 %v703
      %v881 = vpop.f32.mrb[0].mxu0
      %v882 = vadd.f32 %v526, %v881
      %v883 = vpop.f32.mrb[0].mxu0
      %884 = vmatprep.mubr.f32.mxu0 0.0
      %885 = vmatmul.mubr.f32.gmra.mrb[0].mxu0 %v706
      %v886 = vpop.f32.mrb[0].mxu0
      %v887 = vadd.f32 %v531, %v886
      %v888 = vpop.f32.mrb[0].mxu0
      %889 = vmatprep.mubr.f32.mxu0 0.0
      %890 = vmatmul.mubr.f32.gmra.mrb[0].mxu0 %v709
      %v891 = vpop.f32.mrb[0].mxu0
      %v892 = vadd.f32 %v536, %v891
      %v893 = vpop.f32.mrb[0].mxu0
      %894 = vmatprep.mubr.f32.mxu0 0.0
      %895 = vmatmul.mubr.f32.gmra.mrb[0].mxu0 %v712
      %v896 = vpop.f32.mrb[0].mxu0
      %v897 = vadd.f32 %v541, %v896
      %v898 = vpop.f32.mrb[0].mxu0
      %899 = vmatprep.mubr.f32.mxu0 0.0
      %900 = vmatmul.mubr.f32.gmra.mrb[0].mxu0 %v715
      %v901 = vpop.f32.mrb[0].mxu0
      %v902 = vadd.f32 %v546, %v901
      %v903 = vpop.f32.mrb[0].mxu0
      %904 = vmatprep.mubr.f32.mxu0 0.0
      %905 = vmatmul.mubr.f32.gmra.mrb[0].mxu0 %v718
      %v906 = vpop.f32.mrb[0].mxu0
      %v907 = vadd.f32 %v551, %v906
      %v908 = vpop.f32.mrb[0].mxu0
      %909 = vmatprep.mubr.f32.mxu0 0.0
      %910 = vmatmul.mubr.f32.gmra.mrb[0].mxu0 %v721
      %v911 = vpop.f32.mrb[0].mxu0
      %v912 = vadd.f32 %v556, %v911
      %v913 = vpop.f32.mrb[0].mxu0
      %914 = vmatprep.mubr.f32.mxu0 0.0
      %915 = vmatmul.mubr.f32.gmra.mrb[0].mxu0 %v724
      %v916 = vpop.f32.mrb[0].mxu0
      %v917 = vadd.f32 %v561, %v916
      %v918 = vpop.f32.mrb[0].mxu0
      %919 = vmatprep.mubr.f32.mxu0 0.0
      %920 = vmatmul.mubr.f32.gmra.mrb[0].mxu0 %v727
      %v921 = vpop.f32.mrb[0].mxu0
      %v922 = vadd.f32 %v566, %v921
      %v923 = vpop.f32.mrb[0].mxu0
      %924 = vmatprep.mubr.f32.mxu0 0.0
      %925 = vmatmul.mubr.f32.gmra.mrb[0].mxu0 %v730
      %v926 = vpop.f32.mrb[0].mxu0
      %v927 = vadd.f32 %v571, %v926
      %v928 = vpop.f32.mrb[0].mxu0
      %929 = vmatprep.mubr.f32.mxu0 0.0
      %930 = vmatmul.mubr.f32.gmra.mrb[0].mxu0 %v733
      %v931 = vpop.f32.mrb[0].mxu0
      %v932 = vadd.f32 %v576, %v931
      %v933 = vpop.f32.mrb[0].mxu0
      %934 = vmatprep.mubr.f32.mxu0 0.0
      %935 = vmatmul.mubr.f32.gmra.mrb[0].mxu0 %v736
      %v936 = vpop.f32.mrb[0].mxu0
      %v937 = vadd.f32 %v581, %v936
      %v938 = vpop.f32.mrb[0].mxu0
      %939 = vmatprep.mubr.f32.mxu0 0.0
      %940 = vmatmul.mubr.f32.gmra.mrb[0].mxu0 %v739
      %v941 = vpop.f32.mrb[0].mxu0
      %v942 = vadd.f32 %v586, %v941
      %v943 = vpop.f32.mrb[0].mxu0
      %944 = vmatprep.mubr.f32.mxu0 0.0
      %945 = vmatmul.mubr.f32.gmra.mrb[0].mxu0 %v742
      %v946 = vpop.f32.mrb[0].mxu0
      %v947 = vadd.f32 %v591, %v946
      %v948 = vpop.f32.mrb[0].mxu0
      %949 = vmatprep.mubr.f32.mxu0 0.0
      %950 = vmatmul.mubr.f32.gmra.mrb[0].mxu0 %v745
      %v951 = vpop.f32.mrb[0].mxu0
      %v952 = vadd.f32 %v596, %v951
      %v953 = vpop.f32.mrb[0].mxu0
      %954 = vmatprep.mubr.f32.mxu0 0.0
      %955 = vmatmul.mubr.f32.gmra.mrb[0].mxu0 %v748
      %v956 = vpop.f32.mrb[0].mxu0
      %v957 = vadd.f32 %v601, %v956
      %v958 = vpop.f32.mrb[0].mxu0
      %959 = vmatprep.mubr.f32.mxu0 0.0
      %960 = vmatmul.mubr.f32.gmra.mrb[0].mxu0 %v751
      %v961 = vpop.f32.mrb[0].mxu0
      %v962 = vadd.f32 %v606, %v961
      %v963 = vpop.f32.mrb[0].mxu0
      %964 = vmatprep.mubr.f32.mxu0 0.0
      %965 = vmatmul.mubr.f32.gmra.mrb[0].mxu0 %v754
      %v966 = vpop.f32.mrb[0].mxu0
      %v967 = vadd.f32 %v611, %v966
      %v968 = vpop.f32.mrb[0].mxu0
      %969 = vmatprep.mubr.f32.mxu0 0.0
      %970 = vmatmul.mubr.f32.gmra.mrb[0].mxu0 %v757
      %v971 = vpop.f32.mrb[0].mxu0
      %v972 = vadd.f32 %v616, %v971
      %v973 = vpop.f32.mrb[0].mxu0
      %974 = vmatprep.mubr.f32.mxu0 0.0
      %975 = vmatmul.mubr.f32.gmra.mrb[0].mxu0 %v760
      %v976 = vpop.f32.mrb[0].mxu0
      %v977 = vadd.f32 %v621, %v976
      %v978 = vpop.f32.mrb[0].mxu0
      %979 = vmatprep.mubr.f32.mxu0 0.0
      %980 = vmatmul.mubr.f32.gmra.mrb[0].mxu0 %v763
      %v981 = vpop.f32.mrb[0].mxu0
      %v982 = vadd.f32 %v626, %v981
      %v983 = vpop.f32.mrb[0].mxu0
      %984 = vmatprep.mubr.f32.mxu0 0.0
      %985 = vmatmul.mubr.f32.gmra.mrb[0].mxu0 %v766
      %v986 = vpop.f32.mrb[0].mxu0
      %v987 = vadd.f32 %v631, %v986
      %v988 = vpop.f32.mrb[0].mxu0
      %989 = vmatprep.mubr.f32.mxu0 0.0
      %990 = vmatmul.mubr.f32.gmra.mrb[0].mxu0 %v769
      %v991 = vpop.f32.mrb[0].mxu0
      %v992 = vadd.f32 %v636, %v991
      %v993 = vpop.f32.mrb[0].mxu0
      %994 = vmatprep.mubr.f32.mxu0 0.0
      %995 = vmatmul.mubr.f32.gmra.mrb[0].mxu0 %v772
      %v996 = vpop.f32.mrb[0].mxu0
      %v997 = vadd.f32 %v641, %v996
      %v998 = vpop.f32.mrb[0].mxu0
      %999 = vmatprep.mubr.f32.mxu0 0.0
      %1000 = vmatmul.mubr.f32.gmra.mrb[0].mxu0 %v775
      %v1001 = vpop.f32.mrb[0].mxu0
      %v1002 = vadd.f32 %v646, %v1001
      %v1003 = vpop.f32.mrb[0].mxu0
      %1004 = vmatprep.mubr.f32.mxu0 0.0
      %1005 = vmatmul.mubr.f32.gmra.mrb[0].mxu0 %v778
      %v1006 = vpop.f32.mrb[0].mxu0
      %v1007 = vadd.f32 %v651, %v1006
      %v1008 = vpop.f32.mrb[0].mxu0
      %1009 = vmatprep.mubr.f32.mxu0 0.0
      %1010 = vmatmul.mubr.f32.gmra.mrb[0].mxu0 %v781
      %v1011 = vpop.f32.mrb[0].mxu0
      %v1012 = vadd.f32 %v656, %v1011
      %v1013 = vpop.f32.mrb[0].mxu0
      %1014 = vmatprep.mubr.f32.mxu0 0.0
      %1015 = vmatmul.mubr.f32.gmra.mrb[0].mxu0 %v784
      %v1016 = vpop.f32.mrb[0].mxu0
      %v1017 = vadd.f32 %v661, %v1016
      %v1018 = vpop.f32.mrb[0].mxu0
      %1019 = vmatprep.mubr.f32.mxu0 0.0
      %1020 = vmatmul.mubr.f32.gmra.mrb[0].mxu0 %v787
      %v1021 = vpop.f32.mrb[0].mxu0
      %v1022 = vadd.f32 %v666, %v1021
      %v1023 = vpop.f32.mrb[0].mxu0
      %1024 = vmatprep.mubr.f32.mxu0 0.0
      %1025 = vmatmul.mubr.f32.gmra.mrb[0].mxu0 %v790
      %v1026 = vpop.f32.mrb[0].mxu0
      %v1027 = vadd.f32 %v671, %v1026
      %v1028 = vpop.f32.mrb[0].mxu0
      %1029 = vmatprep.mubr.f32.mxu0 0.0
      %1030 = vmatmul.mubr.f32.gmra.mrb[0].mxu0 %v793
      %v1031 = vpop.f32.mrb[0].mxu0
      %v1032 = vadd.f32 %v676, %v1031
      %v1033 = vpop.f32.mrb[0].mxu0
      %1034 = vmatprep.mubr.f32.mxu0 0.0
      %1035 = vmatmul.mubr.f32.gmra.mrb[0].mxu0 %v796
      %v1036 = vpop.f32.mrb[0].mxu0
      %v1037 = vadd.f32 %v681, %v1036
      %v1038 = vpop.f32.mrb[0].mxu0
      %1039 = vmatprep.mubr.f32.mxu0 0.0
      %1040 = vmatmul.mubr.f32.gmra.mrb[0].mxu0 %v799
      %v1041 = vpop.f32.mrb[0].mxu0
      %v1042 = vadd.f32 %v686, %v1041
      %v1043 = vpop.f32.mrb[0].mxu0
      %1044 = vmatprep.mubr.f32.mxu0 0.0
      %1045 = vmatmul.mubr.f32.gmra.mrb[0].mxu0 %v802
      %v1046 = vpop.f32.mrb[0].mxu0
      %v1047 = vadd.f32 %v691, %v1046
      %v1048 = vpop.f32.mrb[0].mxu0
      %1049 = vmatprep.mubr.f32.mxu0 0.0
      %1050 = vmatmul.mubr.f32.gmra.mrb[0].mxu0 %v805
      %v1051 = vpop.f32.mrb[0].mxu0
      %v1052 = vadd.f32 %v696, %v1051
      %v1053 = vpop.f32.mrb[0].mxu0
      %1054 = vdwg.mxu0
      %v1055 = vld [vmem:[%s242 + $0x2] sm:$0xff]
      %v1056 = vld [vmem:[%s242 + $0xa] sm:$0xff]
      %v1057 = vld [vmem:[%s242 + $0x12] sm:$0xff]
      %v1058 = vld [vmem:[%s242 + $0x1a] sm:$0xff]
      %v1059 = vld [vmem:[%s242 + $0x22] sm:$0xff]
      %v1060 = vld [vmem:[%s242 + $0x2a] sm:$0xff]
      %v1061 = vld [vmem:[%s242 + $0x32] sm:$0xff]
      %v1062 = vld [vmem:[%s242 + $0x3a] sm:$0xff]
      %v1063 = vld [vmem:[%s242 + $0x42] sm:$0xff]
      %v1064 = vld [vmem:[%s242 + $0x4a] sm:$0xff]
      %v1065 = vld [vmem:[%s242 + $0x52] sm:$0xff]
      %v1066 = vld [vmem:[%s242 + $0x5a] sm:$0xff]
      %v1067 = vld [vmem:[%s242 + $0x62] sm:$0xff]
      %v1068 = vld [vmem:[%s242 + $0x6a] sm:$0xff]
      %v1069 = vld [vmem:[%s242 + $0x72] sm:$0xff]
      %v1070 = vld [vmem:[%s242 + $0x7a] sm:$0xff]
      %v1071 = vld [vmem:[%s242 + $0x82] sm:$0xff]
      %v1072 = vld [vmem:[%s242 + $0x8a] sm:$0xff]
      %v1073 = vld [vmem:[%s242 + $0x92] sm:$0xff]
      %v1074 = vld [vmem:[%s242 + $0x9a] sm:$0xff]
      %v1075 = vld [vmem:[%s242 + $0xa2] sm:$0xff]
      %v1076 = vld [vmem:[%s242 + $0xaa] sm:$0xff]
      %v1077 = vld [vmem:[%s242 + $0xb2] sm:$0xff]
      %v1078 = vld [vmem:[%s242 + $0xba] sm:$0xff]
      %v1079 = vld [vmem:[%s242 + $0xc2] sm:$0xff]
      %v1080 = vld [vmem:[%s242 + $0xca] sm:$0xff]
      %v1081 = vld [vmem:[%s242 + $0xd2] sm:$0xff]
      %v1082 = vld [vmem:[%s242 + $0xda] sm:$0xff]
      %v1083 = vld [vmem:[%s242 + $0xe2] sm:$0xff]
      %v1084 = vld [vmem:[%s242 + $0xea] sm:$0xff]
      %v1085 = vld [vmem:[%s242 + $0xf2] sm:$0xff]
      %v1086 = vld [vmem:[%s242 + $0xfa] sm:$0xff]
      %v1087 = vld [vmem:[%s242 + $0x102] sm:$0xff]
      %v1088 = vld [vmem:[%s242 + $0x10a] sm:$0xff]
      %v1089 = vld [vmem:[%s242 + $0x112] sm:$0xff]
      %v1090 = vld [vmem:[%s242 + $0x11a] sm:$0xff]
      %s1091 = scalar_lea.vmem %s2, 80
      %v1092 = vld [vmem:[%s1091] sm:$0xff]
      %v1093 = vld [vmem:[%s1091 + $0x8] sm:$0xff]
      %v1094 = vld [vmem:[%s1091 + $0x10] sm:$0xff]
      %v1095 = vld [vmem:[%s1091 + $0x18] sm:$0xff]
      %v1096 = vld [vmem:[%s1091 + $0x20] sm:$0xf]
      %v1098 = vsel %vm341, %v1055, 0
      %v1101 = vsel %vm341, %v1056, 0
      %v1104 = vsel %vm341, %v1057, 0
      %v1107 = vsel %vm341, %v1058, 0
      %v1110 = vsel %vm341, %v1059, 0
      %v1113 = vsel %vm341, %v1060, 0
      %v1116 = vsel %vm341, %v1061, 0
      %v1119 = vsel %vm341, %v1062, 0
      %v1122 = vsel %vm341, %v1063, 0
      %v1125 = vsel %vm341, %v1064, 0
      %v1128 = vsel %vm341, %v1065, 0
      %v1131 = vsel %vm341, %v1066, 0
      %v1134 = vsel %vm341, %v1067, 0
      %v1137 = vsel %vm341, %v1068, 0
      %v1140 = vsel %vm341, %v1069, 0
      %v1143 = vsel %vm341, %v1070, 0
      %v1146 = vsel %vm341, %v1071, 0
      %v1149 = vsel %vm341, %v1072, 0
      %v1152 = vsel %vm341, %v1073, 0
      %v1155 = vsel %vm341, %v1074, 0
      %v1158 = vsel %vm341, %v1075, 0
      %v1161 = vsel %vm341, %v1076, 0
      %v1164 = vsel %vm341, %v1077, 0
      %v1167 = vsel %vm341, %v1078, 0
      %v1170 = vsel %vm341, %v1079, 0
      %v1173 = vsel %vm341, %v1080, 0
      %v1176 = vsel %vm341, %v1081, 0
      %v1179 = vsel %vm341, %v1082, 0
      %v1182 = vsel %vm341, %v1083, 0
      %v1185 = vsel %vm341, %v1084, 0
      %v1188 = vsel %vm341, %v1085, 0
      %v1191 = vsel %vm341, %v1086, 0
      %v1194 = vsel %vm341, %v1087, 0
      %v1197 = vsel %vm341, %v1088, 0
      %v1200 = vsel %vm341, %v1089, 0
      %v1203 = vsel %vm341, %v1090, 0
      %v1206 = vsel %vm450, %v1096, 0
      %1208 = vmatprep.subr.mxu0 0.0
      %1209 = vmatpush1.msra.mxu0 %v1092
      %1210 = vmatprep.subr.mxu0 0.0
      %1211 = vmatpush1.msra.mxu0 %v1093
      %1212 = vmatprep.subr.mxu0 0.0
      %1213 = vmatpush1.msra.mxu0 %v1094
      %1214 = vmatprep.subr.mxu0 0.0
      %1215 = vmatpush1.msra.mxu0 %v1095
      %1216 = vmatprep.subr.mxu0 0.0
      %1217 = vmatpush1.msra.mxu0 %v1206
      %1218 = vmatprep.subr.mxu0 0.0
      %1219 = vmatpush1.msra.mxu0 0.0
      %1220 = vmatprep.subr.mxu0 0.0
      %1221 = vmatpush1.msra.mxu0 0.0
      %1222 = vmatprep.subr.mxu0 0.0
      %1223 = vmatpush1.msra.mxu0 0.0
      %1224 = vmatprep.subr.mxu0 0.0
      %1225 = vmatpush1.msra.mxu0 0.0
      %1226 = vmatprep.subr.mxu0 0.0
      %1227 = vmatpush1.msra.mxu0 0.0
      %1228 = vmatprep.subr.mxu0 0.0
      %1229 = vmatpush1.msra.mxu0 0.0
      %1230 = vmatprep.subr.mxu0 0.0
      %1231 = vmatpush1.msra.mxu0 0.0
      %1232 = vmatprep.subr.mxu0 0.0
      %1233 = vmatpush1.msra.mxu0 0.0
      %1234 = vmatprep.subr.mxu0 0.0
      %1235 = vmatpush1.msra.mxu0 0.0
      %1236 = vmatprep.subr.mxu0 0.0
      %1237 = vmatpush1.msra.mxu0 0.0
      %1238 = vmatprep.subr.mxu0 0.0
      %1239 = vmatpush1.msra.mxu0 0.0
      %1240 = vmatprep.subr.mxu0 0.0
      %1241 = vmatpush1.msra.mxu0 0.0
      %1242 = vmatprep.subr.mxu0 0.0
      %1243 = vmatpush1.msra.mxu0 0.0
      %1244 = vmatprep.subr.mxu0 0.0
      %1245 = vmatpush1.msra.mxu0 0.0
      %1246 = vmatprep.subr.mxu0 0.0
      %1247 = vmatpush1.msra.mxu0 0.0
      %1248 = vmatprep.subr.mxu0 0.0
      %1249 = vmatpush1.msra.mxu0 0.0
      %1250 = vmatprep.subr.mxu0 0.0
      %1251 = vmatpush1.msra.mxu0 0.0
      %1252 = vmatprep.subr.mxu0 0.0
      %1253 = vmatpush1.msra.mxu0 0.0
      %1254 = vmatprep.subr.mxu0 0.0
      %1255 = vmatpush1.msra.mxu0 0.0
      %1256 = vmatprep.subr.mxu0 0.0
      %1257 = vmatpush1.msra.mxu0 0.0
      %1258 = vmatprep.subr.mxu0 0.0
      %1259 = vmatpush1.msra.mxu0 0.0
      %1260 = vmatprep.subr.mxu0 0.0
      %1261 = vmatpush1.msra.mxu0 0.0
      %1262 = vmatprep.subr.mxu0 0.0
      %1263 = vmatpush1.msra.mxu0 0.0
      %1264 = vmatprep.subr.mxu0 0.0
      %1265 = vmatpush1.msra.mxu0 0.0
      %1266 = vmatprep.subr.mxu0 0.0
      %1267 = vmatpush1.msra.mxu0 0.0
      %1268 = vmatprep.subr.mxu0 0.0
      %1269 = vmatpush1.msra.mxu0 0.0
      %1270 = vmatprep.subr.mxu0 0.0
      %1271 = vmatpush1.msra.mxu0 0.0
      %1272 = vmatprep.mubr.f32.mxu0 0.0
      %1273 = vmatmul.mubr.f32.gmra.mrb[0].mxu0 %v1098
      %v1274 = vpop.f32.mrb[0].mxu0
      %v1275 = vadd.f32 0.0, %v1274
      %v1276 = vpop.f32.mrb[0].mxu0
      %1277 = vmatprep.mubr.f32.mxu0 0.0
      %1278 = vmatmul.mubr.f32.gmra.mrb[0].mxu0 %v1101
      %v1279 = vpop.f32.mrb[0].mxu0
      %v1280 = vadd.f32 0.0, %v1279
      %v1281 = vpop.f32.mrb[0].mxu0
      %1282 = vmatprep.mubr.f32.mxu0 0.0
      %1283 = vmatmul.mubr.f32.gmra.mrb[0].mxu0 %v1104
      %v1284 = vpop.f32.mrb[0].mxu0
      %v1285 = vadd.f32 0.0, %v1284
      %v1286 = vpop.f32.mrb[0].mxu0
      %1287 = vmatprep.mubr.f32.mxu0 0.0
      %1288 = vmatmul.mubr.f32.gmra.mrb[0].mxu0 %v1107
      %v1289 = vpop.f32.mrb[0].mxu0
      %v1290 = vadd.f32 0.0, %v1289
      %v1291 = vpop.f32.mrb[0].mxu0
      %1292 = vmatprep.mubr.f32.mxu0 0.0
      %1293 = vmatmul.mubr.f32.gmra.mrb[0].mxu0 %v1110
      %v1294 = vpop.f32.mrb[0].mxu0
      %v1295 = vadd.f32 0.0, %v1294
      %v1296 = vpop.f32.mrb[0].mxu0
      %1297 = vmatprep.mubr.f32.mxu0 0.0
      %1298 = vmatmul.mubr.f32.gmra.mrb[0].mxu0 %v1113
      %v1299 = vpop.f32.mrb[0].mxu0
      %v1300 = vadd.f32 0.0, %v1299
      %v1301 = vpop.f32.mrb[0].mxu0
      %1302 = vmatprep.mubr.f32.mxu0 0.0
      %1303 = vmatmul.mubr.f32.gmra.mrb[0].mxu0 %v1116
      %v1304 = vpop.f32.mrb[0].mxu0
      %v1305 = vadd.f32 0.0, %v1304
      %v1306 = vpop.f32.mrb[0].mxu0
      %1307 = vmatprep.mubr.f32.mxu0 0.0
      %1308 = vmatmul.mubr.f32.gmra.mrb[0].mxu0 %v1119
      %v1309 = vpop.f32.mrb[0].mxu0
      %v1310 = vadd.f32 0.0, %v1309
      %v1311 = vpop.f32.mrb[0].mxu0
      %1312 = vmatprep.mubr.f32.mxu0 0.0
      %1313 = vmatmul.mubr.f32.gmra.mrb[0].mxu0 %v1122
      %v1314 = vpop.f32.mrb[0].mxu0
      %v1315 = vadd.f32 0.0, %v1314
      %v1316 = vpop.f32.mrb[0].mxu0
      %1317 = vmatprep.mubr.f32.mxu0 0.0
      %1318 = vmatmul.mubr.f32.gmra.mrb[0].mxu0 %v1125
      %v1319 = vpop.f32.mrb[0].mxu0
      %v1320 = vadd.f32 0.0, %v1319
      %v1321 = vpop.f32.mrb[0].mxu0
      %1322 = vmatprep.mubr.f32.mxu0 0.0
      %1323 = vmatmul.mubr.f32.gmra.mrb[0].mxu0 %v1128
      %v1324 = vpop.f32.mrb[0].mxu0
      %v1325 = vadd.f32 0.0, %v1324
      %v1326 = vpop.f32.mrb[0].mxu0
      %1327 = vmatprep.mubr.f32.mxu0 0.0
      %1328 = vmatmul.mubr.f32.gmra.mrb[0].mxu0 %v1131
      %v1329 = vpop.f32.mrb[0].mxu0
      %v1330 = vadd.f32 0.0, %v1329
      %v1331 = vpop.f32.mrb[0].mxu0
      %1332 = vmatprep.mubr.f32.mxu0 0.0
      %1333 = vmatmul.mubr.f32.gmra.mrb[0].mxu0 %v1134
      %v1334 = vpop.f32.mrb[0].mxu0
      %v1335 = vadd.f32 0.0, %v1334
      %v1336 = vpop.f32.mrb[0].mxu0
      %1337 = vmatprep.mubr.f32.mxu0 0.0
      %1338 = vmatmul.mubr.f32.gmra.mrb[0].mxu0 %v1137
      %v1339 = vpop.f32.mrb[0].mxu0
      %v1340 = vadd.f32 0.0, %v1339
      %v1341 = vpop.f32.mrb[0].mxu0
      %1342 = vmatprep.mubr.f32.mxu0 0.0
      %1343 = vmatmul.mubr.f32.gmra.mrb[0].mxu0 %v1140
      %v1344 = vpop.f32.mrb[0].mxu0
      %v1345 = vadd.f32 0.0, %v1344
      %v1346 = vpop.f32.mrb[0].mxu0
      %1347 = vmatprep.mubr.f32.mxu0 0.0
      %1348 = vmatmul.mubr.f32.gmra.mrb[0].mxu0 %v1143
      %v1349 = vpop.f32.mrb[0].mxu0
      %v1350 = vadd.f32 0.0, %v1349
      %v1351 = vpop.f32.mrb[0].mxu0
      %1352 = vmatprep.mubr.f32.mxu0 0.0
      %1353 = vmatmul.mubr.f32.gmra.mrb[0].mxu0 %v1146
      %v1354 = vpop.f32.mrb[0].mxu0
      %v1355 = vadd.f32 0.0, %v1354
      %v1356 = vpop.f32.mrb[0].mxu0
      %1357 = vmatprep.mubr.f32.mxu0 0.0
      %1358 = vmatmul.mubr.f32.gmra.mrb[0].mxu0 %v1149
      %v1359 = vpop.f32.mrb[0].mxu0
      %v1360 = vadd.f32 0.0, %v1359
      %v1361 = vpop.f32.mrb[0].mxu0
      %1362 = vmatprep.mubr.f32.mxu0 0.0
      %1363 = vmatmul.mubr.f32.gmra.mrb[0].mxu0 %v1152
      %v1364 = vpop.f32.mrb[0].mxu0
      %v1365 = vadd.f32 0.0, %v1364
      %v1366 = vpop.f32.mrb[0].mxu0
      %1367 = vmatprep.mubr.f32.mxu0 0.0
      %1368 = vmatmul.mubr.f32.gmra.mrb[0].mxu0 %v1155
      %v1369 = vpop.f32.mrb[0].mxu0
      %v1370 = vadd.f32 0.0, %v1369
      %v1371 = vpop.f32.mrb[0].mxu0
      %1372 = vmatprep.mubr.f32.mxu0 0.0
      %1373 = vmatmul.mubr.f32.gmra.mrb[0].mxu0 %v1158
      %v1374 = vpop.f32.mrb[0].mxu0
      %v1375 = vadd.f32 0.0, %v1374
      %v1376 = vpop.f32.mrb[0].mxu0
      %1377 = vmatprep.mubr.f32.mxu0 0.0
      %1378 = vmatmul.mubr.f32.gmra.mrb[0].mxu0 %v1161
      %v1379 = vpop.f32.mrb[0].mxu0
      %v1380 = vadd.f32 0.0, %v1379
      %v1381 = vpop.f32.mrb[0].mxu0
      %1382 = vmatprep.mubr.f32.mxu0 0.0
      %1383 = vmatmul.mubr.f32.gmra.mrb[0].mxu0 %v1164
      %v1384 = vpop.f32.mrb[0].mxu0
      %v1385 = vadd.f32 0.0, %v1384
      %v1386 = vpop.f32.mrb[0].mxu0
      %1387 = vmatprep.mubr.f32.mxu0 0.0
      %1388 = vmatmul.mubr.f32.gmra.mrb[0].mxu0 %v1167
      %v1389 = vpop.f32.mrb[0].mxu0
      %v1390 = vadd.f32 0.0, %v1389
      %v1391 = vpop.f32.mrb[0].mxu0
      %1392 = vmatprep.mubr.f32.mxu0 0.0
      %1393 = vmatmul.mubr.f32.gmra.mrb[0].mxu0 %v1170
      %v1394 = vpop.f32.mrb[0].mxu0
      %v1395 = vadd.f32 0.0, %v1394
      %v1396 = vpop.f32.mrb[0].mxu0
      %1397 = vmatprep.mubr.f32.mxu0 0.0
      %1398 = vmatmul.mubr.f32.gmra.mrb[0].mxu0 %v1173
      %v1399 = vpop.f32.mrb[0].mxu0
      %v1400 = vadd.f32 0.0, %v1399
      %v1401 = vpop.f32.mrb[0].mxu0
      %1402 = vmatprep.mubr.f32.mxu0 0.0
      %1403 = vmatmul.mubr.f32.gmra.mrb[0].mxu0 %v1176
      %v1404 = vpop.f32.mrb[0].mxu0
      %v1405 = vadd.f32 0.0, %v1404
      %v1406 = vpop.f32.mrb[0].mxu0
      %1407 = vmatprep.mubr.f32.mxu0 0.0
      %1408 = vmatmul.mubr.f32.gmra.mrb[0].mxu0 %v1179
      %v1409 = vpop.f32.mrb[0].mxu0
      %v1410 = vadd.f32 0.0, %v1409
      %v1411 = vpop.f32.mrb[0].mxu0
      %1412 = vmatprep.mubr.f32.mxu0 0.0
      %1413 = vmatmul.mubr.f32.gmra.mrb[0].mxu0 %v1182
      %v1414 = vpop.f32.mrb[0].mxu0
      %v1415 = vadd.f32 0.0, %v1414
      %v1416 = vpop.f32.mrb[0].mxu0
      %1417 = vmatprep.mubr.f32.mxu0 0.0
      %1418 = vmatmul.mubr.f32.gmra.mrb[0].mxu0 %v1185
      %v1419 = vpop.f32.mrb[0].mxu0
      %v1420 = vadd.f32 0.0, %v1419
      %v1421 = vpop.f32.mrb[0].mxu0
      %1422 = vmatprep.mubr.f32.mxu0 0.0
      %1423 = vmatmul.mubr.f32.gmra.mrb[0].mxu0 %v1188
      %v1424 = vpop.f32.mrb[0].mxu0
      %v1425 = vadd.f32 0.0, %v1424
      %v1426 = vpop.f32.mrb[0].mxu0
      %1427 = vmatprep.mubr.f32.mxu0 0.0
      %1428 = vmatmul.mubr.f32.gmra.mrb[0].mxu0 %v1191
      %v1429 = vpop.f32.mrb[0].mxu0
      %v1430 = vadd.f32 0.0, %v1429
      %v1431 = vpop.f32.mrb[0].mxu0
      %1432 = vmatprep.mubr.f32.mxu0 0.0
      %1433 = vmatmul.mubr.f32.gmra.mrb[0].mxu0 %v1194
      %v1434 = vpop.f32.mrb[0].mxu0
      %v1435 = vadd.f32 0.0, %v1434
      %v1436 = vpop.f32.mrb[0].mxu0
      %1437 = vmatprep.mubr.f32.mxu0 0.0
      %1438 = vmatmul.mubr.f32.gmra.mrb[0].mxu0 %v1197
      %v1439 = vpop.f32.mrb[0].mxu0
      %v1440 = vadd.f32 0.0, %v1439
      %v1441 = vpop.f32.mrb[0].mxu0
      %1442 = vmatprep.mubr.f32.mxu0 0.0
      %1443 = vmatmul.mubr.f32.gmra.mrb[0].mxu0 %v1200
      %v1444 = vpop.f32.mrb[0].mxu0
      %v1445 = vadd.f32 0.0, %v1444
      %v1446 = vpop.f32.mrb[0].mxu0
      %1447 = vmatprep.mubr.f32.mxu0 0.0
      %1448 = vmatmul.mubr.f32.gmra.mrb[0].mxu0 %v1203
      %v1449 = vpop.f32.mrb[0].mxu0
      %v1450 = vadd.f32 0.0, %v1449
      %v1451 = vpop.f32.mrb[0].mxu0
      %1452 = vdwg.mxu0
      %v1453 = vadd.f32 %v877, %v1275
      %v1454 = vadd.f32 %v882, %v1280
      %v1455 = vadd.f32 %v887, %v1285
      %v1456 = vadd.f32 %v892, %v1290
      %v1457 = vadd.f32 %v897, %v1295
      %v1458 = vadd.f32 %v902, %v1300
      %v1459 = vadd.f32 %v907, %v1305
      %v1460 = vadd.f32 %v912, %v1310
      %v1461 = vadd.f32 %v917, %v1315
      %v1462 = vadd.f32 %v922, %v1320
      %v1463 = vadd.f32 %v927, %v1325
      %v1464 = vadd.f32 %v932, %v1330
      %v1465 = vadd.f32 %v937, %v1335
      %v1466 = vadd.f32 %v942, %v1340
      %v1467 = vadd.f32 %v947, %v1345
      %v1468 = vadd.f32 %v952, %v1350
      %v1469 = vadd.f32 %v957, %v1355
      %v1470 = vadd.f32 %v962, %v1360
      %v1471 = vadd.f32 %v967, %v1365
      %v1472 = vadd.f32 %v972, %v1370
      %v1473 = vadd.f32 %v977, %v1375
      %v1474 = vadd.f32 %v982, %v1380
      %v1475 = vadd.f32 %v987, %v1385
      %v1476 = vadd.f32 %v992, %v1390
      %v1477 = vadd.f32 %v997, %v1395
      %v1478 = vadd.f32 %v1002, %v1400
      %v1479 = vadd.f32 %v1007, %v1405
      %v1480 = vadd.f32 %v1012, %v1410
      %v1481 = vadd.f32 %v1017, %v1415
      %v1482 = vadd.f32 %v1022, %v1420
      %v1483 = vadd.f32 %v1027, %v1425
      %v1484 = vadd.f32 %v1032, %v1430
      %v1485 = vadd.f32 %v1037, %v1435
      %v1486 = vadd.f32 %v1042, %v1440
      %v1487 = vadd.f32 %v1047, %v1445
      %v1488 = vadd.f32 %v1052, %v1450
      %v1489 = vld [vmem:[%s242 + $0x12] sm:$0xff]
      %v1490 = vld [vmem:[%s242 + $0x1a] sm:$0xff]
      %v1491 = vld [vmem:[%s242 + $0x22] sm:$0xff]
      %v1492 = vld [vmem:[%s242 + $0x2a] sm:$0xff]
      %v1493 = vld [vmem:[%s242 + $0x32] sm:$0xff]
      %v1494 = vld [vmem:[%s242 + $0x3a] sm:$0xff]
      %v1495 = vld [vmem:[%s242 + $0x42] sm:$0xff]
      %v1496 = vld [vmem:[%s242 + $0x4a] sm:$0xff]
      %v1497 = vld [vmem:[%s242 + $0x52] sm:$0xff]
      %v1498 = vld [vmem:[%s242 + $0x5a] sm:$0xff]
      %v1499 = vld [vmem:[%s242 + $0x62] sm:$0xff]
      %v1500 = vld [vmem:[%s242 + $0x6a] sm:$0xff]
      %v1501 = vld [vmem:[%s242 + $0x72] sm:$0xff]
      %v1502 = vld [vmem:[%s242 + $0x7a] sm:$0xff]
      %v1503 = vld [vmem:[%s242 + $0x82] sm:$0xff]
      %v1504 = vld [vmem:[%s242 + $0x8a] sm:$0xff]
      %v1505 = vld [vmem:[%s242 + $0x92] sm:$0xff]
      %v1506 = vld [vmem:[%s242 + $0x9a] sm:$0xff]
      %v1507 = vld [vmem:[%s242 + $0xa2] sm:$0xff]
      %v1508 = vld [vmem:[%s242 + $0xaa] sm:$0xff]
      %v1509 = vld [vmem:[%s242 + $0xb2] sm:$0xff]
      %v1510 = vld [vmem:[%s242 + $0xba] sm:$0xff]
      %v1511 = vld [vmem:[%s242 + $0xc2] sm:$0xff]
      %v1512 = vld [vmem:[%s242 + $0xca] sm:$0xff]
      %v1513 = vld [vmem:[%s242 + $0xd2] sm:$0xff]
      %v1514 = vld [vmem:[%s242 + $0xda] sm:$0xff]
      %v1515 = vld [vmem:[%s242 + $0xe2] sm:$0xff]
      %v1516 = vld [vmem:[%s242 + $0xea] sm:$0xff]
      %v1517 = vld [vmem:[%s242 + $0xf2] sm:$0xff]
      %v1518 = vld [vmem:[%s242 + $0xfa] sm:$0xff]
      %v1519 = vld [vmem:[%s242 + $0x102] sm:$0xff]
      %v1520 = vld [vmem:[%s242 + $0x10a] sm:$0xff]
      %v1521 = vld [vmem:[%s242 + $0x112] sm:$0xff]
      %v1522 = vld [vmem:[%s242 + $0x11a] sm:$0xff]
      %v1523 = vld [vmem:[%s242 + $0x122] sm:$0xff]
      %v1524 = vld [vmem:[%s242 + $0x12a] sm:$0xff]
      %s1525 = scalar_lea.vmem %s2, 120
      %v1526 = vld [vmem:[%s1525] sm:$0xff]
      %v1527 = vld [vmem:[%s1525 + $0x8] sm:$0xff]
      %v1528 = vld [vmem:[%s1525 + $0x10] sm:$0xff]
      %v1529 = vld [vmem:[%s1525 + $0x18] sm:$0xff]
      %v1530 = vld [vmem:[%s1525 + $0x20] sm:$0xf]
      %v1532 = vsel %vm341, %v1489, 0
      %v1535 = vsel %vm341, %v1490, 0
      %v1538 = vsel %vm341, %v1491, 0
      %v1541 = vsel %vm341, %v1492, 0
      %v1544 = vsel %vm341, %v1493, 0
      %v1547 = vsel %vm341, %v1494, 0
      %v1550 = vsel %vm341, %v1495, 0
      %v1553 = vsel %vm341, %v1496, 0
      %v1556 = vsel %vm341, %v1497, 0
      %v1559 = vsel %vm341, %v1498, 0
      %v1562 = vsel %vm341, %v1499, 0
      %v1565 = vsel %vm341, %v1500, 0
      %v1568 = vsel %vm341, %v1501, 0
      %v1571 = vsel %vm341, %v1502, 0
      %v1574 = vsel %vm341, %v1503, 0
      %v1577 = vsel %vm341, %v1504, 0
      %v1580 = vsel %vm341, %v1505, 0
      %v1583 = vsel %vm341, %v1506, 0
      %v1586 = vsel %vm341, %v1507, 0
      %v1589 = vsel %vm341, %v1508, 0
      %v1592 = vsel %vm341, %v1509, 0
      %v1595 = vsel %vm341, %v1510, 0
      %v1598 = vsel %vm341, %v1511, 0
      %v1601 = vsel %vm341, %v1512, 0
      %v1604 = vsel %vm341, %v1513, 0
      %v1607 = vsel %vm341, %v1514, 0
      %v1610 = vsel %vm341, %v1515, 0
      %v1613 = vsel %vm341, %v1516, 0
      %v1616 = vsel %vm341, %v1517, 0
      %v1619 = vsel %vm341, %v1518, 0
      %v1622 = vsel %vm341, %v1519, 0
      %v1625 = vsel %vm341, %v1520, 0
      %v1628 = vsel %vm341, %v1521, 0
      %v1631 = vsel %vm341, %v1522, 0
      %v1634 = vsel %vm341, %v1523, 0
      %v1637 = vsel %vm341, %v1524, 0
      %v1640 = vsel %vm450, %v1530, 0
      %1642 = vmatprep.subr.mxu0 0.0
      %1643 = vmatpush1.msra.mxu0 %v1526
      %1644 = vmatprep.subr.mxu0 0.0
      %1645 = vmatpush1.msra.mxu0 %v1527
      %1646 = vmatprep.subr.mxu0 0.0
      %1647 = vmatpush1.msra.mxu0 %v1528
      %1648 = vmatprep.subr.mxu0 0.0
      %1649 = vmatpush1.msra.mxu0 %v1529
      %1650 = vmatprep.subr.mxu0 0.0
      %1651 = vmatpush1.msra.mxu0 %v1640
      %1652 = vmatprep.subr.mxu0 0.0
      %1653 = vmatpush1.msra.mxu0 0.0
      %1654 = vmatprep.subr.mxu0 0.0
      %1655 = vmatpush1.msra.mxu0 0.0
      %1656 = vmatprep.subr.mxu0 0.0
      %1657 = vmatpush1.msra.mxu0 0.0
      %1658 = vmatprep.subr.mxu0 0.0
      %1659 = vmatpush1.msra.mxu0 0.0
      %1660 = vmatprep.subr.mxu0 0.0
      %1661 = vmatpush1.msra.mxu0 0.0
      %1662 = vmatprep.subr.mxu0 0.0
      %1663 = vmatpush1.msra.mxu0 0.0
      %1664 = vmatprep.subr.mxu0 0.0
      %1665 = vmatpush1.msra.mxu0 0.0
      %1666 = vmatprep.subr.mxu0 0.0
      %1667 = vmatpush1.msra.mxu0 0.0
      %1668 = vmatprep.subr.mxu0 0.0
      %1669 = vmatpush1.msra.mxu0 0.0
      %1670 = vmatprep.subr.mxu0 0.0
      %1671 = vmatpush1.msra.mxu0 0.0
      %1672 = vmatprep.subr.mxu0 0.0
      %1673 = vmatpush1.msra.mxu0 0.0
      %1674 = vmatprep.subr.mxu0 0.0
      %1675 = vmatpush1.msra.mxu0 0.0
      %1676 = vmatprep.subr.mxu0 0.0
      %1677 = vmatpush1.msra.mxu0 0.0
      %1678 = vmatprep.subr.mxu0 0.0
      %1679 = vmatpush1.msra.mxu0 0.0
      %1680 = vmatprep.subr.mxu0 0.0
      %1681 = vmatpush1.msra.mxu0 0.0
      %1682 = vmatprep.subr.mxu0 0.0
      %1683 = vmatpush1.msra.mxu0 0.0
      %1684 = vmatprep.subr.mxu0 0.0
      %1685 = vmatpush1.msra.mxu0 0.0
      %1686 = vmatprep.subr.mxu0 0.0
      %1687 = vmatpush1.msra.mxu0 0.0
      %1688 = vmatprep.subr.mxu0 0.0
      %1689 = vmatpush1.msra.mxu0 0.0
      %1690 = vmatprep.subr.mxu0 0.0
      %1691 = vmatpush1.msra.mxu0 0.0
      %1692 = vmatprep.subr.mxu0 0.0
      %1693 = vmatpush1.msra.mxu0 0.0
      %1694 = vmatprep.subr.mxu0 0.0
      %1695 = vmatpush1.msra.mxu0 0.0
      %1696 = vmatprep.subr.mxu0 0.0
      %1697 = vmatpush1.msra.mxu0 0.0
      %1698 = vmatprep.subr.mxu0 0.0
      %1699 = vmatpush1.msra.mxu0 0.0
      %1700 = vmatprep.subr.mxu0 0.0
      %1701 = vmatpush1.msra.mxu0 0.0
      %1702 = vmatprep.subr.mxu0 0.0
      %1703 = vmatpush1.msra.mxu0 0.0
      %1704 = vmatprep.subr.mxu0 0.0
      %1705 = vmatpush1.msra.mxu0 0.0
      %1706 = vmatprep.mubr.f32.mxu0 0.0
      %1707 = vmatmul.mubr.f32.gmra.mrb[0].mxu0 %v1532
      %v1708 = vpop.f32.mrb[0].mxu0
      %v1709 = vadd.f32 0.0, %v1708
      %v1710 = vpop.f32.mrb[0].mxu0
      %1711 = vmatprep.mubr.f32.mxu0 0.0
      %1712 = vmatmul.mubr.f32.gmra.mrb[0].mxu0 %v1535
      %v1713 = vpop.f32.mrb[0].mxu0
      %v1714 = vadd.f32 0.0, %v1713
      %v1715 = vpop.f32.mrb[0].mxu0
      %1716 = vmatprep.mubr.f32.mxu0 0.0
      %1717 = vmatmul.mubr.f32.gmra.mrb[0].mxu0 %v1538
      %v1718 = vpop.f32.mrb[0].mxu0
      %v1719 = vadd.f32 0.0, %v1718
      %v1720 = vpop.f32.mrb[0].mxu0
      %1721 = vmatprep.mubr.f32.mxu0 0.0
      %1722 = vmatmul.mubr.f32.gmra.mrb[0].mxu0 %v1541
      %v1723 = vpop.f32.mrb[0].mxu0
      %v1724 = vadd.f32 0.0, %v1723
      %v1725 = vpop.f32.mrb[0].mxu0
      %1726 = vmatprep.mubr.f32.mxu0 0.0
      %1727 = vmatmul.mubr.f32.gmra.mrb[0].mxu0 %v1544
      %v1728 = vpop.f32.mrb[0].mxu0
      %v1729 = vadd.f32 0.0, %v1728
      %v1730 = vpop.f32.mrb[0].mxu0
      %1731 = vmatprep.mubr.f32.mxu0 0.0
      %1732 = vmatmul.mubr.f32.gmra.mrb[0].mxu0 %v1547
      %v1733 = vpop.f32.mrb[0].mxu0
      %v1734 = vadd.f32 0.0, %v1733
      %v1735 = vpop.f32.mrb[0].mxu0
      %1736 = vmatprep.mubr.f32.mxu0 0.0
      %1737 = vmatmul.mubr.f32.gmra.mrb[0].mxu0 %v1550
      %v1738 = vpop.f32.mrb[0].mxu0
      %v1739 = vadd.f32 0.0, %v1738
      %v1740 = vpop.f32.mrb[0].mxu0
      %1741 = vmatprep.mubr.f32.mxu0 0.0
      %1742 = vmatmul.mubr.f32.gmra.mrb[0].mxu0 %v1553
      %v1743 = vpop.f32.mrb[0].mxu0
      %v1744 = vadd.f32 0.0, %v1743
      %v1745 = vpop.f32.mrb[0].mxu0
      %1746 = vmatprep.mubr.f32.mxu0 0.0
      %1747 = vmatmul.mubr.f32.gmra.mrb[0].mxu0 %v1556
      %v1748 = vpop.f32.mrb[0].mxu0
      %v1749 = vadd.f32 0.0, %v1748
      %v1750 = vpop.f32.mrb[0].mxu0
      %1751 = vmatprep.mubr.f32.mxu0 0.0
      %1752 = vmatmul.mubr.f32.gmra.mrb[0].mxu0 %v1559
      %v1753 = vpop.f32.mrb[0].mxu0
      %v1754 = vadd.f32 0.0, %v1753
      %v1755 = vpop.f32.mrb[0].mxu0
      %1756 = vmatprep.mubr.f32.mxu0 0.0
      %1757 = vmatmul.mubr.f32.gmra.mrb[0].mxu0 %v1562
      %v1758 = vpop.f32.mrb[0].mxu0
      %v1759 = vadd.f32 0.0, %v1758
      %v1760 = vpop.f32.mrb[0].mxu0
      %1761 = vmatprep.mubr.f32.mxu0 0.0
      %1762 = vmatmul.mubr.f32.gmra.mrb[0].mxu0 %v1565
      %v1763 = vpop.f32.mrb[0].mxu0
      %v1764 = vadd.f32 0.0, %v1763
      %v1765 = vpop.f32.mrb[0].mxu0
      %1766 = vmatprep.mubr.f32.mxu0 0.0
      %1767 = vmatmul.mubr.f32.gmra.mrb[0].mxu0 %v1568
      %v1768 = vpop.f32.mrb[0].mxu0
      %v1769 = vadd.f32 0.0, %v1768
      %v1770 = vpop.f32.mrb[0].mxu0
      %1771 = vmatprep.mubr.f32.mxu0 0.0
      %1772 = vmatmul.mubr.f32.gmra.mrb[0].mxu0 %v1571
      %v1773 = vpop.f32.mrb[0].mxu0
      %v1774 = vadd.f32 0.0, %v1773
      %v1775 = vpop.f32.mrb[0].mxu0
      %1776 = vmatprep.mubr.f32.mxu0 0.0
      %1777 = vmatmul.mubr.f32.gmra.mrb[0].mxu0 %v1574
      %v1778 = vpop.f32.mrb[0].mxu0
      %v1779 = vadd.f32 0.0, %v1778
      %v1780 = vpop.f32.mrb[0].mxu0
      %1781 = vmatprep.mubr.f32.mxu0 0.0
      %1782 = vmatmul.mubr.f32.gmra.mrb[0].mxu0 %v1577
      %v1783 = vpop.f32.mrb[0].mxu0
      %v1784 = vadd.f32 0.0, %v1783
      %v1785 = vpop.f32.mrb[0].mxu0
      %1786 = vmatprep.mubr.f32.mxu0 0.0
      %1787 = vmatmul.mubr.f32.gmra.mrb[0].mxu0 %v1580
      %v1788 = vpop.f32.mrb[0].mxu0
      %v1789 = vadd.f32 0.0, %v1788
      %v1790 = vpop.f32.mrb[0].mxu0
      %1791 = vmatprep.mubr.f32.mxu0 0.0
      %1792 = vmatmul.mubr.f32.gmra.mrb[0].mxu0 %v1583
      %v1793 = vpop.f32.mrb[0].mxu0
      %v1794 = vadd.f32 0.0, %v1793
      %v1795 = vpop.f32.mrb[0].mxu0
      %1796 = vmatprep.mubr.f32.mxu0 0.0
      %1797 = vmatmul.mubr.f32.gmra.mrb[0].mxu0 %v1586
      %v1798 = vpop.f32.mrb[0].mxu0
      %v1799 = vadd.f32 0.0, %v1798
      %v1800 = vpop.f32.mrb[0].mxu0
      %1801 = vmatprep.mubr.f32.mxu0 0.0
      %1802 = vmatmul.mubr.f32.gmra.mrb[0].mxu0 %v1589
      %v1803 = vpop.f32.mrb[0].mxu0
      %v1804 = vadd.f32 0.0, %v1803
      %v1805 = vpop.f32.mrb[0].mxu0
      %1806 = vmatprep.mubr.f32.mxu0 0.0
      %1807 = vmatmul.mubr.f32.gmra.mrb[0].mxu0 %v1592
      %v1808 = vpop.f32.mrb[0].mxu0
      %v1809 = vadd.f32 0.0, %v1808
      %v1810 = vpop.f32.mrb[0].mxu0
      %1811 = vmatprep.mubr.f32.mxu0 0.0
      %1812 = vmatmul.mubr.f32.gmra.mrb[0].mxu0 %v1595
      %v1813 = vpop.f32.mrb[0].mxu0
      %v1814 = vadd.f32 0.0, %v1813
      %v1815 = vpop.f32.mrb[0].mxu0
      %1816 = vmatprep.mubr.f32.mxu0 0.0
      %1817 = vmatmul.mubr.f32.gmra.mrb[0].mxu0 %v1598
      %v1818 = vpop.f32.mrb[0].mxu0
      %v1819 = vadd.f32 0.0, %v1818
      %v1820 = vpop.f32.mrb[0].mxu0
      %1821 = vmatprep.mubr.f32.mxu0 0.0
      %1822 = vmatmul.mubr.f32.gmra.mrb[0].mxu0 %v1601
      %v1823 = vpop.f32.mrb[0].mxu0
      %v1824 = vadd.f32 0.0, %v1823
      %v1825 = vpop.f32.mrb[0].mxu0
      %1826 = vmatprep.mubr.f32.mxu0 0.0
      %1827 = vmatmul.mubr.f32.gmra.mrb[0].mxu0 %v1604
      %v1828 = vpop.f32.mrb[0].mxu0
      %v1829 = vadd.f32 0.0, %v1828
      %v1830 = vpop.f32.mrb[0].mxu0
      %1831 = vmatprep.mubr.f32.mxu0 0.0
      %1832 = vmatmul.mubr.f32.gmra.mrb[0].mxu0 %v1607
      %v1833 = vpop.f32.mrb[0].mxu0
      %v1834 = vadd.f32 0.0, %v1833
      %v1835 = vpop.f32.mrb[0].mxu0
      %1836 = vmatprep.mubr.f32.mxu0 0.0
      %1837 = vmatmul.mubr.f32.gmra.mrb[0].mxu0 %v1610
      %v1838 = vpop.f32.mrb[0].mxu0
      %v1839 = vadd.f32 0.0, %v1838
      %v1840 = vpop.f32.mrb[0].mxu0
      %1841 = vmatprep.mubr.f32.mxu0 0.0
      %1842 = vmatmul.mubr.f32.gmra.mrb[0].mxu0 %v1613
      %v1843 = vpop.f32.mrb[0].mxu0
      %v1844 = vadd.f32 0.0, %v1843
      %v1845 = vpop.f32.mrb[0].mxu0
      %1846 = vmatprep.mubr.f32.mxu0 0.0
      %1847 = vmatmul.mubr.f32.gmra.mrb[0].mxu0 %v1616
      %v1848 = vpop.f32.mrb[0].mxu0
      %v1849 = vadd.f32 0.0, %v1848
      %v1850 = vpop.f32.mrb[0].mxu0
      %1851 = vmatprep.mubr.f32.mxu0 0.0
      %1852 = vmatmul.mubr.f32.gmra.mrb[0].mxu0 %v1619
      %v1853 = vpop.f32.mrb[0].mxu0
      %v1854 = vadd.f32 0.0, %v1853
      %v1855 = vpop.f32.mrb[0].mxu0
      %1856 = vmatprep.mubr.f32.mxu0 0.0
      %1857 = vmatmul.mubr.f32.gmra.mrb[0].mxu0 %v1622
      %v1858 = vpop.f32.mrb[0].mxu0
      %v1859 = vadd.f32 0.0, %v1858
      %v1860 = vpop.f32.mrb[0].mxu0
      %1861 = vmatprep.mubr.f32.mxu0 0.0
      %1862 = vmatmul.mubr.f32.gmra.mrb[0].mxu0 %v1625
      %v1863 = vpop.f32.mrb[0].mxu0
      %v1864 = vadd.f32 0.0, %v1863
      %v1865 = vpop.f32.mrb[0].mxu0
      %1866 = vmatprep.mubr.f32.mxu0 0.0
      %1867 = vmatmul.mubr.f32.gmra.mrb[0].mxu0 %v1628
      %v1868 = vpop.f32.mrb[0].mxu0
      %v1869 = vadd.f32 0.0, %v1868
      %v1870 = vpop.f32.mrb[0].mxu0
      %1871 = vmatprep.mubr.f32.mxu0 0.0
      %1872 = vmatmul.mubr.f32.gmra.mrb[0].mxu0 %v1631
      %v1873 = vpop.f32.mrb[0].mxu0
      %v1874 = vadd.f32 0.0, %v1873
      %v1875 = vpop.f32.mrb[0].mxu0
      %1876 = vmatprep.mubr.f32.mxu0 0.0
      %1877 = vmatmul.mubr.f32.gmra.mrb[0].mxu0 %v1634
      %v1878 = vpop.f32.mrb[0].mxu0
      %v1879 = vadd.f32 0.0, %v1878
      %v1880 = vpop.f32.mrb[0].mxu0
      %1881 = vmatprep.mubr.f32.mxu0 0.0
      %1882 = vmatmul.mubr.f32.gmra.mrb[0].mxu0 %v1637
      %v1883 = vpop.f32.mrb[0].mxu0
      %v1884 = vadd.f32 0.0, %v1883
      %v1885 = vpop.f32.mrb[0].mxu0
      %1886 = vdwg.mxu0
      %v1887 = vadd.f32 %v1453, %v1709
      %v1888 = vadd.f32 %v1454, %v1714
      %v1889 = vadd.f32 %v1455, %v1719
      %v1890 = vadd.f32 %v1456, %v1724
      %v1891 = vadd.f32 %v1457, %v1729
      %v1892 = vadd.f32 %v1458, %v1734
      %v1893 = vadd.f32 %v1459, %v1739
      %v1894 = vadd.f32 %v1460, %v1744
      %v1895 = vadd.f32 %v1461, %v1749
      %v1896 = vadd.f32 %v1462, %v1754
      %v1897 = vadd.f32 %v1463, %v1759
      %v1898 = vadd.f32 %v1464, %v1764
      %v1899 = vadd.f32 %v1465, %v1769
      %v1900 = vadd.f32 %v1466, %v1774
      %v1901 = vadd.f32 %v1467, %v1779
      %v1902 = vadd.f32 %v1468, %v1784
      %v1903 = vadd.f32 %v1469, %v1789
      %v1904 = vadd.f32 %v1470, %v1794
      %v1905 = vadd.f32 %v1471, %v1799
      %v1906 = vadd.f32 %v1472, %v1804
      %v1907 = vadd.f32 %v1473, %v1809
      %v1908 = vadd.f32 %v1474, %v1814
      %v1909 = vadd.f32 %v1475, %v1819
      %v1910 = vadd.f32 %v1476, %v1824
      %v1911 = vadd.f32 %v1477, %v1829
      %v1912 = vadd.f32 %v1478, %v1834
      %v1913 = vadd.f32 %v1479, %v1839
      %v1914 = vadd.f32 %v1480, %v1844
      %v1915 = vadd.f32 %v1481, %v1849
      %v1916 = vadd.f32 %v1482, %v1854
      %v1917 = vadd.f32 %v1483, %v1859
      %v1918 = vadd.f32 %v1484, %v1864
      %v1919 = vadd.f32 %v1485, %v1869
      %v1920 = vadd.f32 %v1486, %v1874
      %v1921 = vadd.f32 %v1487, %v1879
      %v1922 = vadd.f32 %v1488, %v1884
      %v1923 = vld [vmem:[%s242 + $0x13] sm:$0xff]
      %v1924 = vld [vmem:[%s242 + $0x1b] sm:$0xff]
      %v1925 = vld [vmem:[%s242 + $0x23] sm:$0xff]
      %v1926 = vld [vmem:[%s242 + $0x2b] sm:$0xff]
      %v1927 = vld [vmem:[%s242 + $0x33] sm:$0xff]
      %v1928 = vld [vmem:[%s242 + $0x3b] sm:$0xff]
      %v1929 = vld [vmem:[%s242 + $0x43] sm:$0xff]
      %v1930 = vld [vmem:[%s242 + $0x4b] sm:$0xff]
      %v1931 = vld [vmem:[%s242 + $0x53] sm:$0xff]
      %v1932 = vld [vmem:[%s242 + $0x5b] sm:$0xff]
      %v1933 = vld [vmem:[%s242 + $0x63] sm:$0xff]
      %v1934 = vld [vmem:[%s242 + $0x6b] sm:$0xff]
      %v1935 = vld [vmem:[%s242 + $0x73] sm:$0xff]
      %v1936 = vld [vmem:[%s242 + $0x7b] sm:$0xff]
      %v1937 = vld [vmem:[%s242 + $0x83] sm:$0xff]
      %v1938 = vld [vmem:[%s242 + $0x8b] sm:$0xff]
      %v1939 = vld [vmem:[%s242 + $0x93] sm:$0xff]
      %v1940 = vld [vmem:[%s242 + $0x9b] sm:$0xff]
      %v1941 = vld [vmem:[%s242 + $0xa3] sm:$0xff]
      %v1942 = vld [vmem:[%s242 + $0xab] sm:$0xff]
      %v1943 = vld [vmem:[%s242 + $0xb3] sm:$0xff]
      %v1944 = vld [vmem:[%s242 + $0xbb] sm:$0xff]
      %v1945 = vld [vmem:[%s242 + $0xc3] sm:$0xff]
      %v1946 = vld [vmem:[%s242 + $0xcb] sm:$0xff]
      %v1947 = vld [vmem:[%s242 + $0xd3] sm:$0xff]
      %v1948 = vld [vmem:[%s242 + $0xdb] sm:$0xff]
      %v1949 = vld [vmem:[%s242 + $0xe3] sm:$0xff]
      %v1950 = vld [vmem:[%s242 + $0xeb] sm:$0xff]
      %v1951 = vld [vmem:[%s242 + $0xf3] sm:$0xff]
      %v1952 = vld [vmem:[%s242 + $0xfb] sm:$0xff]
      %v1953 = vld [vmem:[%s242 + $0x103] sm:$0xff]
      %v1954 = vld [vmem:[%s242 + $0x10b] sm:$0xff]
      %v1955 = vld [vmem:[%s242 + $0x113] sm:$0xff]
      %v1956 = vld [vmem:[%s242 + $0x11b] sm:$0xff]
      %v1957 = vld [vmem:[%s242 + $0x123] sm:$0xff]
      %v1958 = vld [vmem:[%s242 + $0x12b] sm:$0xff]
      %s1959 = scalar_lea.vmem %s2, 160
      %v1960 = vld [vmem:[%s1959] sm:$0xff]
      %v1961 = vld [vmem:[%s1959 + $0x8] sm:$0xff]
      %v1962 = vld [vmem:[%s1959 + $0x10] sm:$0xff]
      %v1963 = vld [vmem:[%s1959 + $0x18] sm:$0xff]
      %v1964 = vld [vmem:[%s1959 + $0x20] sm:$0xf]
      %v1966 = vsel %vm341, %v1923, 0
      %v1969 = vsel %vm341, %v1924, 0
      %v1972 = vsel %vm341, %v1925, 0
      %v1975 = vsel %vm341, %v1926, 0
      %v1978 = vsel %vm341, %v1927, 0
      %v1981 = vsel %vm341, %v1928, 0
      %v1984 = vsel %vm341, %v1929, 0
      %v1987 = vsel %vm341, %v1930, 0
      %v1990 = vsel %vm341, %v1931, 0
      %v1993 = vsel %vm341, %v1932, 0
      %v1996 = vsel %vm341, %v1933, 0
      %v1999 = vsel %vm341, %v1934, 0
      %v2002 = vsel %vm341, %v1935, 0
      %v2005 = vsel %vm341, %v1936, 0
      %v2008 = vsel %vm341, %v1937, 0
      %v2011 = vsel %vm341, %v1938, 0
      %v2014 = vsel %vm341, %v1939, 0
      %v2017 = vsel %vm341, %v1940, 0
      %v2020 = vsel %vm341, %v1941, 0
      %v2023 = vsel %vm341, %v1942, 0
      %v2026 = vsel %vm341, %v1943, 0
      %v2029 = vsel %vm341, %v1944, 0
      %v2032 = vsel %vm341, %v1945, 0
      %v2035 = vsel %vm341, %v1946, 0
      %v2038 = vsel %vm341, %v1947, 0
      %v2041 = vsel %vm341, %v1948, 0
      %v2044 = vsel %vm341, %v1949, 0
      %v2047 = vsel %vm341, %v1950, 0
      %v2050 = vsel %vm341, %v1951, 0
      %v2053 = vsel %vm341, %v1952, 0
      %v2056 = vsel %vm341, %v1953, 0
      %v2059 = vsel %vm341, %v1954, 0
      %v2062 = vsel %vm341, %v1955, 0
      %v2065 = vsel %vm341, %v1956, 0
      %v2068 = vsel %vm341, %v1957, 0
      %v2071 = vsel %vm341, %v1958, 0
      %v2074 = vsel %vm450, %v1964, 0
      %2076 = vmatprep.subr.mxu0 0.0
      %2077 = vmatpush1.msra.mxu0 %v1960
      %2078 = vmatprep.subr.mxu0 0.0
      %2079 = vmatpush1.msra.mxu0 %v1961
      %2080 = vmatprep.subr.mxu0 0.0
      %2081 = vmatpush1.msra.mxu0 %v1962
      %2082 = vmatprep.subr.mxu0 0.0
      %2083 = vmatpush1.msra.mxu0 %v1963
      %2084 = vmatprep.subr.mxu0 0.0
      %2085 = vmatpush1.msra.mxu0 %v2074
      %2086 = vmatprep.subr.mxu0 0.0
      %2087 = vmatpush1.msra.mxu0 0.0
      %2088 = vmatprep.subr.mxu0 0.0
      %2089 = vmatpush1.msra.mxu0 0.0
      %2090 = vmatprep.subr.mxu0 0.0
      %2091 = vmatpush1.msra.mxu0 0.0
      %2092 = vmatprep.subr.mxu0 0.0
      %2093 = vmatpush1.msra.mxu0 0.0
      %2094 = vmatprep.subr.mxu0 0.0
      %2095 = vmatpush1.msra.mxu0 0.0
      %2096 = vmatprep.subr.mxu0 0.0
      %2097 = vmatpush1.msra.mxu0 0.0
      %2098 = vmatprep.subr.mxu0 0.0
      %2099 = vmatpush1.msra.mxu0 0.0
      %2100 = vmatprep.subr.mxu0 0.0
      %2101 = vmatpush1.msra.mxu0 0.0
      %2102 = vmatprep.subr.mxu0 0.0
      %2103 = vmatpush1.msra.mxu0 0.0
      %2104 = vmatprep.subr.mxu0 0.0
      %2105 = vmatpush1.msra.mxu0 0.0
      %2106 = vmatprep.subr.mxu0 0.0
      %2107 = vmatpush1.msra.mxu0 0.0
      %2108 = vmatprep.subr.mxu0 0.0
      %2109 = vmatpush1.msra.mxu0 0.0
      %2110 = vmatprep.subr.mxu0 0.0
      %2111 = vmatpush1.msra.mxu0 0.0
      %2112 = vmatprep.subr.mxu0 0.0
      %2113 = vmatpush1.msra.mxu0 0.0
      %2114 = vmatprep.subr.mxu0 0.0
      %2115 = vmatpush1.msra.mxu0 0.0
      %2116 = vmatprep.subr.mxu0 0.0
      %2117 = vmatpush1.msra.mxu0 0.0
      %2118 = vmatprep.subr.mxu0 0.0
      %2119 = vmatpush1.msra.mxu0 0.0
      %2120 = vmatprep.subr.mxu0 0.0
      %2121 = vmatpush1.msra.mxu0 0.0
      %2122 = vmatprep.subr.mxu0 0.0
      %2123 = vmatpush1.msra.mxu0 0.0
      %2124 = vmatprep.subr.mxu0 0.0
      %2125 = vmatpush1.msra.mxu0 0.0
      %2126 = vmatprep.subr.mxu0 0.0
      %2127 = vmatpush1.msra.mxu0 0.0
      %2128 = vmatprep.subr.mxu0 0.0
      %2129 = vmatpush1.msra.mxu0 0.0
      %2130 = vmatprep.subr.mxu0 0.0
      %2131 = vmatpush1.msra.mxu0 0.0
      %2132 = vmatprep.subr.mxu0 0.0
      %2133 = vmatpush1.msra.mxu0 0.0
      %2134 = vmatprep.subr.mxu0 0.0
      %2135 = vmatpush1.msra.mxu0 0.0
      %2136 = vmatprep.subr.mxu0 0.0
      %2137 = vmatpush1.msra.mxu0 0.0
      %2138 = vmatprep.subr.mxu0 0.0
      %2139 = vmatpush1.msra.mxu0 0.0
      %2140 = vmatprep.mubr.f32.mxu0 0.0
      %2141 = vmatmul.mubr.f32.gmra.mrb[0].mxu0 %v1966
      %v2142 = vpop.f32.mrb[0].mxu0
      %v2143 = vadd.f32 0.0, %v2142
      %v2144 = vpop.f32.mrb[0].mxu0
      %2145 = vmatprep.mubr.f32.mxu0 0.0
      %2146 = vmatmul.mubr.f32.gmra.mrb[0].mxu0 %v1969
      %v2147 = vpop.f32.mrb[0].mxu0
      %v2148 = vadd.f32 0.0, %v2147
      %v2149 = vpop.f32.mrb[0].mxu0
      %2150 = vmatprep.mubr.f32.mxu0 0.0
      %2151 = vmatmul.mubr.f32.gmra.mrb[0].mxu0 %v1972
      %v2152 = vpop.f32.mrb[0].mxu0
      %v2153 = vadd.f32 0.0, %v2152
      %v2154 = vpop.f32.mrb[0].mxu0
      %2155 = vmatprep.mubr.f32.mxu0 0.0
      %2156 = vmatmul.mubr.f32.gmra.mrb[0].mxu0 %v1975
      %v2157 = vpop.f32.mrb[0].mxu0
      %v2158 = vadd.f32 0.0, %v2157
      %v2159 = vpop.f32.mrb[0].mxu0
      %2160 = vmatprep.mubr.f32.mxu0 0.0
      %2161 = vmatmul.mubr.f32.gmra.mrb[0].mxu0 %v1978
      %v2162 = vpop.f32.mrb[0].mxu0
      %v2163 = vadd.f32 0.0, %v2162
      %v2164 = vpop.f32.mrb[0].mxu0
      %2165 = vmatprep.mubr.f32.mxu0 0.0
      %2166 = vmatmul.mubr.f32.gmra.mrb[0].mxu0 %v1981
      %v2167 = vpop.f32.mrb[0].mxu0
      %v2168 = vadd.f32 0.0, %v2167
      %v2169 = vpop.f32.mrb[0].mxu0
      %2170 = vmatprep.mubr.f32.mxu0 0.0
      %2171 = vmatmul.mubr.f32.gmra.mrb[0].mxu0 %v1984
      %v2172 = vpop.f32.mrb[0].mxu0
      %v2173 = vadd.f32 0.0, %v2172
      %v2174 = vpop.f32.mrb[0].mxu0
      %2175 = vmatprep.mubr.f32.mxu0 0.0
      %2176 = vmatmul.mubr.f32.gmra.mrb[0].mxu0 %v1987
      %v2177 = vpop.f32.mrb[0].mxu0
      %v2178 = vadd.f32 0.0, %v2177
      %v2179 = vpop.f32.mrb[0].mxu0
      %2180 = vmatprep.mubr.f32.mxu0 0.0
      %2181 = vmatmul.mubr.f32.gmra.mrb[0].mxu0 %v1990
      %v2182 = vpop.f32.mrb[0].mxu0
      %v2183 = vadd.f32 0.0, %v2182
      %v2184 = vpop.f32.mrb[0].mxu0
      %2185 = vmatprep.mubr.f32.mxu0 0.0
      %2186 = vmatmul.mubr.f32.gmra.mrb[0].mxu0 %v1993
      %v2187 = vpop.f32.mrb[0].mxu0
      %v2188 = vadd.f32 0.0, %v2187
      %v2189 = vpop.f32.mrb[0].mxu0
      %2190 = vmatprep.mubr.f32.mxu0 0.0
      %2191 = vmatmul.mubr.f32.gmra.mrb[0].mxu0 %v1996
      %v2192 = vpop.f32.mrb[0].mxu0
      %v2193 = vadd.f32 0.0, %v2192
      %v2194 = vpop.f32.mrb[0].mxu0
      %2195 = vmatprep.mubr.f32.mxu0 0.0
      %2196 = vmatmul.mubr.f32.gmra.mrb[0].mxu0 %v1999
      %v2197 = vpop.f32.mrb[0].mxu0
      %v2198 = vadd.f32 0.0, %v2197
      %v2199 = vpop.f32.mrb[0].mxu0
      %2200 = vmatprep.mubr.f32.mxu0 0.0
      %2201 = vmatmul.mubr.f32.gmra.mrb[0].mxu0 %v2002
      %v2202 = vpop.f32.mrb[0].mxu0
      %v2203 = vadd.f32 0.0, %v2202
      %v2204 = vpop.f32.mrb[0].mxu0
      %2205 = vmatprep.mubr.f32.mxu0 0.0
      %2206 = vmatmul.mubr.f32.gmra.mrb[0].mxu0 %v2005
      %v2207 = vpop.f32.mrb[0].mxu0
      %v2208 = vadd.f32 0.0, %v2207
      %v2209 = vpop.f32.mrb[0].mxu0
      %2210 = vmatprep.mubr.f32.mxu0 0.0
      %2211 = vmatmul.mubr.f32.gmra.mrb[0].mxu0 %v2008
      %v2212 = vpop.f32.mrb[0].mxu0
      %v2213 = vadd.f32 0.0, %v2212
      %v2214 = vpop.f32.mrb[0].mxu0
      %2215 = vmatprep.mubr.f32.mxu0 0.0
      %2216 = vmatmul.mubr.f32.gmra.mrb[0].mxu0 %v2011
      %v2217 = vpop.f32.mrb[0].mxu0
      %v2218 = vadd.f32 0.0, %v2217
      %v2219 = vpop.f32.mrb[0].mxu0
      %2220 = vmatprep.mubr.f32.mxu0 0.0
      %2221 = vmatmul.mubr.f32.gmra.mrb[0].mxu0 %v2014
      %v2222 = vpop.f32.mrb[0].mxu0
      %v2223 = vadd.f32 0.0, %v2222
      %v2224 = vpop.f32.mrb[0].mxu0
      %2225 = vmatprep.mubr.f32.mxu0 0.0
      %2226 = vmatmul.mubr.f32.gmra.mrb[0].mxu0 %v2017
      %v2227 = vpop.f32.mrb[0].mxu0
      %v2228 = vadd.f32 0.0, %v2227
      %v2229 = vpop.f32.mrb[0].mxu0
      %2230 = vmatprep.mubr.f32.mxu0 0.0
      %2231 = vmatmul.mubr.f32.gmra.mrb[0].mxu0 %v2020
      %v2232 = vpop.f32.mrb[0].mxu0
      %v2233 = vadd.f32 0.0, %v2232
      %v2234 = vpop.f32.mrb[0].mxu0
      %2235 = vmatprep.mubr.f32.mxu0 0.0
      %2236 = vmatmul.mubr.f32.gmra.mrb[0].mxu0 %v2023
      %v2237 = vpop.f32.mrb[0].mxu0
      %v2238 = vadd.f32 0.0, %v2237
      %v2239 = vpop.f32.mrb[0].mxu0
      %2240 = vmatprep.mubr.f32.mxu0 0.0
      %2241 = vmatmul.mubr.f32.gmra.mrb[0].mxu0 %v2026
      %v2242 = vpop.f32.mrb[0].mxu0
      %v2243 = vadd.f32 0.0, %v2242
      %v2244 = vpop.f32.mrb[0].mxu0
      %2245 = vmatprep.mubr.f32.mxu0 0.0
      %2246 = vmatmul.mubr.f32.gmra.mrb[0].mxu0 %v2029
      %v2247 = vpop.f32.mrb[0].mxu0
      %v2248 = vadd.f32 0.0, %v2247
      %v2249 = vpop.f32.mrb[0].mxu0
      %2250 = vmatprep.mubr.f32.mxu0 0.0
      %2251 = vmatmul.mubr.f32.gmra.mrb[0].mxu0 %v2032
      %v2252 = vpop.f32.mrb[0].mxu0
      %v2253 = vadd.f32 0.0, %v2252
      %v2254 = vpop.f32.mrb[0].mxu0
      %2255 = vmatprep.mubr.f32.mxu0 0.0
      %2256 = vmatmul.mubr.f32.gmra.mrb[0].mxu0 %v2035
      %v2257 = vpop.f32.mrb[0].mxu0
      %v2258 = vadd.f32 0.0, %v2257
      %v2259 = vpop.f32.mrb[0].mxu0
      %2260 = vmatprep.mubr.f32.mxu0 0.0
      %2261 = vmatmul.mubr.f32.gmra.mrb[0].mxu0 %v2038
      %v2262 = vpop.f32.mrb[0].mxu0
      %v2263 = vadd.f32 0.0, %v2262
      %v2264 = vpop.f32.mrb[0].mxu0
      %2265 = vmatprep.mubr.f32.mxu0 0.0
      %2266 = vmatmul.mubr.f32.gmra.mrb[0].mxu0 %v2041
      %v2267 = vpop.f32.mrb[0].mxu0
      %v2268 = vadd.f32 0.0, %v2267
      %v2269 = vpop.f32.mrb[0].mxu0
      %2270 = vmatprep.mubr.f32.mxu0 0.0
      %2271 = vmatmul.mubr.f32.gmra.mrb[0].mxu0 %v2044
      %v2272 = vpop.f32.mrb[0].mxu0
      %v2273 = vadd.f32 0.0, %v2272
      %v2274 = vpop.f32.mrb[0].mxu0
      %2275 = vmatprep.mubr.f32.mxu0 0.0
      %2276 = vmatmul.mubr.f32.gmra.mrb[0].mxu0 %v2047
      %v2277 = vpop.f32.mrb[0].mxu0
      %v2278 = vadd.f32 0.0, %v2277
      %v2279 = vpop.f32.mrb[0].mxu0
      %2280 = vmatprep.mubr.f32.mxu0 0.0
      %2281 = vmatmul.mubr.f32.gmra.mrb[0].mxu0 %v2050
      %v2282 = vpop.f32.mrb[0].mxu0
      %v2283 = vadd.f32 0.0, %v2282
      %v2284 = vpop.f32.mrb[0].mxu0
      %2285 = vmatprep.mubr.f32.mxu0 0.0
      %2286 = vmatmul.mubr.f32.gmra.mrb[0].mxu0 %v2053
      %v2287 = vpop.f32.mrb[0].mxu0
      %v2288 = vadd.f32 0.0, %v2287
      %v2289 = vpop.f32.mrb[0].mxu0
      %2290 = vmatprep.mubr.f32.mxu0 0.0
      %2291 = vmatmul.mubr.f32.gmra.mrb[0].mxu0 %v2056
      %v2292 = vpop.f32.mrb[0].mxu0
      %v2293 = vadd.f32 0.0, %v2292
      %v2294 = vpop.f32.mrb[0].mxu0
      %2295 = vmatprep.mubr.f32.mxu0 0.0
      %2296 = vmatmul.mubr.f32.gmra.mrb[0].mxu0 %v2059
      %v2297 = vpop.f32.mrb[0].mxu0
      %v2298 = vadd.f32 0.0, %v2297
      %v2299 = vpop.f32.mrb[0].mxu0
      %2300 = vmatprep.mubr.f32.mxu0 0.0
      %2301 = vmatmul.mubr.f32.gmra.mrb[0].mxu0 %v2062
      %v2302 = vpop.f32.mrb[0].mxu0
      %v2303 = vadd.f32 0.0, %v2302
      %v2304 = vpop.f32.mrb[0].mxu0
      %2305 = vmatprep.mubr.f32.mxu0 0.0
      %2306 = vmatmul.mubr.f32.gmra.mrb[0].mxu0 %v2065
      %v2307 = vpop.f32.mrb[0].mxu0
      %v2308 = vadd.f32 0.0, %v2307
      %v2309 = vpop.f32.mrb[0].mxu0
      %2310 = vmatprep.mubr.f32.mxu0 0.0
      %2311 = vmatmul.mubr.f32.gmra.mrb[0].mxu0 %v2068
      %v2312 = vpop.f32.mrb[0].mxu0
      %v2313 = vadd.f32 0.0, %v2312
      %v2314 = vpop.f32.mrb[0].mxu0
      %2315 = vmatprep.mubr.f32.mxu0 0.0
      %2316 = vmatmul.mubr.f32.gmra.mrb[0].mxu0 %v2071
      %v2317 = vpop.f32.mrb[0].mxu0
      %v2318 = vadd.f32 0.0, %v2317
      %v2319 = vpop.f32.mrb[0].mxu0
      %2320 = vdwg.mxu0
      %v2321 = vadd.f32 %v1887, %v2143
      %v2322 = vadd.f32 %v1888, %v2148
      %v2323 = vadd.f32 %v1889, %v2153
      %v2324 = vadd.f32 %v1890, %v2158
      %v2325 = vadd.f32 %v1891, %v2163
      %v2326 = vadd.f32 %v1892, %v2168
      %v2327 = vadd.f32 %v1893, %v2173
      %v2328 = vadd.f32 %v1894, %v2178
      %v2329 = vadd.f32 %v1895, %v2183
      %v2330 = vadd.f32 %v1896, %v2188
      %v2331 = vadd.f32 %v1897, %v2193
      %v2332 = vadd.f32 %v1898, %v2198
      %v2333 = vadd.f32 %v1899, %v2203
      %v2334 = vadd.f32 %v1900, %v2208
      %v2335 = vadd.f32 %v1901, %v2213
      %v2336 = vadd.f32 %v1902, %v2218
      %v2337 = vadd.f32 %v1903, %v2223
      %v2338 = vadd.f32 %v1904, %v2228
      %v2339 = vadd.f32 %v1905, %v2233
      %v2340 = vadd.f32 %v1906, %v2238
      %v2341 = vadd.f32 %v1907, %v2243
      %v2342 = vadd.f32 %v1908, %v2248
      %v2343 = vadd.f32 %v1909, %v2253
      %v2344 = vadd.f32 %v1910, %v2258
      %v2345 = vadd.f32 %v1911, %v2263
      %v2346 = vadd.f32 %v1912, %v2268
      %v2347 = vadd.f32 %v1913, %v2273
      %v2348 = vadd.f32 %v1914, %v2278
      %v2349 = vadd.f32 %v1915, %v2283
      %v2350 = vadd.f32 %v1916, %v2288
      %v2351 = vadd.f32 %v1917, %v2293
      %v2352 = vadd.f32 %v1918, %v2298
      %v2353 = vadd.f32 %v1919, %v2303
      %v2354 = vadd.f32 %v1920, %v2308
      %v2355 = vadd.f32 %v1921, %v2313
      %v2356 = vadd.f32 %v1922, %v2318
      %v2357 = vld [vmem:[%s242 + $0x14] sm:$0xff]
      %v2358 = vld [vmem:[%s242 + $0x1c] sm:$0xff]
      %v2359 = vld [vmem:[%s242 + $0x24] sm:$0xff]
      %v2360 = vld [vmem:[%s242 + $0x2c] sm:$0xff]
      %v2361 = vld [vmem:[%s242 + $0x34] sm:$0xff]
      %v2362 = vld [vmem:[%s242 + $0x3c] sm:$0xff]
      %v2363 = vld [vmem:[%s242 + $0x44] sm:$0xff]
      %v2364 = vld [vmem:[%s242 + $0x4c] sm:$0xff]
      %v2365 = vld [vmem:[%s242 + $0x54] sm:$0xff]
      %v2366 = vld [vmem:[%s242 + $0x5c] sm:$0xff]
      %v2367 = vld [vmem:[%s242 + $0x64] sm:$0xff]
      %v2368 = vld [vmem:[%s242 + $0x6c] sm:$0xff]
      %v2369 = vld [vmem:[%s242 + $0x74] sm:$0xff]
      %v2370 = vld [vmem:[%s242 + $0x7c] sm:$0xff]
      %v2371 = vld [vmem:[%s242 + $0x84] sm:$0xff]
      %v2372 = vld [vmem:[%s242 + $0x8c] sm:$0xff]
      %v2373 = vld [vmem:[%s242 + $0x94] sm:$0xff]
      %v2374 = vld [vmem:[%s242 + $0x9c] sm:$0xff]
      %v2375 = vld [vmem:[%s242 + $0xa4] sm:$0xff]
      %v2376 = vld [vmem:[%s242 + $0xac] sm:$0xff]
      %v2377 = vld [vmem:[%s242 + $0xb4] sm:$0xff]
      %v2378 = vld [vmem:[%s242 + $0xbc] sm:$0xff]
      %v2379 = vld [vmem:[%s242 + $0xc4] sm:$0xff]
      %v2380 = vld [vmem:[%s242 + $0xcc] sm:$0xff]
      %v2381 = vld [vmem:[%s242 + $0xd4] sm:$0xff]
      %v2382 = vld [vmem:[%s242 + $0xdc] sm:$0xff]
      %v2383 = vld [vmem:[%s242 + $0xe4] sm:$0xff]
      %v2384 = vld [vmem:[%s242 + $0xec] sm:$0xff]
      %v2385 = vld [vmem:[%s242 + $0xf4] sm:$0xff]
      %v2386 = vld [vmem:[%s242 + $0xfc] sm:$0xff]
      %v2387 = vld [vmem:[%s242 + $0x104] sm:$0xff]
      %v2388 = vld [vmem:[%s242 + $0x10c] sm:$0xff]
      %v2389 = vld [vmem:[%s242 + $0x114] sm:$0xff]
      %v2390 = vld [vmem:[%s242 + $0x11c] sm:$0xff]
      %v2391 = vld [vmem:[%s242 + $0x124] sm:$0xff]
      %v2392 = vld [vmem:[%s242 + $0x12c] sm:$0xff]
      %s2393 = scalar_lea.vmem %s2, 200
      %v2394 = vld [vmem:[%s2393] sm:$0xff]
      %v2395 = vld [vmem:[%s2393 + $0x8] sm:$0xff]
      %v2396 = vld [vmem:[%s2393 + $0x10] sm:$0xff]
      %v2397 = vld [vmem:[%s2393 + $0x18] sm:$0xff]
      %v2398 = vld [vmem:[%s2393 + $0x20] sm:$0xf]
      %v2400 = vsel %vm341, %v2357, 0
      %v2403 = vsel %vm341, %v2358, 0
      %v2406 = vsel %vm341, %v2359, 0
      %v2409 = vsel %vm341, %v2360, 0
      %v2412 = vsel %vm341, %v2361, 0
      %v2415 = vsel %vm341, %v2362, 0
      %v2418 = vsel %vm341, %v2363, 0
      %v2421 = vsel %vm341, %v2364, 0
      %v2424 = vsel %vm341, %v2365, 0
      %v2427 = vsel %vm341, %v2366, 0
      %v2430 = vsel %vm341, %v2367, 0
      %v2433 = vsel %vm341, %v2368, 0
      %v2436 = vsel %vm341, %v2369, 0
      %v2439 = vsel %vm341, %v2370, 0
      %v2442 = vsel %vm341, %v2371, 0
      %v2445 = vsel %vm341, %v2372, 0
      %v2448 = vsel %vm341, %v2373, 0
      %v2451 = vsel %vm341, %v2374, 0
      %v2454 = vsel %vm341, %v2375, 0
      %v2457 = vsel %vm341, %v2376, 0
      %v2460 = vsel %vm341, %v2377, 0
      %v2463 = vsel %vm341, %v2378, 0
      %v2466 = vsel %vm341, %v2379, 0
      %v2469 = vsel %vm341, %v2380, 0
      %v2472 = vsel %vm341, %v2381, 0
      %v2475 = vsel %vm341, %v2382, 0
      %v2478 = vsel %vm341, %v2383, 0
      %v2481 = vsel %vm341, %v2384, 0
      %v2484 = vsel %vm341, %v2385, 0
      %v2487 = vsel %vm341, %v2386, 0
      %v2490 = vsel %vm341, %v2387, 0
      %v2493 = vsel %vm341, %v2388, 0
      %v2496 = vsel %vm341, %v2389, 0
      %v2499 = vsel %vm341, %v2390, 0
      %v2502 = vsel %vm341, %v2391, 0
      %v2505 = vsel %vm341, %v2392, 0
      %v2508 = vsel %vm450, %v2398, 0
      %2510 = vmatprep.subr.mxu0 0.0
      %2511 = vmatpush1.msra.mxu0 %v2394
      %2512 = vmatprep.subr.mxu0 0.0
      %2513 = vmatpush1.msra.mxu0 %v2395
      %2514 = vmatprep.subr.mxu0 0.0
      %2515 = vmatpush1.msra.mxu0 %v2396
      %2516 = vmatprep.subr.mxu0 0.0
      %2517 = vmatpush1.msra.mxu0 %v2397
      %2518 = vmatprep.subr.mxu0 0.0
      %2519 = vmatpush1.msra.mxu0 %v2508
      %2520 = vmatprep.subr.mxu0 0.0
      %2521 = vmatpush1.msra.mxu0 0.0
      %2522 = vmatprep.subr.mxu0 0.0
      %2523 = vmatpush1.msra.mxu0 0.0
      %2524 = vmatprep.subr.mxu0 0.0
      %2525 = vmatpush1.msra.mxu0 0.0
      %2526 = vmatprep.subr.mxu0 0.0
      %2527 = vmatpush1.msra.mxu0 0.0
      %2528 = vmatprep.subr.mxu0 0.0
      %2529 = vmatpush1.msra.mxu0 0.0
      %2530 = vmatprep.subr.mxu0 0.0
      %2531 = vmatpush1.msra.mxu0 0.0
      %2532 = vmatprep.subr.mxu0 0.0
      %2533 = vmatpush1.msra.mxu0 0.0
      %2534 = vmatprep.subr.mxu0 0.0
      %2535 = vmatpush1.msra.mxu0 0.0
      %2536 = vmatprep.subr.mxu0 0.0
      %2537 = vmatpush1.msra.mxu0 0.0
      %2538 = vmatprep.subr.mxu0 0.0
      %2539 = vmatpush1.msra.mxu0 0.0
      %2540 = vmatprep.subr.mxu0 0.0
      %2541 = vmatpush1.msra.mxu0 0.0
      %2542 = vmatprep.subr.mxu0 0.0
      %2543 = vmatpush1.msra.mxu0 0.0
      %2544 = vmatprep.subr.mxu0 0.0
      %2545 = vmatpush1.msra.mxu0 0.0
      %2546 = vmatprep.subr.mxu0 0.0
      %2547 = vmatpush1.msra.mxu0 0.0
      %2548 = vmatprep.subr.mxu0 0.0
      %2549 = vmatpush1.msra.mxu0 0.0
      %2550 = vmatprep.subr.mxu0 0.0
      %2551 = vmatpush1.msra.mxu0 0.0
      %2552 = vmatprep.subr.mxu0 0.0
      %2553 = vmatpush1.msra.mxu0 0.0
      %2554 = vmatprep.subr.mxu0 0.0
      %2555 = vmatpush1.msra.mxu0 0.0
      %2556 = vmatprep.subr.mxu0 0.0
      %2557 = vmatpush1.msra.mxu0 0.0
      %2558 = vmatprep.subr.mxu0 0.0
      %2559 = vmatpush1.msra.mxu0 0.0
      %2560 = vmatprep.subr.mxu0 0.0
      %2561 = vmatpush1.msra.mxu0 0.0
      %2562 = vmatprep.subr.mxu0 0.0
      %2563 = vmatpush1.msra.mxu0 0.0
      %2564 = vmatprep.subr.mxu0 0.0
      %2565 = vmatpush1.msra.mxu0 0.0
      %2566 = vmatprep.subr.mxu0 0.0
      %2567 = vmatpush1.msra.mxu0 0.0
      %2568 = vmatprep.subr.mxu0 0.0
      %2569 = vmatpush1.msra.mxu0 0.0
      %2570 = vmatprep.subr.mxu0 0.0
      %2571 = vmatpush1.msra.mxu0 0.0
      %2572 = vmatprep.subr.mxu0 0.0
      %2573 = vmatpush1.msra.mxu0 0.0
      %2574 = vmatprep.mubr.f32.mxu0 0.0
      %2575 = vmatmul.mubr.f32.gmra.mrb[0].mxu0 %v2400
      %v2576 = vpop.f32.mrb[0].mxu0
      %v2577 = vadd.f32 0.0, %v2576
      %v2578 = vpop.f32.mrb[0].mxu0
      %2579 = vmatprep.mubr.f32.mxu0 0.0
      %2580 = vmatmul.mubr.f32.gmra.mrb[0].mxu0 %v2403
      %v2581 = vpop.f32.mrb[0].mxu0
      %v2582 = vadd.f32 0.0, %v2581
      %v2583 = vpop.f32.mrb[0].mxu0
      %2584 = vmatprep.mubr.f32.mxu0 0.0
      %2585 = vmatmul.mubr.f32.gmra.mrb[0].mxu0 %v2406
      %v2586 = vpop.f32.mrb[0].mxu0
      %v2587 = vadd.f32 0.0, %v2586
      %v2588 = vpop.f32.mrb[0].mxu0
      %2589 = vmatprep.mubr.f32.mxu0 0.0
      %2590 = vmatmul.mubr.f32.gmra.mrb[0].mxu0 %v2409
      %v2591 = vpop.f32.mrb[0].mxu0
      %v2592 = vadd.f32 0.0, %v2591
      %v2593 = vpop.f32.mrb[0].mxu0
      %2594 = vmatprep.mubr.f32.mxu0 0.0
      %2595 = vmatmul.mubr.f32.gmra.mrb[0].mxu0 %v2412
      %v2596 = vpop.f32.mrb[0].mxu0
      %v2597 = vadd.f32 0.0, %v2596
      %v2598 = vpop.f32.mrb[0].mxu0
      %2599 = vmatprep.mubr.f32.mxu0 0.0
      %2600 = vmatmul.mubr.f32.gmra.mrb[0].mxu0 %v2415
      %v2601 = vpop.f32.mrb[0].mxu0
      %v2602 = vadd.f32 0.0, %v2601
      %v2603 = vpop.f32.mrb[0].mxu0
      %2604 = vmatprep.mubr.f32.mxu0 0.0
      %2605 = vmatmul.mubr.f32.gmra.mrb[0].mxu0 %v2418
      %v2606 = vpop.f32.mrb[0].mxu0
      %v2607 = vadd.f32 0.0, %v2606
      %v2608 = vpop.f32.mrb[0].mxu0
      %2609 = vmatprep.mubr.f32.mxu0 0.0
      %2610 = vmatmul.mubr.f32.gmra.mrb[0].mxu0 %v2421
      %v2611 = vpop.f32.mrb[0].mxu0
      %v2612 = vadd.f32 0.0, %v2611
      %v2613 = vpop.f32.mrb[0].mxu0
      %2614 = vmatprep.mubr.f32.mxu0 0.0
      %2615 = vmatmul.mubr.f32.gmra.mrb[0].mxu0 %v2424
      %v2616 = vpop.f32.mrb[0].mxu0
      %v2617 = vadd.f32 0.0, %v2616
      %v2618 = vpop.f32.mrb[0].mxu0
      %2619 = vmatprep.mubr.f32.mxu0 0.0
      %2620 = vmatmul.mubr.f32.gmra.mrb[0].mxu0 %v2427
      %v2621 = vpop.f32.mrb[0].mxu0
      %v2622 = vadd.f32 0.0, %v2621
      %v2623 = vpop.f32.mrb[0].mxu0
      %2624 = vmatprep.mubr.f32.mxu0 0.0
      %2625 = vmatmul.mubr.f32.gmra.mrb[0].mxu0 %v2430
      %v2626 = vpop.f32.mrb[0].mxu0
      %v2627 = vadd.f32 0.0, %v2626
      %v2628 = vpop.f32.mrb[0].mxu0
      %2629 = vmatprep.mubr.f32.mxu0 0.0
      %2630 = vmatmul.mubr.f32.gmra.mrb[0].mxu0 %v2433
      %v2631 = vpop.f32.mrb[0].mxu0
      %v2632 = vadd.f32 0.0, %v2631
      %v2633 = vpop.f32.mrb[0].mxu0
      %2634 = vmatprep.mubr.f32.mxu0 0.0
      %2635 = vmatmul.mubr.f32.gmra.mrb[0].mxu0 %v2436
      %v2636 = vpop.f32.mrb[0].mxu0
      %v2637 = vadd.f32 0.0, %v2636
      %v2638 = vpop.f32.mrb[0].mxu0
      %2639 = vmatprep.mubr.f32.mxu0 0.0
      %2640 = vmatmul.mubr.f32.gmra.mrb[0].mxu0 %v2439
      %v2641 = vpop.f32.mrb[0].mxu0
      %v2642 = vadd.f32 0.0, %v2641
      %v2643 = vpop.f32.mrb[0].mxu0
      %2644 = vmatprep.mubr.f32.mxu0 0.0
      %2645 = vmatmul.mubr.f32.gmra.mrb[0].mxu0 %v2442
      %v2646 = vpop.f32.mrb[0].mxu0
      %v2647 = vadd.f32 0.0, %v2646
      %v2648 = vpop.f32.mrb[0].mxu0
      %2649 = vmatprep.mubr.f32.mxu0 0.0
      %2650 = vmatmul.mubr.f32.gmra.mrb[0].mxu0 %v2445
      %v2651 = vpop.f32.mrb[0].mxu0
      %v2652 = vadd.f32 0.0, %v2651
      %v2653 = vpop.f32.mrb[0].mxu0
      %2654 = vmatprep.mubr.f32.mxu0 0.0
      %2655 = vmatmul.mubr.f32.gmra.mrb[0].mxu0 %v2448
      %v2656 = vpop.f32.mrb[0].mxu0
      %v2657 = vadd.f32 0.0, %v2656
      %v2658 = vpop.f32.mrb[0].mxu0
      %2659 = vmatprep.mubr.f32.mxu0 0.0
      %2660 = vmatmul.mubr.f32.gmra.mrb[0].mxu0 %v2451
      %v2661 = vpop.f32.mrb[0].mxu0
      %v2662 = vadd.f32 0.0, %v2661
      %v2663 = vpop.f32.mrb[0].mxu0
      %2664 = vmatprep.mubr.f32.mxu0 0.0
      %2665 = vmatmul.mubr.f32.gmra.mrb[0].mxu0 %v2454
      %v2666 = vpop.f32.mrb[0].mxu0
      %v2667 = vadd.f32 0.0, %v2666
      %v2668 = vpop.f32.mrb[0].mxu0
      %2669 = vmatprep.mubr.f32.mxu0 0.0
      %2670 = vmatmul.mubr.f32.gmra.mrb[0].mxu0 %v2457
      %v2671 = vpop.f32.mrb[0].mxu0
      %v2672 = vadd.f32 0.0, %v2671
      %v2673 = vpop.f32.mrb[0].mxu0
      %2674 = vmatprep.mubr.f32.mxu0 0.0
      %2675 = vmatmul.mubr.f32.gmra.mrb[0].mxu0 %v2460
      %v2676 = vpop.f32.mrb[0].mxu0
      %v2677 = vadd.f32 0.0, %v2676
      %v2678 = vpop.f32.mrb[0].mxu0
      %2679 = vmatprep.mubr.f32.mxu0 0.0
      %2680 = vmatmul.mubr.f32.gmra.mrb[0].mxu0 %v2463
      %v2681 = vpop.f32.mrb[0].mxu0
      %v2682 = vadd.f32 0.0, %v2681
      %v2683 = vpop.f32.mrb[0].mxu0
      %2684 = vmatprep.mubr.f32.mxu0 0.0
      %2685 = vmatmul.mubr.f32.gmra.mrb[0].mxu0 %v2466
      %v2686 = vpop.f32.mrb[0].mxu0
      %v2687 = vadd.f32 0.0, %v2686
      %v2688 = vpop.f32.mrb[0].mxu0
      %2689 = vmatprep.mubr.f32.mxu0 0.0
      %2690 = vmatmul.mubr.f32.gmra.mrb[0].mxu0 %v2469
      %v2691 = vpop.f32.mrb[0].mxu0
      %v2692 = vadd.f32 0.0, %v2691
      %v2693 = vpop.f32.mrb[0].mxu0
      %2694 = vmatprep.mubr.f32.mxu0 0.0
      %2695 = vmatmul.mubr.f32.gmra.mrb[0].mxu0 %v2472
      %v2696 = vpop.f32.mrb[0].mxu0
      %v2697 = vadd.f32 0.0, %v2696
      %v2698 = vpop.f32.mrb[0].mxu0
      %2699 = vmatprep.mubr.f32.mxu0 0.0
      %2700 = vmatmul.mubr.f32.gmra.mrb[0].mxu0 %v2475
      %v2701 = vpop.f32.mrb[0].mxu0
      %v2702 = vadd.f32 0.0, %v2701
      %v2703 = vpop.f32.mrb[0].mxu0
      %2704 = vmatprep.mubr.f32.mxu0 0.0
      %2705 = vmatmul.mubr.f32.gmra.mrb[0].mxu0 %v2478
      %v2706 = vpop.f32.mrb[0].mxu0
      %v2707 = vadd.f32 0.0, %v2706
      %v2708 = vpop.f32.mrb[0].mxu0
      %2709 = vmatprep.mubr.f32.mxu0 0.0
      %2710 = vmatmul.mubr.f32.gmra.mrb[0].mxu0 %v2481
      %v2711 = vpop.f32.mrb[0].mxu0
      %v2712 = vadd.f32 0.0, %v2711
      %v2713 = vpop.f32.mrb[0].mxu0
      %2714 = vmatprep.mubr.f32.mxu0 0.0
      %2715 = vmatmul.mubr.f32.gmra.mrb[0].mxu0 %v2484
      %v2716 = vpop.f32.mrb[0].mxu0
      %v2717 = vadd.f32 0.0, %v2716
      %v2718 = vpop.f32.mrb[0].mxu0
      %2719 = vmatprep.mubr.f32.mxu0 0.0
      %2720 = vmatmul.mubr.f32.gmra.mrb[0].mxu0 %v2487
      %v2721 = vpop.f32.mrb[0].mxu0
      %v2722 = vadd.f32 0.0, %v2721
      %v2723 = vpop.f32.mrb[0].mxu0
      %2724 = vmatprep.mubr.f32.mxu0 0.0
      %2725 = vmatmul.mubr.f32.gmra.mrb[0].mxu0 %v2490
      %v2726 = vpop.f32.mrb[0].mxu0
      %v2727 = vadd.f32 0.0, %v2726
      %v2728 = vpop.f32.mrb[0].mxu0
      %2729 = vmatprep.mubr.f32.mxu0 0.0
      %2730 = vmatmul.mubr.f32.gmra.mrb[0].mxu0 %v2493
      %v2731 = vpop.f32.mrb[0].mxu0
      %v2732 = vadd.f32 0.0, %v2731
      %v2733 = vpop.f32.mrb[0].mxu0
      %2734 = vmatprep.mubr.f32.mxu0 0.0
      %2735 = vmatmul.mubr.f32.gmra.mrb[0].mxu0 %v2496
      %v2736 = vpop.f32.mrb[0].mxu0
      %v2737 = vadd.f32 0.0, %v2736
      %v2738 = vpop.f32.mrb[0].mxu0
      %2739 = vmatprep.mubr.f32.mxu0 0.0
      %2740 = vmatmul.mubr.f32.gmra.mrb[0].mxu0 %v2499
      %v2741 = vpop.f32.mrb[0].mxu0
      %v2742 = vadd.f32 0.0, %v2741
      %v2743 = vpop.f32.mrb[0].mxu0
      %2744 = vmatprep.mubr.f32.mxu0 0.0
      %2745 = vmatmul.mubr.f32.gmra.mrb[0].mxu0 %v2502
      %v2746 = vpop.f32.mrb[0].mxu0
      %v2747 = vadd.f32 0.0, %v2746
      %v2748 = vpop.f32.mrb[0].mxu0
      %2749 = vmatprep.mubr.f32.mxu0 0.0
      %2750 = vmatmul.mubr.f32.gmra.mrb[0].mxu0 %v2505
      %v2751 = vpop.f32.mrb[0].mxu0
      %v2752 = vadd.f32 0.0, %v2751
      %v2753 = vpop.f32.mrb[0].mxu0
      %2754 = vdwg.mxu0
      %v2755 = vadd.f32 %v2321, %v2577
      %v2756 = vadd.f32 %v2322, %v2582
      %v2757 = vadd.f32 %v2323, %v2587
      %v2758 = vadd.f32 %v2324, %v2592
      %v2759 = vadd.f32 %v2325, %v2597
      %v2760 = vadd.f32 %v2326, %v2602
      %v2761 = vadd.f32 %v2327, %v2607
      %v2762 = vadd.f32 %v2328, %v2612
      %v2763 = vadd.f32 %v2329, %v2617
      %v2764 = vadd.f32 %v2330, %v2622
      %v2765 = vadd.f32 %v2331, %v2627
      %v2766 = vadd.f32 %v2332, %v2632
      %v2767 = vadd.f32 %v2333, %v2637
      %v2768 = vadd.f32 %v2334, %v2642
      %v2769 = vadd.f32 %v2335, %v2647
      %v2770 = vadd.f32 %v2336, %v2652
      %v2771 = vadd.f32 %v2337, %v2657
      %v2772 = vadd.f32 %v2338, %v2662
      %v2773 = vadd.f32 %v2339, %v2667
      %v2774 = vadd.f32 %v2340, %v2672
      %v2775 = vadd.f32 %v2341, %v2677
      %v2776 = vadd.f32 %v2342, %v2682
      %v2777 = vadd.f32 %v2343, %v2687
      %v2778 = vadd.f32 %v2344, %v2692
      %v2779 = vadd.f32 %v2345, %v2697
      %v2780 = vadd.f32 %v2346, %v2702
      %v2781 = vadd.f32 %v2347, %v2707
      %v2782 = vadd.f32 %v2348, %v2712
      %v2783 = vadd.f32 %v2349, %v2717
      %v2784 = vadd.f32 %v2350, %v2722
      %v2785 = vadd.f32 %v2351, %v2727
      %v2786 = vadd.f32 %v2352, %v2732
      %v2787 = vadd.f32 %v2353, %v2737
      %v2788 = vadd.f32 %v2354, %v2742
      %v2789 = vadd.f32 %v2355, %v2747
      %v2790 = vadd.f32 %v2356, %v2752
      %v2791 = vld [vmem:[%s242 + $0x24] sm:$0xff]
      %v2792 = vld [vmem:[%s242 + $0x2c] sm:$0xff]
      %v2793 = vld [vmem:[%s242 + $0x34] sm:$0xff]
      %v2794 = vld [vmem:[%s242 + $0x3c] sm:$0xff]
      %v2795 = vld [vmem:[%s242 + $0x44] sm:$0xff]
      %v2796 = vld [vmem:[%s242 + $0x4c] sm:$0xff]
      %v2797 = vld [vmem:[%s242 + $0x54] sm:$0xff]
      %v2798 = vld [vmem:[%s242 + $0x5c] sm:$0xff]
      %v2799 = vld [vmem:[%s242 + $0x64] sm:$0xff]
      %v2800 = vld [vmem:[%s242 + $0x6c] sm:$0xff]
      %v2801 = vld [vmem:[%s242 + $0x74] sm:$0xff]
      %v2802 = vld [vmem:[%s242 + $0x7c] sm:$0xff]
      %v2803 = vld [vmem:[%s242 + $0x84] sm:$0xff]
      %v2804 = vld [vmem:[%s242 + $0x8c] sm:$0xff]
      %v2805 = vld [vmem:[%s242 + $0x94] sm:$0xff]
      %v2806 = vld [vmem:[%s242 + $0x9c] sm:$0xff]
      %v2807 = vld [vmem:[%s242 + $0xa4] sm:$0xff]
      %v2808 = vld [vmem:[%s242 + $0xac] sm:$0xff]
      %v2809 = vld [vmem:[%s242 + $0xb4] sm:$0xff]
      %v2810 = vld [vmem:[%s242 + $0xbc] sm:$0xff]
      %v2811 = vld [vmem:[%s242 + $0xc4] sm:$0xff]
      %v2812 = vld [vmem:[%s242 + $0xcc] sm:$0xff]
      %v2813 = vld [vmem:[%s242 + $0xd4] sm:$0xff]
      %v2814 = vld [vmem:[%s242 + $0xdc] sm:$0xff]
      %v2815 = vld [vmem:[%s242 + $0xe4] sm:$0xff]
      %v2816 = vld [vmem:[%s242 + $0xec] sm:$0xff]
      %v2817 = vld [vmem:[%s242 + $0xf4] sm:$0xff]
      %v2818 = vld [vmem:[%s242 + $0xfc] sm:$0xff]
      %v2819 = vld [vmem:[%s242 + $0x104] sm:$0xff]
      %v2820 = vld [vmem:[%s242 + $0x10c] sm:$0xff]
      %v2821 = vld [vmem:[%s242 + $0x114] sm:$0xff]
      %v2822 = vld [vmem:[%s242 + $0x11c] sm:$0xff]
      %v2823 = vld [vmem:[%s242 + $0x124] sm:$0xff]
      %v2824 = vld [vmem:[%s242 + $0x12c] sm:$0xff]
      %v2825 = vld [vmem:[%s242 + $0x134] sm:$0xff]
      %v2826 = vld [vmem:[%s242 + $0x13c] sm:$0xff]
      %s2827 = scalar_lea.vmem %s2, 240
      %v2828 = vld [vmem:[%s2827] sm:$0xff]
      %v2829 = vld [vmem:[%s2827 + $0x8] sm:$0xff]
      %v2830 = vld [vmem:[%s2827 + $0x10] sm:$0xff]
      %v2831 = vld [vmem:[%s2827 + $0x18] sm:$0xff]
      %v2832 = vld [vmem:[%s2827 + $0x20] sm:$0xf]
      %v2834 = vsel %vm341, %v2791, 0
      %v2837 = vsel %vm341, %v2792, 0
      %v2840 = vsel %vm341, %v2793, 0
      %v2843 = vsel %vm341, %v2794, 0
      %v2846 = vsel %vm341, %v2795, 0
      %v2849 = vsel %vm341, %v2796, 0
      %v2852 = vsel %vm341, %v2797, 0
      %v2855 = vsel %vm341, %v2798, 0
      %v2858 = vsel %vm341, %v2799, 0
      %v2861 = vsel %vm341, %v2800, 0
      %v2864 = vsel %vm341, %v2801, 0
      %v2867 = vsel %vm341, %v2802, 0
      %v2870 = vsel %vm341, %v2803, 0
      %v2873 = vsel %vm341, %v2804, 0
      %v2876 = vsel %vm341, %v2805, 0
      %v2879 = vsel %vm341, %v2806, 0
      %v2882 = vsel %vm341, %v2807, 0
      %v2885 = vsel %vm341, %v2808, 0
      %v2888 = vsel %vm341, %v2809, 0
      %v2891 = vsel %vm341, %v2810, 0
      %v2894 = vsel %vm341, %v2811, 0
      %v2897 = vsel %vm341, %v2812, 0
      %v2900 = vsel %vm341, %v2813, 0
      %v2903 = vsel %vm341, %v2814, 0
      %v2906 = vsel %vm341, %v2815, 0
      %v2909 = vsel %vm341, %v2816, 0
      %v2912 = vsel %vm341, %v2817, 0
      %v2915 = vsel %vm341, %v2818, 0
      %v2918 = vsel %vm341, %v2819, 0
      %v2921 = vsel %vm341, %v2820, 0
      %v2924 = vsel %vm341, %v2821, 0
      %v2927 = vsel %vm341, %v2822, 0
      %v2930 = vsel %vm341, %v2823, 0
      %v2933 = vsel %vm341, %v2824, 0
      %v2936 = vsel %vm341, %v2825, 0
      %v2939 = vsel %vm341, %v2826, 0
      %v2942 = vsel %vm450, %v2832, 0
      %2944 = vmatprep.subr.mxu0 0.0
      %2945 = vmatpush1.msra.mxu0 %v2828
      %2946 = vmatprep.subr.mxu0 0.0
      %2947 = vmatpush1.msra.mxu0 %v2829
      %2948 = vmatprep.subr.mxu0 0.0
      %2949 = vmatpush1.msra.mxu0 %v2830
      %2950 = vmatprep.subr.mxu0 0.0
      %2951 = vmatpush1.msra.mxu0 %v2831
      %2952 = vmatprep.subr.mxu0 0.0
      %2953 = vmatpush1.msra.mxu0 %v2942
      %2954 = vmatprep.subr.mxu0 0.0
      %2955 = vmatpush1.msra.mxu0 0.0
      %2956 = vmatprep.subr.mxu0 0.0
      %2957 = vmatpush1.msra.mxu0 0.0
      %2958 = vmatprep.subr.mxu0 0.0
      %2959 = vmatpush1.msra.mxu0 0.0
      %2960 = vmatprep.subr.mxu0 0.0
      %2961 = vmatpush1.msra.mxu0 0.0
      %2962 = vmatprep.subr.mxu0 0.0
      %2963 = vmatpush1.msra.mxu0 0.0
      %2964 = vmatprep.subr.mxu0 0.0
      %2965 = vmatpush1.msra.mxu0 0.0
      %2966 = vmatprep.subr.mxu0 0.0
      %2967 = vmatpush1.msra.mxu0 0.0
      %2968 = vmatprep.subr.mxu0 0.0
      %2969 = vmatpush1.msra.mxu0 0.0
      %2970 = vmatprep.subr.mxu0 0.0
      %2971 = vmatpush1.msra.mxu0 0.0
      %2972 = vmatprep.subr.mxu0 0.0
      %2973 = vmatpush1.msra.mxu0 0.0
      %2974 = vmatprep.subr.mxu0 0.0
      %2975 = vmatpush1.msra.mxu0 0.0
      %2976 = vmatprep.subr.mxu0 0.0
      %2977 = vmatpush1.msra.mxu0 0.0
      %2978 = vmatprep.subr.mxu0 0.0
      %2979 = vmatpush1.msra.mxu0 0.0
      %2980 = vmatprep.subr.mxu0 0.0
      %2981 = vmatpush1.msra.mxu0 0.0
      %2982 = vmatprep.subr.mxu0 0.0
      %2983 = vmatpush1.msra.mxu0 0.0
      %2984 = vmatprep.subr.mxu0 0.0
      %2985 = vmatpush1.msra.mxu0 0.0
      %2986 = vmatprep.subr.mxu0 0.0
      %2987 = vmatpush1.msra.mxu0 0.0
      %2988 = vmatprep.subr.mxu0 0.0
      %2989 = vmatpush1.msra.mxu0 0.0
      %2990 = vmatprep.subr.mxu0 0.0
      %2991 = vmatpush1.msra.mxu0 0.0
      %2992 = vmatprep.subr.mxu0 0.0
      %2993 = vmatpush1.msra.mxu0 0.0
      %2994 = vmatprep.subr.mxu0 0.0
      %2995 = vmatpush1.msra.mxu0 0.0
      %2996 = vmatprep.subr.mxu0 0.0
      %2997 = vmatpush1.msra.mxu0 0.0
      %2998 = vmatprep.subr.mxu0 0.0
      %2999 = vmatpush1.msra.mxu0 0.0
      %3000 = vmatprep.subr.mxu0 0.0
      %3001 = vmatpush1.msra.mxu0 0.0
      %3002 = vmatprep.subr.mxu0 0.0
      %3003 = vmatpush1.msra.mxu0 0.0
      %3004 = vmatprep.subr.mxu0 0.0
      %3005 = vmatpush1.msra.mxu0 0.0
      %3006 = vmatprep.subr.mxu0 0.0
      %3007 = vmatpush1.msra.mxu0 0.0
      %3008 = vmatprep.mubr.f32.mxu0 0.0
      %3009 = vmatmul.mubr.f32.gmra.mrb[0].mxu0 %v2834
      %v3010 = vpop.f32.mrb[0].mxu0
      %v3011 = vadd.f32 0.0, %v3010
      %v3012 = vpop.f32.mrb[0].mxu0
      %3013 = vmatprep.mubr.f32.mxu0 0.0
      %3014 = vmatmul.mubr.f32.gmra.mrb[0].mxu0 %v2837
      %v3015 = vpop.f32.mrb[0].mxu0
      %v3016 = vadd.f32 0.0, %v3015
      %v3017 = vpop.f32.mrb[0].mxu0
      %3018 = vmatprep.mubr.f32.mxu0 0.0
      %3019 = vmatmul.mubr.f32.gmra.mrb[0].mxu0 %v2840
      %v3020 = vpop.f32.mrb[0].mxu0
      %v3021 = vadd.f32 0.0, %v3020
      %v3022 = vpop.f32.mrb[0].mxu0
      %3023 = vmatprep.mubr.f32.mxu0 0.0
      %3024 = vmatmul.mubr.f32.gmra.mrb[0].mxu0 %v2843
      %v3025 = vpop.f32.mrb[0].mxu0
      %v3026 = vadd.f32 0.0, %v3025
      %v3027 = vpop.f32.mrb[0].mxu0
      %3028 = vmatprep.mubr.f32.mxu0 0.0
      %3029 = vmatmul.mubr.f32.gmra.mrb[0].mxu0 %v2846
      %v3030 = vpop.f32.mrb[0].mxu0
      %v3031 = vadd.f32 0.0, %v3030
      %v3032 = vpop.f32.mrb[0].mxu0
      %3033 = vmatprep.mubr.f32.mxu0 0.0
      %3034 = vmatmul.mubr.f32.gmra.mrb[0].mxu0 %v2849
      %v3035 = vpop.f32.mrb[0].mxu0
      %v3036 = vadd.f32 0.0, %v3035
      %v3037 = vpop.f32.mrb[0].mxu0
      %3038 = vmatprep.mubr.f32.mxu0 0.0
      %3039 = vmatmul.mubr.f32.gmra.mrb[0].mxu0 %v2852
      %v3040 = vpop.f32.mrb[0].mxu0
      %v3041 = vadd.f32 0.0, %v3040
      %v3042 = vpop.f32.mrb[0].mxu0
      %3043 = vmatprep.mubr.f32.mxu0 0.0
      %3044 = vmatmul.mubr.f32.gmra.mrb[0].mxu0 %v2855
      %v3045 = vpop.f32.mrb[0].mxu0
      %v3046 = vadd.f32 0.0, %v3045
      %v3047 = vpop.f32.mrb[0].mxu0
      %3048 = vmatprep.mubr.f32.mxu0 0.0
      %3049 = vmatmul.mubr.f32.gmra.mrb[0].mxu0 %v2858
      %v3050 = vpop.f32.mrb[0].mxu0
      %v3051 = vadd.f32 0.0, %v3050
      %v3052 = vpop.f32.mrb[0].mxu0
      %3053 = vmatprep.mubr.f32.mxu0 0.0
      %3054 = vmatmul.mubr.f32.gmra.mrb[0].mxu0 %v2861
      %v3055 = vpop.f32.mrb[0].mxu0
      %v3056 = vadd.f32 0.0, %v3055
      %v3057 = vpop.f32.mrb[0].mxu0
      %3058 = vmatprep.mubr.f32.mxu0 0.0
      %3059 = vmatmul.mubr.f32.gmra.mrb[0].mxu0 %v2864
      %v3060 = vpop.f32.mrb[0].mxu0
      %v3061 = vadd.f32 0.0, %v3060
      %v3062 = vpop.f32.mrb[0].mxu0
      %3063 = vmatprep.mubr.f32.mxu0 0.0
      %3064 = vmatmul.mubr.f32.gmra.mrb[0].mxu0 %v2867
      %v3065 = vpop.f32.mrb[0].mxu0
      %v3066 = vadd.f32 0.0, %v3065
      %v3067 = vpop.f32.mrb[0].mxu0
      %3068 = vmatprep.mubr.f32.mxu0 0.0
      %3069 = vmatmul.mubr.f32.gmra.mrb[0].mxu0 %v2870
      %v3070 = vpop.f32.mrb[0].mxu0
      %v3071 = vadd.f32 0.0, %v3070
      %v3072 = vpop.f32.mrb[0].mxu0
      %3073 = vmatprep.mubr.f32.mxu0 0.0
      %3074 = vmatmul.mubr.f32.gmra.mrb[0].mxu0 %v2873
      %v3075 = vpop.f32.mrb[0].mxu0
      %v3076 = vadd.f32 0.0, %v3075
      %v3077 = vpop.f32.mrb[0].mxu0
      %3078 = vmatprep.mubr.f32.mxu0 0.0
      %3079 = vmatmul.mubr.f32.gmra.mrb[0].mxu0 %v2876
      %v3080 = vpop.f32.mrb[0].mxu0
      %v3081 = vadd.f32 0.0, %v3080
      %v3082 = vpop.f32.mrb[0].mxu0
      %3083 = vmatprep.mubr.f32.mxu0 0.0
      %3084 = vmatmul.mubr.f32.gmra.mrb[0].mxu0 %v2879
      %v3085 = vpop.f32.mrb[0].mxu0
      %v3086 = vadd.f32 0.0, %v3085
      %v3087 = vpop.f32.mrb[0].mxu0
      %3088 = vmatprep.mubr.f32.mxu0 0.0
      %3089 = vmatmul.mubr.f32.gmra.mrb[0].mxu0 %v2882
      %v3090 = vpop.f32.mrb[0].mxu0
      %v3091 = vadd.f32 0.0, %v3090
      %v3092 = vpop.f32.mrb[0].mxu0
      %3093 = vmatprep.mubr.f32.mxu0 0.0
      %3094 = vmatmul.mubr.f32.gmra.mrb[0].mxu0 %v2885
      %v3095 = vpop.f32.mrb[0].mxu0
      %v3096 = vadd.f32 0.0, %v3095
      %v3097 = vpop.f32.mrb[0].mxu0
      %3098 = vmatprep.mubr.f32.mxu0 0.0
      %3099 = vmatmul.mubr.f32.gmra.mrb[0].mxu0 %v2888
      %v3100 = vpop.f32.mrb[0].mxu0
      %v3101 = vadd.f32 0.0, %v3100
      %v3102 = vpop.f32.mrb[0].mxu0
      %3103 = vmatprep.mubr.f32.mxu0 0.0
      %3104 = vmatmul.mubr.f32.gmra.mrb[0].mxu0 %v2891
      %v3105 = vpop.f32.mrb[0].mxu0
      %v3106 = vadd.f32 0.0, %v3105
      %v3107 = vpop.f32.mrb[0].mxu0
      %3108 = vmatprep.mubr.f32.mxu0 0.0
      %3109 = vmatmul.mubr.f32.gmra.mrb[0].mxu0 %v2894
      %v3110 = vpop.f32.mrb[0].mxu0
      %v3111 = vadd.f32 0.0, %v3110
      %v3112 = vpop.f32.mrb[0].mxu0
      %3113 = vmatprep.mubr.f32.mxu0 0.0
      %3114 = vmatmul.mubr.f32.gmra.mrb[0].mxu0 %v2897
      %v3115 = vpop.f32.mrb[0].mxu0
      %v3116 = vadd.f32 0.0, %v3115
      %v3117 = vpop.f32.mrb[0].mxu0
      %3118 = vmatprep.mubr.f32.mxu0 0.0
      %3119 = vmatmul.mubr.f32.gmra.mrb[0].mxu0 %v2900
      %v3120 = vpop.f32.mrb[0].mxu0
      %v3121 = vadd.f32 0.0, %v3120
      %v3122 = vpop.f32.mrb[0].mxu0
      %3123 = vmatprep.mubr.f32.mxu0 0.0
      %3124 = vmatmul.mubr.f32.gmra.mrb[0].mxu0 %v2903
      %v3125 = vpop.f32.mrb[0].mxu0
      %v3126 = vadd.f32 0.0, %v3125
      %v3127 = vpop.f32.mrb[0].mxu0
      %3128 = vmatprep.mubr.f32.mxu0 0.0
      %3129 = vmatmul.mubr.f32.gmra.mrb[0].mxu0 %v2906
      %v3130 = vpop.f32.mrb[0].mxu0
      %v3131 = vadd.f32 0.0, %v3130
      %v3132 = vpop.f32.mrb[0].mxu0
      %3133 = vmatprep.mubr.f32.mxu0 0.0
      %3134 = vmatmul.mubr.f32.gmra.mrb[0].mxu0 %v2909
      %v3135 = vpop.f32.mrb[0].mxu0
      %v3136 = vadd.f32 0.0, %v3135
      %v3137 = vpop.f32.mrb[0].mxu0
      %3138 = vmatprep.mubr.f32.mxu0 0.0
      %3139 = vmatmul.mubr.f32.gmra.mrb[0].mxu0 %v2912
      %v3140 = vpop.f32.mrb[0].mxu0
      %v3141 = vadd.f32 0.0, %v3140
      %v3142 = vpop.f32.mrb[0].mxu0
      %3143 = vmatprep.mubr.f32.mxu0 0.0
      %3144 = vmatmul.mubr.f32.gmra.mrb[0].mxu0 %v2915
      %v3145 = vpop.f32.mrb[0].mxu0
      %v3146 = vadd.f32 0.0, %v3145
      %v3147 = vpop.f32.mrb[0].mxu0
      %3148 = vmatprep.mubr.f32.mxu0 0.0
      %3149 = vmatmul.mubr.f32.gmra.mrb[0].mxu0 %v2918
      %v3150 = vpop.f32.mrb[0].mxu0
      %v3151 = vadd.f32 0.0, %v3150
      %v3152 = vpop.f32.mrb[0].mxu0
      %3153 = vmatprep.mubr.f32.mxu0 0.0
      %3154 = vmatmul.mubr.f32.gmra.mrb[0].mxu0 %v2921
      %v3155 = vpop.f32.mrb[0].mxu0
      %v3156 = vadd.f32 0.0, %v3155
      %v3157 = vpop.f32.mrb[0].mxu0
      %3158 = vmatprep.mubr.f32.mxu0 0.0
      %3159 = vmatmul.mubr.f32.gmra.mrb[0].mxu0 %v2924
      %v3160 = vpop.f32.mrb[0].mxu0
      %v3161 = vadd.f32 0.0, %v3160
      %v3162 = vpop.f32.mrb[0].mxu0
      %3163 = vmatprep.mubr.f32.mxu0 0.0
      %3164 = vmatmul.mubr.f32.gmra.mrb[0].mxu0 %v2927
      %v3165 = vpop.f32.mrb[0].mxu0
      %v3166 = vadd.f32 0.0, %v3165
      %v3167 = vpop.f32.mrb[0].mxu0
      %3168 = vmatprep.mubr.f32.mxu0 0.0
      %3169 = vmatmul.mubr.f32.gmra.mrb[0].mxu0 %v2930
      %v3170 = vpop.f32.mrb[0].mxu0
      %v3171 = vadd.f32 0.0, %v3170
      %v3172 = vpop.f32.mrb[0].mxu0
      %3173 = vmatprep.mubr.f32.mxu0 0.0
      %3174 = vmatmul.mubr.f32.gmra.mrb[0].mxu0 %v2933
      %v3175 = vpop.f32.mrb[0].mxu0
      %v3176 = vadd.f32 0.0, %v3175
      %v3177 = vpop.f32.mrb[0].mxu0
      %3178 = vmatprep.mubr.f32.mxu0 0.0
      %3179 = vmatmul.mubr.f32.gmra.mrb[0].mxu0 %v2936
      %v3180 = vpop.f32.mrb[0].mxu0
      %v3181 = vadd.f32 0.0, %v3180
      %v3182 = vpop.f32.mrb[0].mxu0
      %3183 = vmatprep.mubr.f32.mxu0 0.0
      %3184 = vmatmul.mubr.f32.gmra.mrb[0].mxu0 %v2939
      %v3185 = vpop.f32.mrb[0].mxu0
      %v3186 = vadd.f32 0.0, %v3185
      %v3187 = vpop.f32.mrb[0].mxu0
      %3188 = vdwg.mxu0
      %v3189 = vadd.f32 %v2755, %v3011
      %v3190 = vadd.f32 %v2756, %v3016
      %v3191 = vadd.f32 %v2757, %v3021
      %v3192 = vadd.f32 %v2758, %v3026
      %v3193 = vadd.f32 %v2759, %v3031
      %v3194 = vadd.f32 %v2760, %v3036
      %v3195 = vadd.f32 %v2761, %v3041
      %v3196 = vadd.f32 %v2762, %v3046
      %v3197 = vadd.f32 %v2763, %v3051
      %v3198 = vadd.f32 %v2764, %v3056
      %v3199 = vadd.f32 %v2765, %v3061
      %v3200 = vadd.f32 %v2766, %v3066
      %v3201 = vadd.f32 %v2767, %v3071
      %v3202 = vadd.f32 %v2768, %v3076
      %v3203 = vadd.f32 %v2769, %v3081
      %v3204 = vadd.f32 %v2770, %v3086
      %v3205 = vadd.f32 %v2771, %v3091
      %v3206 = vadd.f32 %v2772, %v3096
      %v3207 = vadd.f32 %v2773, %v3101
      %v3208 = vadd.f32 %v2774, %v3106
      %v3209 = vadd.f32 %v2775, %v3111
      %v3210 = vadd.f32 %v2776, %v3116
      %v3211 = vadd.f32 %v2777, %v3121
      %v3212 = vadd.f32 %v2778, %v3126
      %v3213 = vadd.f32 %v2779, %v3131
      %v3214 = vadd.f32 %v2780, %v3136
      %v3215 = vadd.f32 %v2781, %v3141
      %v3216 = vadd.f32 %v2782, %v3146
      %v3217 = vadd.f32 %v2783, %v3151
      %v3218 = vadd.f32 %v2784, %v3156
      %v3219 = vadd.f32 %v2785, %v3161
      %v3220 = vadd.f32 %v2786, %v3166
      %v3221 = vadd.f32 %v2787, %v3171
      %v3222 = vadd.f32 %v2788, %v3176
      %v3223 = vadd.f32 %v2789, %v3181
      %v3224 = vadd.f32 %v2790, %v3186
      %v3225 = vld [vmem:[%s242 + $0x25] sm:$0xff]
      %v3226 = vld [vmem:[%s242 + $0x2d] sm:$0xff]
      %v3227 = vld [vmem:[%s242 + $0x35] sm:$0xff]
      %v3228 = vld [vmem:[%s242 + $0x3d] sm:$0xff]
      %v3229 = vld [vmem:[%s242 + $0x45] sm:$0xff]
      %v3230 = vld [vmem:[%s242 + $0x4d] sm:$0xff]
      %v3231 = vld [vmem:[%s242 + $0x55] sm:$0xff]
      %v3232 = vld [vmem:[%s242 + $0x5d] sm:$0xff]
      %v3233 = vld [vmem:[%s242 + $0x65] sm:$0xff]
      %v3234 = vld [vmem:[%s242 + $0x6d] sm:$0xff]
      %v3235 = vld [vmem:[%s242 + $0x75] sm:$0xff]
      %v3236 = vld [vmem:[%s242 + $0x7d] sm:$0xff]
      %v3237 = vld [vmem:[%s242 + $0x85] sm:$0xff]
      %v3238 = vld [vmem:[%s242 + $0x8d] sm:$0xff]
      %v3239 = vld [vmem:[%s242 + $0x95] sm:$0xff]
      %v3240 = vld [vmem:[%s242 + $0x9d] sm:$0xff]
      %v3241 = vld [vmem:[%s242 + $0xa5] sm:$0xff]
      %v3242 = vld [vmem:[%s242 + $0xad] sm:$0xff]
      %v3243 = vld [vmem:[%s242 + $0xb5] sm:$0xff]
      %v3244 = vld [vmem:[%s242 + $0xbd] sm:$0xff]
      %v3245 = vld [vmem:[%s242 + $0xc5] sm:$0xff]
      %v3246 = vld [vmem:[%s242 + $0xcd] sm:$0xff]
      %v3247 = vld [vmem:[%s242 + $0xd5] sm:$0xff]
      %v3248 = vld [vmem:[%s242 + $0xdd] sm:$0xff]
      %v3249 = vld [vmem:[%s242 + $0xe5] sm:$0xff]
      %v3250 = vld [vmem:[%s242 + $0xed] sm:$0xff]
      %v3251 = vld [vmem:[%s242 + $0xf5] sm:$0xff]
      %v3252 = vld [vmem:[%s242 + $0xfd] sm:$0xff]
      %v3253 = vld [vmem:[%s242 + $0x105] sm:$0xff]
      %v3254 = vld [vmem:[%s242 + $0x10d] sm:$0xff]
      %v3255 = vld [vmem:[%s242 + $0x115] sm:$0xff]
      %v3256 = vld [vmem:[%s242 + $0x11d] sm:$0xff]
      %v3257 = vld [vmem:[%s242 + $0x125] sm:$0xff]
      %v3258 = vld [vmem:[%s242 + $0x12d] sm:$0xff]
      %v3259 = vld [vmem:[%s242 + $0x135] sm:$0xff]
      %v3260 = vld [vmem:[%s242 + $0x13d] sm:$0xff]
      %s3261 = scalar_lea.vmem %s2, 280
      %v3262 = vld [vmem:[%s3261] sm:$0xff]
      %v3263 = vld [vmem:[%s3261 + $0x8] sm:$0xff]
      %v3264 = vld [vmem:[%s3261 + $0x10] sm:$0xff]
      %v3265 = vld [vmem:[%s3261 + $0x18] sm:$0xff]
      %v3266 = vld [vmem:[%s3261 + $0x20] sm:$0xf]
      %v3268 = vsel %vm341, %v3225, 0
      %v3271 = vsel %vm341, %v3226, 0
      %v3274 = vsel %vm341, %v3227, 0
      %v3277 = vsel %vm341, %v3228, 0
      %v3280 = vsel %vm341, %v3229, 0
      %v3283 = vsel %vm341, %v3230, 0
      %v3286 = vsel %vm341, %v3231, 0
      %v3289 = vsel %vm341, %v3232, 0
      %v3292 = vsel %vm341, %v3233, 0
      %v3295 = vsel %vm341, %v3234, 0
      %v3298 = vsel %vm341, %v3235, 0
      %v3301 = vsel %vm341, %v3236, 0
      %v3304 = vsel %vm341, %v3237, 0
      %v3307 = vsel %vm341, %v3238, 0
      %v3310 = vsel %vm341, %v3239, 0
      %v3313 = vsel %vm341, %v3240, 0
      %v3316 = vsel %vm341, %v3241, 0
      %v3319 = vsel %vm341, %v3242, 0
      %v3322 = vsel %vm341, %v3243, 0
      %v3325 = vsel %vm341, %v3244, 0
      %v3328 = vsel %vm341, %v3245, 0
      %v3331 = vsel %vm341, %v3246, 0
      %v3334 = vsel %vm341, %v3247, 0
      %v3337 = vsel %vm341, %v3248, 0
      %v3340 = vsel %vm341, %v3249, 0
      %v3343 = vsel %vm341, %v3250, 0
      %v3346 = vsel %vm341, %v3251, 0
      %v3349 = vsel %vm341, %v3252, 0
      %v3352 = vsel %vm341, %v3253, 0
      %v3355 = vsel %vm341, %v3254, 0
      %v3358 = vsel %vm341, %v3255, 0
      %v3361 = vsel %vm341, %v3256, 0
      %v3364 = vsel %vm341, %v3257, 0
      %v3367 = vsel %vm341, %v3258, 0
      %v3370 = vsel %vm341, %v3259, 0
      %v3373 = vsel %vm341, %v3260, 0
      %v3376 = vsel %vm450, %v3266, 0
      %3378 = vmatprep.subr.mxu0 0.0
      %3379 = vmatpush1.msra.mxu0 %v3262
      %3380 = vmatprep.subr.mxu0 0.0
      %3381 = vmatpush1.msra.mxu0 %v3263
      %3382 = vmatprep.subr.mxu0 0.0
      %3383 = vmatpush1.msra.mxu0 %v3264
      %3384 = vmatprep.subr.mxu0 0.0
      %3385 = vmatpush1.msra.mxu0 %v3265
      %3386 = vmatprep.subr.mxu0 0.0
      %3387 = vmatpush1.msra.mxu0 %v3376
      %3388 = vmatprep.subr.mxu0 0.0
      %3389 = vmatpush1.msra.mxu0 0.0
      %3390 = vmatprep.subr.mxu0 0.0
      %3391 = vmatpush1.msra.mxu0 0.0
      %3392 = vmatprep.subr.mxu0 0.0
      %3393 = vmatpush1.msra.mxu0 0.0
      %3394 = vmatprep.subr.mxu0 0.0
      %3395 = vmatpush1.msra.mxu0 0.0
      %3396 = vmatprep.subr.mxu0 0.0
      %3397 = vmatpush1.msra.mxu0 0.0
      %3398 = vmatprep.subr.mxu0 0.0
      %3399 = vmatpush1.msra.mxu0 0.0
      %3400 = vmatprep.subr.mxu0 0.0
      %3401 = vmatpush1.msra.mxu0 0.0
      %3402 = vmatprep.subr.mxu0 0.0
      %3403 = vmatpush1.msra.mxu0 0.0
      %3404 = vmatprep.subr.mxu0 0.0
      %3405 = vmatpush1.msra.mxu0 0.0
      %3406 = vmatprep.subr.mxu0 0.0
      %3407 = vmatpush1.msra.mxu0 0.0
      %3408 = vmatprep.subr.mxu0 0.0
      %3409 = vmatpush1.msra.mxu0 0.0
      %3410 = vmatprep.subr.mxu0 0.0
      %3411 = vmatpush1.msra.mxu0 0.0
      %3412 = vmatprep.subr.mxu0 0.0
      %3413 = vmatpush1.msra.mxu0 0.0
      %3414 = vmatprep.subr.mxu0 0.0
      %3415 = vmatpush1.msra.mxu0 0.0
      %3416 = vmatprep.subr.mxu0 0.0
      %3417 = vmatpush1.msra.mxu0 0.0
      %3418 = vmatprep.subr.mxu0 0.0
      %3419 = vmatpush1.msra.mxu0 0.0
      %3420 = vmatprep.subr.mxu0 0.0
      %3421 = vmatpush1.msra.mxu0 0.0
      %3422 = vmatprep.subr.mxu0 0.0
      %3423 = vmatpush1.msra.mxu0 0.0
      %3424 = vmatprep.subr.mxu0 0.0
      %3425 = vmatpush1.msra.mxu0 0.0
      %3426 = vmatprep.subr.mxu0 0.0
      %3427 = vmatpush1.msra.mxu0 0.0
      %3428 = vmatprep.subr.mxu0 0.0
      %3429 = vmatpush1.msra.mxu0 0.0
      %3430 = vmatprep.subr.mxu0 0.0
      %3431 = vmatpush1.msra.mxu0 0.0
      %3432 = vmatprep.subr.mxu0 0.0
      %3433 = vmatpush1.msra.mxu0 0.0
      %3434 = vmatprep.subr.mxu0 0.0
      %3435 = vmatpush1.msra.mxu0 0.0
      %3436 = vmatprep.subr.mxu0 0.0
      %3437 = vmatpush1.msra.mxu0 0.0
      %3438 = vmatprep.subr.mxu0 0.0
      %3439 = vmatpush1.msra.mxu0 0.0
      %3440 = vmatprep.subr.mxu0 0.0
      %3441 = vmatpush1.msra.mxu0 0.0
      %3442 = vmatprep.mubr.f32.mxu0 0.0
      %3443 = vmatmul.mubr.f32.gmra.mrb[0].mxu0 %v3268
      %v3444 = vpop.f32.mrb[0].mxu0
      %v3445 = vadd.f32 0.0, %v3444
      %v3446 = vpop.f32.mrb[0].mxu0
      %3447 = vmatprep.mubr.f32.mxu0 0.0
      %3448 = vmatmul.mubr.f32.gmra.mrb[0].mxu0 %v3271
      %v3449 = vpop.f32.mrb[0].mxu0
      %v3450 = vadd.f32 0.0, %v3449
      %v3451 = vpop.f32.mrb[0].mxu0
      %3452 = vmatprep.mubr.f32.mxu0 0.0
      %3453 = vmatmul.mubr.f32.gmra.mrb[0].mxu0 %v3274
      %v3454 = vpop.f32.mrb[0].mxu0
      %v3455 = vadd.f32 0.0, %v3454
      %v3456 = vpop.f32.mrb[0].mxu0
      %3457 = vmatprep.mubr.f32.mxu0 0.0
      %3458 = vmatmul.mubr.f32.gmra.mrb[0].mxu0 %v3277
      %v3459 = vpop.f32.mrb[0].mxu0
      %v3460 = vadd.f32 0.0, %v3459
      %v3461 = vpop.f32.mrb[0].mxu0
      %3462 = vmatprep.mubr.f32.mxu0 0.0
      %3463 = vmatmul.mubr.f32.gmra.mrb[0].mxu0 %v3280
      %v3464 = vpop.f32.mrb[0].mxu0
      %v3465 = vadd.f32 0.0, %v3464
      %v3466 = vpop.f32.mrb[0].mxu0
      %3467 = vmatprep.mubr.f32.mxu0 0.0
      %3468 = vmatmul.mubr.f32.gmra.mrb[0].mxu0 %v3283
      %v3469 = vpop.f32.mrb[0].mxu0
      %v3470 = vadd.f32 0.0, %v3469
      %v3471 = vpop.f32.mrb[0].mxu0
      %3472 = vmatprep.mubr.f32.mxu0 0.0
      %3473 = vmatmul.mubr.f32.gmra.mrb[0].mxu0 %v3286
      %v3474 = vpop.f32.mrb[0].mxu0
      %v3475 = vadd.f32 0.0, %v3474
      %v3476 = vpop.f32.mrb[0].mxu0
      %3477 = vmatprep.mubr.f32.mxu0 0.0
      %3478 = vmatmul.mubr.f32.gmra.mrb[0].mxu0 %v3289
      %v3479 = vpop.f32.mrb[0].mxu0
      %v3480 = vadd.f32 0.0, %v3479
      %v3481 = vpop.f32.mrb[0].mxu0
      %3482 = vmatprep.mubr.f32.mxu0 0.0
      %3483 = vmatmul.mubr.f32.gmra.mrb[0].mxu0 %v3292
      %v3484 = vpop.f32.mrb[0].mxu0
      %v3485 = vadd.f32 0.0, %v3484
      %v3486 = vpop.f32.mrb[0].mxu0
      %3487 = vmatprep.mubr.f32.mxu0 0.0
      %3488 = vmatmul.mubr.f32.gmra.mrb[0].mxu0 %v3295
      %v3489 = vpop.f32.mrb[0].mxu0
      %v3490 = vadd.f32 0.0, %v3489
      %v3491 = vpop.f32.mrb[0].mxu0
      %3492 = vmatprep.mubr.f32.mxu0 0.0
      %3493 = vmatmul.mubr.f32.gmra.mrb[0].mxu0 %v3298
      %v3494 = vpop.f32.mrb[0].mxu0
      %v3495 = vadd.f32 0.0, %v3494
      %v3496 = vpop.f32.mrb[0].mxu0
      %3497 = vmatprep.mubr.f32.mxu0 0.0
      %3498 = vmatmul.mubr.f32.gmra.mrb[0].mxu0 %v3301
      %v3499 = vpop.f32.mrb[0].mxu0
      %v3500 = vadd.f32 0.0, %v3499
      %v3501 = vpop.f32.mrb[0].mxu0
      %3502 = vmatprep.mubr.f32.mxu0 0.0
      %3503 = vmatmul.mubr.f32.gmra.mrb[0].mxu0 %v3304
      %v3504 = vpop.f32.mrb[0].mxu0
      %v3505 = vadd.f32 0.0, %v3504
      %v3506 = vpop.f32.mrb[0].mxu0
      %3507 = vmatprep.mubr.f32.mxu0 0.0
      %3508 = vmatmul.mubr.f32.gmra.mrb[0].mxu0 %v3307
      %v3509 = vpop.f32.mrb[0].mxu0
      %v3510 = vadd.f32 0.0, %v3509
      %v3511 = vpop.f32.mrb[0].mxu0
      %3512 = vmatprep.mubr.f32.mxu0 0.0
      %3513 = vmatmul.mubr.f32.gmra.mrb[0].mxu0 %v3310
      %v3514 = vpop.f32.mrb[0].mxu0
      %v3515 = vadd.f32 0.0, %v3514
      %v3516 = vpop.f32.mrb[0].mxu0
      %3517 = vmatprep.mubr.f32.mxu0 0.0
      %3518 = vmatmul.mubr.f32.gmra.mrb[0].mxu0 %v3313
      %v3519 = vpop.f32.mrb[0].mxu0
      %v3520 = vadd.f32 0.0, %v3519
      %v3521 = vpop.f32.mrb[0].mxu0
      %3522 = vmatprep.mubr.f32.mxu0 0.0
      %3523 = vmatmul.mubr.f32.gmra.mrb[0].mxu0 %v3316
      %v3524 = vpop.f32.mrb[0].mxu0
      %v3525 = vadd.f32 0.0, %v3524
      %v3526 = vpop.f32.mrb[0].mxu0
      %3527 = vmatprep.mubr.f32.mxu0 0.0
      %3528 = vmatmul.mubr.f32.gmra.mrb[0].mxu0 %v3319
      %v3529 = vpop.f32.mrb[0].mxu0
      %v3530 = vadd.f32 0.0, %v3529
      %v3531 = vpop.f32.mrb[0].mxu0
      %3532 = vmatprep.mubr.f32.mxu0 0.0
      %3533 = vmatmul.mubr.f32.gmra.mrb[0].mxu0 %v3322
      %v3534 = vpop.f32.mrb[0].mxu0
      %v3535 = vadd.f32 0.0, %v3534
      %v3536 = vpop.f32.mrb[0].mxu0
      %3537 = vmatprep.mubr.f32.mxu0 0.0
      %3538 = vmatmul.mubr.f32.gmra.mrb[0].mxu0 %v3325
      %v3539 = vpop.f32.mrb[0].mxu0
      %v3540 = vadd.f32 0.0, %v3539
      %v3541 = vpop.f32.mrb[0].mxu0
      %3542 = vmatprep.mubr.f32.mxu0 0.0
      %3543 = vmatmul.mubr.f32.gmra.mrb[0].mxu0 %v3328
      %v3544 = vpop.f32.mrb[0].mxu0
      %v3545 = vadd.f32 0.0, %v3544
      %v3546 = vpop.f32.mrb[0].mxu0
      %3547 = vmatprep.mubr.f32.mxu0 0.0
      %3548 = vmatmul.mubr.f32.gmra.mrb[0].mxu0 %v3331
      %v3549 = vpop.f32.mrb[0].mxu0
      %v3550 = vadd.f32 0.0, %v3549
      %v3551 = vpop.f32.mrb[0].mxu0
      %3552 = vmatprep.mubr.f32.mxu0 0.0
      %3553 = vmatmul.mubr.f32.gmra.mrb[0].mxu0 %v3334
      %v3554 = vpop.f32.mrb[0].mxu0
      %v3555 = vadd.f32 0.0, %v3554
      %v3556 = vpop.f32.mrb[0].mxu0
      %3557 = vmatprep.mubr.f32.mxu0 0.0
      %3558 = vmatmul.mubr.f32.gmra.mrb[0].mxu0 %v3337
      %v3559 = vpop.f32.mrb[0].mxu0
      %v3560 = vadd.f32 0.0, %v3559
      %v3561 = vpop.f32.mrb[0].mxu0
      %3562 = vmatprep.mubr.f32.mxu0 0.0
      %3563 = vmatmul.mubr.f32.gmra.mrb[0].mxu0 %v3340
      %v3564 = vpop.f32.mrb[0].mxu0
      %v3565 = vadd.f32 0.0, %v3564
      %v3566 = vpop.f32.mrb[0].mxu0
      %3567 = vmatprep.mubr.f32.mxu0 0.0
      %3568 = vmatmul.mubr.f32.gmra.mrb[0].mxu0 %v3343
      %v3569 = vpop.f32.mrb[0].mxu0
      %v3570 = vadd.f32 0.0, %v3569
      %v3571 = vpop.f32.mrb[0].mxu0
      %3572 = vmatprep.mubr.f32.mxu0 0.0
      %3573 = vmatmul.mubr.f32.gmra.mrb[0].mxu0 %v3346
      %v3574 = vpop.f32.mrb[0].mxu0
      %v3575 = vadd.f32 0.0, %v3574
      %v3576 = vpop.f32.mrb[0].mxu0
      %3577 = vmatprep.mubr.f32.mxu0 0.0
      %3578 = vmatmul.mubr.f32.gmra.mrb[0].mxu0 %v3349
      %v3579 = vpop.f32.mrb[0].mxu0
      %v3580 = vadd.f32 0.0, %v3579
      %v3581 = vpop.f32.mrb[0].mxu0
      %3582 = vmatprep.mubr.f32.mxu0 0.0
      %3583 = vmatmul.mubr.f32.gmra.mrb[0].mxu0 %v3352
      %v3584 = vpop.f32.mrb[0].mxu0
      %v3585 = vadd.f32 0.0, %v3584
      %v3586 = vpop.f32.mrb[0].mxu0
      %3587 = vmatprep.mubr.f32.mxu0 0.0
      %3588 = vmatmul.mubr.f32.gmra.mrb[0].mxu0 %v3355
      %v3589 = vpop.f32.mrb[0].mxu0
      %v3590 = vadd.f32 0.0, %v3589
      %v3591 = vpop.f32.mrb[0].mxu0
      %3592 = vmatprep.mubr.f32.mxu0 0.0
      %3593 = vmatmul.mubr.f32.gmra.mrb[0].mxu0 %v3358
      %v3594 = vpop.f32.mrb[0].mxu0
      %v3595 = vadd.f32 0.0, %v3594
      %v3596 = vpop.f32.mrb[0].mxu0
      %3597 = vmatprep.mubr.f32.mxu0 0.0
      %3598 = vmatmul.mubr.f32.gmra.mrb[0].mxu0 %v3361
      %v3599 = vpop.f32.mrb[0].mxu0
      %v3600 = vadd.f32 0.0, %v3599
      %v3601 = vpop.f32.mrb[0].mxu0
      %3602 = vmatprep.mubr.f32.mxu0 0.0
      %3603 = vmatmul.mubr.f32.gmra.mrb[0].mxu0 %v3364
      %v3604 = vpop.f32.mrb[0].mxu0
      %v3605 = vadd.f32 0.0, %v3604
      %v3606 = vpop.f32.mrb[0].mxu0
      %3607 = vmatprep.mubr.f32.mxu0 0.0
      %3608 = vmatmul.mubr.f32.gmra.mrb[0].mxu0 %v3367
      %v3609 = vpop.f32.mrb[0].mxu0
      %v3610 = vadd.f32 0.0, %v3609
      %v3611 = vpop.f32.mrb[0].mxu0
      %3612 = vmatprep.mubr.f32.mxu0 0.0
      %3613 = vmatmul.mubr.f32.gmra.mrb[0].mxu0 %v3370
      %v3614 = vpop.f32.mrb[0].mxu0
      %v3615 = vadd.f32 0.0, %v3614
      %v3616 = vpop.f32.mrb[0].mxu0
      %3617 = vmatprep.mubr.f32.mxu0 0.0
      %3618 = vmatmul.mubr.f32.gmra.mrb[0].mxu0 %v3373
      %v3619 = vpop.f32.mrb[0].mxu0
      %v3620 = vadd.f32 0.0, %v3619
      %v3621 = vpop.f32.mrb[0].mxu0
      %3622 = vdwg.mxu0
      %v3623 = vadd.f32 %v3189, %v3445
      %v3624 = vadd.f32 %v3190, %v3450
      %v3625 = vadd.f32 %v3191, %v3455
      %v3626 = vadd.f32 %v3192, %v3460
      %v3627 = vadd.f32 %v3193, %v3465
      %v3628 = vadd.f32 %v3194, %v3470
      %v3629 = vadd.f32 %v3195, %v3475
      %v3630 = vadd.f32 %v3196, %v3480
      %v3631 = vadd.f32 %v3197, %v3485
      %v3632 = vadd.f32 %v3198, %v3490
      %v3633 = vadd.f32 %v3199, %v3495
      %v3634 = vadd.f32 %v3200, %v3500
      %v3635 = vadd.f32 %v3201, %v3505
      %v3636 = vadd.f32 %v3202, %v3510
      %v3637 = vadd.f32 %v3203, %v3515
      %v3638 = vadd.f32 %v3204, %v3520
      %v3639 = vadd.f32 %v3205, %v3525
      %v3640 = vadd.f32 %v3206, %v3530
      %v3641 = vadd.f32 %v3207, %v3535
      %v3642 = vadd.f32 %v3208, %v3540
      %v3643 = vadd.f32 %v3209, %v3545
      %v3644 = vadd.f32 %v3210, %v3550
      %v3645 = vadd.f32 %v3211, %v3555
      %v3646 = vadd.f32 %v3212, %v3560
      %v3647 = vadd.f32 %v3213, %v3565
      %v3648 = vadd.f32 %v3214, %v3570
      %v3649 = vadd.f32 %v3215, %v3575
      %v3650 = vadd.f32 %v3216, %v3580
      %v3651 = vadd.f32 %v3217, %v3585
      %v3652 = vadd.f32 %v3218, %v3590
      %v3653 = vadd.f32 %v3219, %v3595
      %v3654 = vadd.f32 %v3220, %v3600
      %v3655 = vadd.f32 %v3221, %v3605
      %v3656 = vadd.f32 %v3222, %v3610
      %v3657 = vadd.f32 %v3223, %v3615
      %v3658 = vadd.f32 %v3224, %v3620
      %v3659 = vld [vmem:[%s242 + $0x26] sm:$0xff]
      %v3660 = vld [vmem:[%s242 + $0x2e] sm:$0xff]
      %v3661 = vld [vmem:[%s242 + $0x36] sm:$0xff]
      %v3662 = vld [vmem:[%s242 + $0x3e] sm:$0xff]
      %v3663 = vld [vmem:[%s242 + $0x46] sm:$0xff]
      %v3664 = vld [vmem:[%s242 + $0x4e] sm:$0xff]
      %v3665 = vld [vmem:[%s242 + $0x56] sm:$0xff]
      %v3666 = vld [vmem:[%s242 + $0x5e] sm:$0xff]
      %v3667 = vld [vmem:[%s242 + $0x66] sm:$0xff]
      %v3668 = vld [vmem:[%s242 + $0x6e] sm:$0xff]
      %v3669 = vld [vmem:[%s242 + $0x76] sm:$0xff]
      %v3670 = vld [vmem:[%s242 + $0x7e] sm:$0xff]
      %v3671 = vld [vmem:[%s242 + $0x86] sm:$0xff]
      %v3672 = vld [vmem:[%s242 + $0x8e] sm:$0xff]
      %v3673 = vld [vmem:[%s242 + $0x96] sm:$0xff]
      %v3674 = vld [vmem:[%s242 + $0x9e] sm:$0xff]
      %v3675 = vld [vmem:[%s242 + $0xa6] sm:$0xff]
      %v3676 = vld [vmem:[%s242 + $0xae] sm:$0xff]
      %v3677 = vld [vmem:[%s242 + $0xb6] sm:$0xff]
      %v3678 = vld [vmem:[%s242 + $0xbe] sm:$0xff]
      %v3679 = vld [vmem:[%s242 + $0xc6] sm:$0xff]
      %v3680 = vld [vmem:[%s242 + $0xce] sm:$0xff]
      %v3681 = vld [vmem:[%s242 + $0xd6] sm:$0xff]
      %v3682 = vld [vmem:[%s242 + $0xde] sm:$0xff]
      %v3683 = vld [vmem:[%s242 + $0xe6] sm:$0xff]
      %v3684 = vld [vmem:[%s242 + $0xee] sm:$0xff]
      %v3685 = vld [vmem:[%s242 + $0xf6] sm:$0xff]
      %v3686 = vld [vmem:[%s242 + $0xfe] sm:$0xff]
      %v3687 = vld [vmem:[%s242 + $0x106] sm:$0xff]
      %v3688 = vld [vmem:[%s242 + $0x10e] sm:$0xff]
      %v3689 = vld [vmem:[%s242 + $0x116] sm:$0xff]
      %v3690 = vld [vmem:[%s242 + $0x11e] sm:$0xff]
      %v3691 = vld [vmem:[%s242 + $0x126] sm:$0xff]
      %v3692 = vld [vmem:[%s242 + $0x12e] sm:$0xff]
      %v3693 = vld [vmem:[%s242 + $0x136] sm:$0xff]
      %v3694 = vld [vmem:[%s242 + $0x13e] sm:$0xff]
      %s3695 = scalar_lea.vmem %s2, 320
      %v3696 = vld [vmem:[%s3695] sm:$0xff]
      %v3697 = vld [vmem:[%s3695 + $0x8] sm:$0xff]
      %v3698 = vld [vmem:[%s3695 + $0x10] sm:$0xff]
      %v3699 = vld [vmem:[%s3695 + $0x18] sm:$0xff]
      %v3700 = vld [vmem:[%s3695 + $0x20] sm:$0xf]
      %v3702 = vsel %vm341, %v3659, 0
      %v3705 = vsel %vm341, %v3660, 0
      %v3708 = vsel %vm341, %v3661, 0
      %v3711 = vsel %vm341, %v3662, 0
      %v3714 = vsel %vm341, %v3663, 0
      %v3717 = vsel %vm341, %v3664, 0
      %v3720 = vsel %vm341, %v3665, 0
      %v3723 = vsel %vm341, %v3666, 0
      %v3726 = vsel %vm341, %v3667, 0
      %v3729 = vsel %vm341, %v3668, 0
      %v3732 = vsel %vm341, %v3669, 0
      %v3735 = vsel %vm341, %v3670, 0
      %v3738 = vsel %vm341, %v3671, 0
      %v3741 = vsel %vm341, %v3672, 0
      %v3744 = vsel %vm341, %v3673, 0
      %v3747 = vsel %vm341, %v3674, 0
      %v3750 = vsel %vm341, %v3675, 0
      %v3753 = vsel %vm341, %v3676, 0
      %v3756 = vsel %vm341, %v3677, 0
      %v3759 = vsel %vm341, %v3678, 0
      %v3762 = vsel %vm341, %v3679, 0
      %v3765 = vsel %vm341, %v3680, 0
      %v3768 = vsel %vm341, %v3681, 0
      %v3771 = vsel %vm341, %v3682, 0
      %v3774 = vsel %vm341, %v3683, 0
      %v3777 = vsel %vm341, %v3684, 0
      %v3780 = vsel %vm341, %v3685, 0
      %v3783 = vsel %vm341, %v3686, 0
      %v3786 = vsel %vm341, %v3687, 0
      %v3789 = vsel %vm341, %v3688, 0
      %v3792 = vsel %vm341, %v3689, 0
      %v3795 = vsel %vm341, %v3690, 0
      %v3798 = vsel %vm341, %v3691, 0
      %v3801 = vsel %vm341, %v3692, 0
      %v3804 = vsel %vm341, %v3693, 0
      %v3807 = vsel %vm341, %v3694, 0
      %v3810 = vsel %vm450, %v3700, 0
      %3812 = vmatprep.subr.mxu0 0.0
      %3813 = vmatpush1.msra.mxu0 %v3696
      %3814 = vmatprep.subr.mxu0 0.0
      %3815 = vmatpush1.msra.mxu0 %v3697
      %3816 = vmatprep.subr.mxu0 0.0
      %3817 = vmatpush1.msra.mxu0 %v3698
      %3818 = vmatprep.subr.mxu0 0.0
      %3819 = vmatpush1.msra.mxu0 %v3699
      %3820 = vmatprep.subr.mxu0 0.0
      %3821 = vmatpush1.msra.mxu0 %v3810
      %3822 = vmatprep.subr.mxu0 0.0
      %3823 = vmatpush1.msra.mxu0 0.0
      %3824 = vmatprep.subr.mxu0 0.0
      %3825 = vmatpush1.msra.mxu0 0.0
      %3826 = vmatprep.subr.mxu0 0.0
      %3827 = vmatpush1.msra.mxu0 0.0
      %3828 = vmatprep.subr.mxu0 0.0
      %3829 = vmatpush1.msra.mxu0 0.0
      %3830 = vmatprep.subr.mxu0 0.0
      %3831 = vmatpush1.msra.mxu0 0.0
      %3832 = vmatprep.subr.mxu0 0.0
      %3833 = vmatpush1.msra.mxu0 0.0
      %3834 = vmatprep.subr.mxu0 0.0
      %3835 = vmatpush1.msra.mxu0 0.0
      %3836 = vmatprep.subr.mxu0 0.0
      %3837 = vmatpush1.msra.mxu0 0.0
      %3838 = vmatprep.subr.mxu0 0.0
      %3839 = vmatpush1.msra.mxu0 0.0
      %3840 = vmatprep.subr.mxu0 0.0
      %3841 = vmatpush1.msra.mxu0 0.0
      %3842 = vmatprep.subr.mxu0 0.0
      %3843 = vmatpush1.msra.mxu0 0.0
      %3844 = vmatprep.subr.mxu0 0.0
      %3845 = vmatpush1.msra.mxu0 0.0
      %3846 = vmatprep.subr.mxu0 0.0
      %3847 = vmatpush1.msra.mxu0 0.0
      %3848 = vmatprep.subr.mxu0 0.0
      %3849 = vmatpush1.msra.mxu0 0.0
      %3850 = vmatprep.subr.mxu0 0.0
      %3851 = vmatpush1.msra.mxu0 0.0
      %3852 = vmatprep.subr.mxu0 0.0
      %3853 = vmatpush1.msra.mxu0 0.0
      %3854 = vmatprep.subr.mxu0 0.0
      %3855 = vmatpush1.msra.mxu0 0.0
      %3856 = vmatprep.subr.mxu0 0.0
      %3857 = vmatpush1.msra.mxu0 0.0
      %3858 = vmatprep.subr.mxu0 0.0
      %3859 = vmatpush1.msra.mxu0 0.0
      %3860 = vmatprep.subr.mxu0 0.0
      %3861 = vmatpush1.msra.mxu0 0.0
      %3862 = vmatprep.subr.mxu0 0.0
      %3863 = vmatpush1.msra.mxu0 0.0
      %3864 = vmatprep.subr.mxu0 0.0
      %3865 = vmatpush1.msra.mxu0 0.0
      %3866 = vmatprep.subr.mxu0 0.0
      %3867 = vmatpush1.msra.mxu0 0.0
      %3868 = vmatprep.subr.mxu0 0.0
      %3869 = vmatpush1.msra.mxu0 0.0
      %3870 = vmatprep.subr.mxu0 0.0
      %3871 = vmatpush1.msra.mxu0 0.0
      %3872 = vmatprep.subr.mxu0 0.0
      %3873 = vmatpush1.msra.mxu0 0.0
      %3874 = vmatprep.subr.mxu0 0.0
      %3875 = vmatpush1.msra.mxu0 0.0
      %3876 = vmatprep.mubr.f32.mxu0 0.0
      %3877 = vmatmul.mubr.f32.gmra.mrb[0].mxu0 %v3702
      %v3878 = vpop.f32.mrb[0].mxu0
      %v3879 = vadd.f32 0.0, %v3878
      %v3880 = vpop.f32.mrb[0].mxu0
      %3881 = vmatprep.mubr.f32.mxu0 0.0
      %3882 = vmatmul.mubr.f32.gmra.mrb[0].mxu0 %v3705
      %v3883 = vpop.f32.mrb[0].mxu0
      %v3884 = vadd.f32 0.0, %v3883
      %v3885 = vpop.f32.mrb[0].mxu0
      %3886 = vmatprep.mubr.f32.mxu0 0.0
      %3887 = vmatmul.mubr.f32.gmra.mrb[0].mxu0 %v3708
      %v3888 = vpop.f32.mrb[0].mxu0
      %v3889 = vadd.f32 0.0, %v3888
      %v3890 = vpop.f32.mrb[0].mxu0
      %3891 = vmatprep.mubr.f32.mxu0 0.0
      %3892 = vmatmul.mubr.f32.gmra.mrb[0].mxu0 %v3711
      %v3893 = vpop.f32.mrb[0].mxu0
      %v3894 = vadd.f32 0.0, %v3893
      %v3895 = vpop.f32.mrb[0].mxu0
      %3896 = vmatprep.mubr.f32.mxu0 0.0
      %3897 = vmatmul.mubr.f32.gmra.mrb[0].mxu0 %v3714
      %v3898 = vpop.f32.mrb[0].mxu0
      %v3899 = vadd.f32 0.0, %v3898
      %v3900 = vpop.f32.mrb[0].mxu0
      %3901 = vmatprep.mubr.f32.mxu0 0.0
      %3902 = vmatmul.mubr.f32.gmra.mrb[0].mxu0 %v3717
      %v3903 = vpop.f32.mrb[0].mxu0
      %v3904 = vadd.f32 0.0, %v3903
      %v3905 = vpop.f32.mrb[0].mxu0
      %3906 = vmatprep.mubr.f32.mxu0 0.0
      %3907 = vmatmul.mubr.f32.gmra.mrb[0].mxu0 %v3720
      %v3908 = vpop.f32.mrb[0].mxu0
      %v3909 = vadd.f32 0.0, %v3908
      %v3910 = vpop.f32.mrb[0].mxu0
      %3911 = vmatprep.mubr.f32.mxu0 0.0
      %3912 = vmatmul.mubr.f32.gmra.mrb[0].mxu0 %v3723
      %v3913 = vpop.f32.mrb[0].mxu0
      %v3914 = vadd.f32 0.0, %v3913
      %v3915 = vpop.f32.mrb[0].mxu0
      %3916 = vmatprep.mubr.f32.mxu0 0.0
      %3917 = vmatmul.mubr.f32.gmra.mrb[0].mxu0 %v3726
      %v3918 = vpop.f32.mrb[0].mxu0
      %v3919 = vadd.f32 0.0, %v3918
      %v3920 = vpop.f32.mrb[0].mxu0
      %3921 = vmatprep.mubr.f32.mxu0 0.0
      %3922 = vmatmul.mubr.f32.gmra.mrb[0].mxu0 %v3729
      %v3923 = vpop.f32.mrb[0].mxu0
      %v3924 = vadd.f32 0.0, %v3923
      %v3925 = vpop.f32.mrb[0].mxu0
      %3926 = vmatprep.mubr.f32.mxu0 0.0
      %3927 = vmatmul.mubr.f32.gmra.mrb[0].mxu0 %v3732
      %v3928 = vpop.f32.mrb[0].mxu0
      %v3929 = vadd.f32 0.0, %v3928
      %v3930 = vpop.f32.mrb[0].mxu0
      %3931 = vmatprep.mubr.f32.mxu0 0.0
      %3932 = vmatmul.mubr.f32.gmra.mrb[0].mxu0 %v3735
      %v3933 = vpop.f32.mrb[0].mxu0
      %v3934 = vadd.f32 0.0, %v3933
      %v3935 = vpop.f32.mrb[0].mxu0
      %3936 = vmatprep.mubr.f32.mxu0 0.0
      %3937 = vmatmul.mubr.f32.gmra.mrb[0].mxu0 %v3738
      %v3938 = vpop.f32.mrb[0].mxu0
      %v3939 = vadd.f32 0.0, %v3938
      %v3940 = vpop.f32.mrb[0].mxu0
      %3941 = vmatprep.mubr.f32.mxu0 0.0
      %3942 = vmatmul.mubr.f32.gmra.mrb[0].mxu0 %v3741
      %v3943 = vpop.f32.mrb[0].mxu0
      %v3944 = vadd.f32 0.0, %v3943
      %v3945 = vpop.f32.mrb[0].mxu0
      %3946 = vmatprep.mubr.f32.mxu0 0.0
      %3947 = vmatmul.mubr.f32.gmra.mrb[0].mxu0 %v3744
      %v3948 = vpop.f32.mrb[0].mxu0
      %v3949 = vadd.f32 0.0, %v3948
      %v3950 = vpop.f32.mrb[0].mxu0
      %3951 = vmatprep.mubr.f32.mxu0 0.0
      %3952 = vmatmul.mubr.f32.gmra.mrb[0].mxu0 %v3747
      %v3953 = vpop.f32.mrb[0].mxu0
      %v3954 = vadd.f32 0.0, %v3953
      %v3955 = vpop.f32.mrb[0].mxu0
      %3956 = vmatprep.mubr.f32.mxu0 0.0
      %3957 = vmatmul.mubr.f32.gmra.mrb[0].mxu0 %v3750
      %v3958 = vpop.f32.mrb[0].mxu0
      %v3959 = vadd.f32 0.0, %v3958
      %v3960 = vpop.f32.mrb[0].mxu0
      %3961 = vmatprep.mubr.f32.mxu0 0.0
      %3962 = vmatmul.mubr.f32.gmra.mrb[0].mxu0 %v3753
      %v3963 = vpop.f32.mrb[0].mxu0
      %v3964 = vadd.f32 0.0, %v3963
      %v3965 = vpop.f32.mrb[0].mxu0
      %3966 = vmatprep.mubr.f32.mxu0 0.0
      %3967 = vmatmul.mubr.f32.gmra.mrb[0].mxu0 %v3756
      %v3968 = vpop.f32.mrb[0].mxu0
      %v3969 = vadd.f32 0.0, %v3968
      %v3970 = vpop.f32.mrb[0].mxu0
      %3971 = vmatprep.mubr.f32.mxu0 0.0
      %3972 = vmatmul.mubr.f32.gmra.mrb[0].mxu0 %v3759
      %v3973 = vpop.f32.mrb[0].mxu0
      %v3974 = vadd.f32 0.0, %v3973
      %v3975 = vpop.f32.mrb[0].mxu0
      %3976 = vmatprep.mubr.f32.mxu0 0.0
      %3977 = vmatmul.mubr.f32.gmra.mrb[0].mxu0 %v3762
      %v3978 = vpop.f32.mrb[0].mxu0
      %v3979 = vadd.f32 0.0, %v3978
      %v3980 = vpop.f32.mrb[0].mxu0
      %3981 = vmatprep.mubr.f32.mxu0 0.0
      %3982 = vmatmul.mubr.f32.gmra.mrb[0].mxu0 %v3765
      %v3983 = vpop.f32.mrb[0].mxu0
      %v3984 = vadd.f32 0.0, %v3983
      %v3985 = vpop.f32.mrb[0].mxu0
      %3986 = vmatprep.mubr.f32.mxu0 0.0
      %3987 = vmatmul.mubr.f32.gmra.mrb[0].mxu0 %v3768
      %v3988 = vpop.f32.mrb[0].mxu0
      %v3989 = vadd.f32 0.0, %v3988
      %v3990 = vpop.f32.mrb[0].mxu0
      %3991 = vmatprep.mubr.f32.mxu0 0.0
      %3992 = vmatmul.mubr.f32.gmra.mrb[0].mxu0 %v3771
      %v3993 = vpop.f32.mrb[0].mxu0
      %v3994 = vadd.f32 0.0, %v3993
      %v3995 = vpop.f32.mrb[0].mxu0
      %3996 = vmatprep.mubr.f32.mxu0 0.0
      %3997 = vmatmul.mubr.f32.gmra.mrb[0].mxu0 %v3774
      %v3998 = vpop.f32.mrb[0].mxu0
      %v3999 = vadd.f32 0.0, %v3998
      %v4000 = vpop.f32.mrb[0].mxu0
      %4001 = vmatprep.mubr.f32.mxu0 0.0
      %4002 = vmatmul.mubr.f32.gmra.mrb[0].mxu0 %v3777
      %v4003 = vpop.f32.mrb[0].mxu0
      %v4004 = vadd.f32 0.0, %v4003
      %v4005 = vpop.f32.mrb[0].mxu0
      %4006 = vmatprep.mubr.f32.mxu0 0.0
      %4007 = vmatmul.mubr.f32.gmra.mrb[0].mxu0 %v3780
      %v4008 = vpop.f32.mrb[0].mxu0
      %v4009 = vadd.f32 0.0, %v4008
      %v4010 = vpop.f32.mrb[0].mxu0
      %4011 = vmatprep.mubr.f32.mxu0 0.0
      %4012 = vmatmul.mubr.f32.gmra.mrb[0].mxu0 %v3783
      %v4013 = vpop.f32.mrb[0].mxu0
      %v4014 = vadd.f32 0.0, %v4013
      %v4015 = vpop.f32.mrb[0].mxu0
      %4016 = vmatprep.mubr.f32.mxu0 0.0
      %4017 = vmatmul.mubr.f32.gmra.mrb[0].mxu0 %v3786
      %v4018 = vpop.f32.mrb[0].mxu0
      %v4019 = vadd.f32 0.0, %v4018
      %v4020 = vpop.f32.mrb[0].mxu0
      %4021 = vmatprep.mubr.f32.mxu0 0.0
      %4022 = vmatmul.mubr.f32.gmra.mrb[0].mxu0 %v3789
      %v4023 = vpop.f32.mrb[0].mxu0
      %v4024 = vadd.f32 0.0, %v4023
      %v4025 = vpop.f32.mrb[0].mxu0
      %4026 = vmatprep.mubr.f32.mxu0 0.0
      %4027 = vmatmul.mubr.f32.gmra.mrb[0].mxu0 %v3792
      %v4028 = vpop.f32.mrb[0].mxu0
      %v4029 = vadd.f32 0.0, %v4028
      %v4030 = vpop.f32.mrb[0].mxu0
      %4031 = vmatprep.mubr.f32.mxu0 0.0
      %4032 = vmatmul.mubr.f32.gmra.mrb[0].mxu0 %v3795
      %v4033 = vpop.f32.mrb[0].mxu0
      %v4034 = vadd.f32 0.0, %v4033
      %v4035 = vpop.f32.mrb[0].mxu0
      %4036 = vmatprep.mubr.f32.mxu0 0.0
      %4037 = vmatmul.mubr.f32.gmra.mrb[0].mxu0 %v3798
      %v4038 = vpop.f32.mrb[0].mxu0
      %v4039 = vadd.f32 0.0, %v4038
      %v4040 = vpop.f32.mrb[0].mxu0
      %4041 = vmatprep.mubr.f32.mxu0 0.0
      %4042 = vmatmul.mubr.f32.gmra.mrb[0].mxu0 %v3801
      %v4043 = vpop.f32.mrb[0].mxu0
      %v4044 = vadd.f32 0.0, %v4043
      %v4045 = vpop.f32.mrb[0].mxu0
      %4046 = vmatprep.mubr.f32.mxu0 0.0
      %4047 = vmatmul.mubr.f32.gmra.mrb[0].mxu0 %v3804
      %v4048 = vpop.f32.mrb[0].mxu0
      %v4049 = vadd.f32 0.0, %v4048
      %v4050 = vpop.f32.mrb[0].mxu0
      %4051 = vmatprep.mubr.f32.mxu0 0.0
      %4052 = vmatmul.mubr.f32.gmra.mrb[0].mxu0 %v3807
      %v4053 = vpop.f32.mrb[0].mxu0
      %v4054 = vadd.f32 0.0, %v4053
      %v4055 = vpop.f32.mrb[0].mxu0
      %4056 = vdwg.mxu0
      %v4057 = vadd.f32 %v3623, %v3879
      %v4058 = vadd.f32 %v3624, %v3884
      %v4059 = vadd.f32 %v3625, %v3889
      %v4060 = vadd.f32 %v3626, %v3894
      %v4061 = vadd.f32 %v3627, %v3899
      %v4062 = vadd.f32 %v3628, %v3904
      %v4063 = vadd.f32 %v3629, %v3909
      %v4064 = vadd.f32 %v3630, %v3914
      %v4065 = vadd.f32 %v3631, %v3919
      %v4066 = vadd.f32 %v3632, %v3924
      %v4067 = vadd.f32 %v3633, %v3929
      %v4068 = vadd.f32 %v3634, %v3934
      %v4069 = vadd.f32 %v3635, %v3939
      %v4070 = vadd.f32 %v3636, %v3944
      %v4071 = vadd.f32 %v3637, %v3949
      %v4072 = vadd.f32 %v3638, %v3954
      %v4073 = vadd.f32 %v3639, %v3959
      %v4074 = vadd.f32 %v3640, %v3964
      %v4075 = vadd.f32 %v3641, %v3969
      %v4076 = vadd.f32 %v3642, %v3974
      %v4077 = vadd.f32 %v3643, %v3979
      %v4078 = vadd.f32 %v3644, %v3984
      %v4079 = vadd.f32 %v3645, %v3989
      %v4080 = vadd.f32 %v3646, %v3994
      %v4081 = vadd.f32 %v3647, %v3999
      %v4082 = vadd.f32 %v3648, %v4004
      %v4083 = vadd.f32 %v3649, %v4009
      %v4084 = vadd.f32 %v3650, %v4014
      %v4085 = vadd.f32 %v3651, %v4019
      %v4086 = vadd.f32 %v3652, %v4024
      %v4087 = vadd.f32 %v3653, %v4029
      %v4088 = vadd.f32 %v3654, %v4034
      %v4089 = vadd.f32 %v3655, %v4039
      %v4090 = vadd.f32 %v3656, %v4044
      %v4091 = vadd.f32 %v3657, %v4049
      %v4092 = vadd.f32 %v3658, %v4054
      %v4093 = vld [vmem:[%s3] sm:$0x1]
      %v4095 = vlaneseq
      %v4096 = vshrl.u32 %v4095, 7
      %v4097 = vsub.s32 0, %v4096
      %v4098 = vrot.slane %v4093, %v4097
      %v4100 = vadd.f32 %v4057, %v4098
      %v4101 = vadd.f32 %v4058, %v4098
      %v4102 = vadd.f32 %v4059, %v4098
      %v4103 = vadd.f32 %v4060, %v4098
      %v4104 = vadd.f32 %v4061, %v4098
      %v4105 = vadd.f32 %v4062, %v4098
      %v4106 = vadd.f32 %v4063, %v4098
      %v4107 = vadd.f32 %v4064, %v4098
      %v4108 = vadd.f32 %v4065, %v4098
      %v4109 = vadd.f32 %v4066, %v4098
      %v4110 = vadd.f32 %v4067, %v4098
      %v4111 = vadd.f32 %v4068, %v4098
      %v4112 = vadd.f32 %v4069, %v4098
      %v4113 = vadd.f32 %v4070, %v4098
      %v4114 = vadd.f32 %v4071, %v4098
      %v4115 = vadd.f32 %v4072, %v4098
      %v4116 = vadd.f32 %v4073, %v4098
      %v4117 = vadd.f32 %v4074, %v4098
      %v4118 = vadd.f32 %v4075, %v4098
      %v4119 = vadd.f32 %v4076, %v4098
      %v4120 = vadd.f32 %v4077, %v4098
      %v4121 = vadd.f32 %v4078, %v4098
      %v4122 = vadd.f32 %v4079, %v4098
      %v4123 = vadd.f32 %v4080, %v4098
      %v4124 = vadd.f32 %v4081, %v4098
      %v4125 = vadd.f32 %v4082, %v4098
      %v4126 = vadd.f32 %v4083, %v4098
      %v4127 = vadd.f32 %v4084, %v4098
      %v4128 = vadd.f32 %v4085, %v4098
      %v4129 = vadd.f32 %v4086, %v4098
      %v4130 = vadd.f32 %v4087, %v4098
      %v4131 = vadd.f32 %v4088, %v4098
      %v4132 = vadd.f32 %v4089, %v4098
      %v4133 = vadd.f32 %v4090, %v4098
      %v4134 = vadd.f32 %v4091, %v4098
      %v4135 = vadd.f32 %v4092, %v4098
      %v4136 = vxor.u32 %v4100, 2147483648
      %v4137 = vxor.u32 %v4101, 2147483648
      %v4138 = vxor.u32 %v4102, 2147483648
      %v4139 = vxor.u32 %v4103, 2147483648
      %v4140 = vxor.u32 %v4104, 2147483648
      %v4141 = vxor.u32 %v4105, 2147483648
      %v4142 = vxor.u32 %v4106, 2147483648
      %v4143 = vxor.u32 %v4107, 2147483648
      %v4144 = vxor.u32 %v4108, 2147483648
      %v4145 = vxor.u32 %v4109, 2147483648
      %v4146 = vxor.u32 %v4110, 2147483648
      %v4147 = vxor.u32 %v4111, 2147483648
      %v4148 = vxor.u32 %v4112, 2147483648
      %v4149 = vxor.u32 %v4113, 2147483648
      %v4150 = vxor.u32 %v4114, 2147483648
      %v4151 = vxor.u32 %v4115, 2147483648
      %v4152 = vxor.u32 %v4116, 2147483648
      %v4153 = vxor.u32 %v4117, 2147483648
      %v4154 = vxor.u32 %v4118, 2147483648
      %v4155 = vxor.u32 %v4119, 2147483648
      %v4156 = vxor.u32 %v4120, 2147483648
      %v4157 = vxor.u32 %v4121, 2147483648
      %v4158 = vxor.u32 %v4122, 2147483648
      %v4159 = vxor.u32 %v4123, 2147483648
      %v4160 = vxor.u32 %v4124, 2147483648
      %v4161 = vxor.u32 %v4125, 2147483648
      %v4162 = vxor.u32 %v4126, 2147483648
      %v4163 = vxor.u32 %v4127, 2147483648
      %v4164 = vxor.u32 %v4128, 2147483648
      %v4165 = vxor.u32 %v4129, 2147483648
      %v4166 = vxor.u32 %v4130, 2147483648
      %v4167 = vxor.u32 %v4131, 2147483648
      %v4168 = vxor.u32 %v4132, 2147483648
      %v4169 = vxor.u32 %v4133, 2147483648
      %v4170 = vxor.u32 %v4134, 2147483648
      %v4171 = vxor.u32 %v4135, 2147483648
      %v4172 = vmul.f32 %v4136, 1.442695
      %v4173 = vpow.pop %v4172
      %v4174 = vmul.f32 %v4137, 1.442695
      %v4175 = vpow.pop %v4174
      %v4176 = vmul.f32 %v4138, 1.442695
      %v4177 = vpow.pop %v4176
      %v4178 = vmul.f32 %v4139, 1.442695
      %v4179 = vpow.pop %v4178
      %v4180 = vmul.f32 %v4140, 1.442695
      %v4181 = vpow.pop %v4180
      %v4182 = vmul.f32 %v4141, 1.442695
      %v4183 = vpow.pop %v4182
      %v4184 = vmul.f32 %v4142, 1.442695
      %v4185 = vpow.pop %v4184
      %v4186 = vmul.f32 %v4143, 1.442695
      %v4187 = vpow.pop %v4186
      %v4188 = vmul.f32 %v4144, 1.442695
      %v4189 = vpow.pop %v4188
      %v4190 = vmul.f32 %v4145, 1.442695
      %v4191 = vpow.pop %v4190
      %v4192 = vmul.f32 %v4146, 1.442695
      %v4193 = vpow.pop %v4192
      %v4194 = vmul.f32 %v4147, 1.442695
      %v4195 = vpow.pop %v4194
      %v4196 = vmul.f32 %v4148, 1.442695
      %v4197 = vpow.pop %v4196
      %v4198 = vmul.f32 %v4149, 1.442695
      %v4199 = vpow.pop %v4198
      %v4200 = vmul.f32 %v4150, 1.442695
      %v4201 = vpow.pop %v4200
      %v4202 = vmul.f32 %v4151, 1.442695
      %v4203 = vpow.pop %v4202
      %v4204 = vmul.f32 %v4152, 1.442695
      %v4205 = vpow.pop %v4204
      %v4206 = vmul.f32 %v4153, 1.442695
      %v4207 = vpow.pop %v4206
      %v4208 = vmul.f32 %v4154, 1.442695
      %v4209 = vpow.pop %v4208
      %v4210 = vmul.f32 %v4155, 1.442695
      %v4211 = vpow.pop %v4210
      %v4212 = vmul.f32 %v4156, 1.442695
      %v4213 = vpow.pop %v4212
      %v4214 = vmul.f32 %v4157, 1.442695
      %v4215 = vpow.pop %v4214
      %v4216 = vmul.f32 %v4158, 1.442695
      %v4217 = vpow.pop %v4216
      %v4218 = vmul.f32 %v4159, 1.442695
      %v4219 = vpow.pop %v4218
      %v4220 = vmul.f32 %v4160, 1.442695
      %v4221 = vpow.pop %v4220
      %v4222 = vmul.f32 %v4161, 1.442695
      %v4223 = vpow.pop %v4222
      %v4224 = vmul.f32 %v4162, 1.442695
      %v4225 = vpow.pop %v4224
      %v4226 = vmul.f32 %v4163, 1.442695
      %v4227 = vpow.pop %v4226
      %v4228 = vmul.f32 %v4164, 1.442695
      %v4229 = vpow.pop %v4228
      %v4230 = vmul.f32 %v4165, 1.442695
      %v4231 = vpow.pop %v4230
      %v4232 = vmul.f32 %v4166, 1.442695
      %v4233 = vpow.pop %v4232
      %v4234 = vmul.f32 %v4167, 1.442695
      %v4235 = vpow.pop %v4234
      %v4236 = vmul.f32 %v4168, 1.442695
      %v4237 = vpow.pop %v4236
      %v4238 = vmul.f32 %v4169, 1.442695
      %v4239 = vpow.pop %v4238
      %v4240 = vmul.f32 %v4170, 1.442695
      %v4241 = vpow.pop %v4240
      %v4242 = vmul.f32 %v4171, 1.442695
      %v4243 = vpow.pop %v4242
      %v4244 = vadd.f32 %v4173, 1.0
      %v4245 = vadd.f32 %v4175, 1.0
      %v4246 = vadd.f32 %v4177, 1.0
      %v4247 = vadd.f32 %v4179, 1.0
      %v4248 = vadd.f32 %v4181, 1.0
      %v4249 = vadd.f32 %v4183, 1.0
      %v4250 = vadd.f32 %v4185, 1.0
      %v4251 = vadd.f32 %v4187, 1.0
      %v4252 = vadd.f32 %v4189, 1.0
      %v4253 = vadd.f32 %v4191, 1.0
      %v4254 = vadd.f32 %v4193, 1.0
      %v4255 = vadd.f32 %v4195, 1.0
      %v4256 = vadd.f32 %v4197, 1.0
      %v4257 = vadd.f32 %v4199, 1.0
      %v4258 = vadd.f32 %v4201, 1.0
      %v4259 = vadd.f32 %v4203, 1.0
      %v4260 = vadd.f32 %v4205, 1.0
      %v4261 = vadd.f32 %v4207, 1.0
      %v4262 = vadd.f32 %v4209, 1.0
      %v4263 = vadd.f32 %v4211, 1.0
      %v4264 = vadd.f32 %v4213, 1.0
      %v4265 = vadd.f32 %v4215, 1.0
      %v4266 = vadd.f32 %v4217, 1.0
      %v4267 = vadd.f32 %v4219, 1.0
      %v4268 = vadd.f32 %v4221, 1.0
      %v4269 = vadd.f32 %v4223, 1.0
      %v4270 = vadd.f32 %v4225, 1.0
      %v4271 = vadd.f32 %v4227, 1.0
      %v4272 = vadd.f32 %v4229, 1.0
      %v4273 = vadd.f32 %v4231, 1.0
      %v4274 = vadd.f32 %v4233, 1.0
      %v4275 = vadd.f32 %v4235, 1.0
      %v4276 = vadd.f32 %v4237, 1.0
      %v4277 = vadd.f32 %v4239, 1.0
      %v4278 = vadd.f32 %v4241, 1.0
      %v4279 = vadd.f32 %v4243, 1.0
      %v4280 = vrcp.pop %v4244
      %v4281 = vmul.f32 1.0, %v4280
      %v4282 = vrcp.pop %v4245
      %v4283 = vmul.f32 1.0, %v4282
      %v4284 = vrcp.pop %v4246
      %v4285 = vmul.f32 1.0, %v4284
      %v4286 = vrcp.pop %v4247
      %v4287 = vmul.f32 1.0, %v4286
      %v4288 = vrcp.pop %v4248
      %v4289 = vmul.f32 1.0, %v4288
      %v4290 = vrcp.pop %v4249
      %v4291 = vmul.f32 1.0, %v4290
      %v4292 = vrcp.pop %v4250
      %v4293 = vmul.f32 1.0, %v4292
      %v4294 = vrcp.pop %v4251
      %v4295 = vmul.f32 1.0, %v4294
      %v4296 = vrcp.pop %v4252
      %v4297 = vmul.f32 1.0, %v4296
      %v4298 = vrcp.pop %v4253
      %v4299 = vmul.f32 1.0, %v4298
      %v4300 = vrcp.pop %v4254
      %v4301 = vmul.f32 1.0, %v4300
      %v4302 = vrcp.pop %v4255
      %v4303 = vmul.f32 1.0, %v4302
      %v4304 = vrcp.pop %v4256
      %v4305 = vmul.f32 1.0, %v4304
      %v4306 = vrcp.pop %v4257
      %v4307 = vmul.f32 1.0, %v4306
      %v4308 = vrcp.pop %v4258
      %v4309 = vmul.f32 1.0, %v4308
      %v4310 = vrcp.pop %v4259
      %v4311 = vmul.f32 1.0, %v4310
      %v4312 = vrcp.pop %v4260
      %v4313 = vmul.f32 1.0, %v4312
      %v4314 = vrcp.pop %v4261
      %v4315 = vmul.f32 1.0, %v4314
      %v4316 = vrcp.pop %v4262
      %v4317 = vmul.f32 1.0, %v4316
      %v4318 = vrcp.pop %v4263
      %v4319 = vmul.f32 1.0, %v4318
      %v4320 = vrcp.pop %v4264
      %v4321 = vmul.f32 1.0, %v4320
      %v4322 = vrcp.pop %v4265
      %v4323 = vmul.f32 1.0, %v4322
      %v4324 = vrcp.pop %v4266
      %v4325 = vmul.f32 1.0, %v4324
      %v4326 = vrcp.pop %v4267
      %v4327 = vmul.f32 1.0, %v4326
      %v4328 = vrcp.pop %v4268
      %v4329 = vmul.f32 1.0, %v4328
      %v4330 = vrcp.pop %v4269
      %v4331 = vmul.f32 1.0, %v4330
      %v4332 = vrcp.pop %v4270
      %v4333 = vmul.f32 1.0, %v4332
      %v4334 = vrcp.pop %v4271
      %v4335 = vmul.f32 1.0, %v4334
      %v4336 = vrcp.pop %v4272
      %v4337 = vmul.f32 1.0, %v4336
      %v4338 = vrcp.pop %v4273
      %v4339 = vmul.f32 1.0, %v4338
      %v4340 = vrcp.pop %v4274
      %v4341 = vmul.f32 1.0, %v4340
      %v4342 = vrcp.pop %v4275
      %v4343 = vmul.f32 1.0, %v4342
      %v4344 = vrcp.pop %v4276
      %v4345 = vmul.f32 1.0, %v4344
      %v4346 = vrcp.pop %v4277
      %v4347 = vmul.f32 1.0, %v4346
      %v4348 = vrcp.pop %v4278
      %v4349 = vmul.f32 1.0, %v4348
      %v4350 = vrcp.pop %v4279
      %v4351 = vmul.f32 1.0, %v4350
      %v4352 = vtanh.pop %v4100
      %v4353 = vtanh.pop %v4101
      %v4354 = vtanh.pop %v4102
      %v4355 = vtanh.pop %v4103
      %v4356 = vtanh.pop %v4104
      %v4357 = vtanh.pop %v4105
      %v4358 = vtanh.pop %v4106
      %v4359 = vtanh.pop %v4107
      %v4360 = vtanh.pop %v4108
      %v4361 = vtanh.pop %v4109
      %v4362 = vtanh.pop %v4110
      %v4363 = vtanh.pop %v4111
      %v4364 = vtanh.pop %v4112
      %v4365 = vtanh.pop %v4113
      %v4366 = vtanh.pop %v4114
      %v4367 = vtanh.pop %v4115
      %v4368 = vtanh.pop %v4116
      %v4369 = vtanh.pop %v4117
      %v4370 = vtanh.pop %v4118
      %v4371 = vtanh.pop %v4119
      %v4372 = vtanh.pop %v4120
      %v4373 = vtanh.pop %v4121
      %v4374 = vtanh.pop %v4122
      %v4375 = vtanh.pop %v4123
      %v4376 = vtanh.pop %v4124
      %v4377 = vtanh.pop %v4125
      %v4378 = vtanh.pop %v4126
      %v4379 = vtanh.pop %v4127
      %v4380 = vtanh.pop %v4128
      %v4381 = vtanh.pop %v4129
      %v4382 = vtanh.pop %v4130
      %v4383 = vtanh.pop %v4131
      %v4384 = vtanh.pop %v4132
      %v4385 = vtanh.pop %v4133
      %v4386 = vtanh.pop %v4134
      %v4387 = vtanh.pop %v4135
      %v4388 = vld [vmem:[%s247] sm:$0xff]
      %v4389 = vld [vmem:[%s247 + $0x8] sm:$0xff]
      %v4390 = vld [vmem:[%s247 + $0x10] sm:$0xff]
      %v4391 = vld [vmem:[%s247 + $0x18] sm:$0xff]
      %v4392 = vld [vmem:[%s247 + $0x20] sm:$0xff]
      %v4393 = vld [vmem:[%s247 + $0x28] sm:$0xff]
      %v4394 = vld [vmem:[%s247 + $0x30] sm:$0xff]
      %v4395 = vld [vmem:[%s247 + $0x38] sm:$0xff]
      %v4396 = vld [vmem:[%s247 + $0x40] sm:$0xff]
      %v4397 = vld [vmem:[%s247 + $0x48] sm:$0xff]
      %v4398 = vld [vmem:[%s247 + $0x50] sm:$0xff]
      %v4399 = vld [vmem:[%s247 + $0x58] sm:$0xff]
      %v4400 = vld [vmem:[%s247 + $0x60] sm:$0xff]
      %v4401 = vld [vmem:[%s247 + $0x68] sm:$0xff]
      %v4402 = vld [vmem:[%s247 + $0x70] sm:$0xff]
      %v4403 = vld [vmem:[%s247 + $0x78] sm:$0xff]
      %v4404 = vld [vmem:[%s247 + $0x80] sm:$0xff]
      %v4405 = vld [vmem:[%s247 + $0x88] sm:$0xff]
      %v4406 = vld [vmem:[%s247 + $0x90] sm:$0xff]
      %v4407 = vld [vmem:[%s247 + $0x98] sm:$0xff]
      %v4408 = vld [vmem:[%s247 + $0xa0] sm:$0xff]
      %v4409 = vld [vmem:[%s247 + $0xa8] sm:$0xff]
      %v4410 = vld [vmem:[%s247 + $0xb0] sm:$0xff]
      %v4411 = vld [vmem:[%s247 + $0xb8] sm:$0xff]
      %v4412 = vld [vmem:[%s247 + $0xc0] sm:$0xff]
      %v4413 = vld [vmem:[%s247 + $0xc8] sm:$0xff]
      %v4414 = vld [vmem:[%s247 + $0xd0] sm:$0xff]
      %v4415 = vld [vmem:[%s247 + $0xd8] sm:$0xff]
      %v4416 = vld [vmem:[%s247 + $0xe0] sm:$0xff]
      %v4417 = vld [vmem:[%s247 + $0xe8] sm:$0xff]
      %v4418 = vld [vmem:[%s247 + $0xf0] sm:$0xff]
      %v4419 = vld [vmem:[%s247 + $0xf8] sm:$0xff]
      %v4420 = vld [vmem:[%s247 + $0x100] sm:$0xff]
      %v4421 = vld [vmem:[%s247 + $0x108] sm:$0xff]
      %v4422 = vld [vmem:[%s247 + $0x110] sm:$0xff]
      %v4423 = vld [vmem:[%s247 + $0x118] sm:$0xff]
      %4460 = vrot.lane.b32.xlu0 %v4388, 32
      %v4461 = vpop.permute.xlu0 %4460
      %4462 = vrot.lane.b32.xlu0 %v4389, 32
      %v4463 = vpop.permute.xlu0 %4462
      %4464 = vrot.lane.b32.xlu0 %v4390, 32
      %v4465 = vpop.permute.xlu0 %4464
      %4466 = vrot.lane.b32.xlu0 %v4391, 32
      %v4467 = vpop.permute.xlu0 %4466
      %4468 = vrot.lane.b32.xlu0 %v4392, 32
      %v4469 = vpop.permute.xlu0 %4468
      %4470 = vrot.lane.b32.xlu0 %v4393, 32
      %v4471 = vpop.permute.xlu0 %4470
      %4472 = vrot.lane.b32.xlu0 %v4394, 32
      %v4473 = vpop.permute.xlu0 %4472
      %4474 = vrot.lane.b32.xlu0 %v4395, 32
      %v4475 = vpop.permute.xlu0 %4474
      %4476 = vrot.lane.b32.xlu0 %v4396, 32
      %v4477 = vpop.permute.xlu0 %4476
      %4478 = vrot.lane.b32.xlu0 %v4397, 32
      %v4479 = vpop.permute.xlu0 %4478
      %4480 = vrot.lane.b32.xlu0 %v4398, 32
      %v4481 = vpop.permute.xlu0 %4480
      %4482 = vrot.lane.b32.xlu0 %v4399, 32
      %v4483 = vpop.permute.xlu0 %4482
      %4484 = vrot.lane.b32.xlu0 %v4400, 32
      %v4485 = vpop.permute.xlu0 %4484
      %4486 = vrot.lane.b32.xlu0 %v4401, 32
      %v4487 = vpop.permute.xlu0 %4486
      %4488 = vrot.lane.b32.xlu0 %v4402, 32
      %v4489 = vpop.permute.xlu0 %4488
      %4490 = vrot.lane.b32.xlu0 %v4403, 32
      %v4491 = vpop.permute.xlu0 %4490
      %4492 = vrot.lane.b32.xlu0 %v4404, 32
      %v4493 = vpop.permute.xlu0 %4492
      %4494 = vrot.lane.b32.xlu0 %v4405, 32
      %v4495 = vpop.permute.xlu0 %4494
      %4496 = vrot.lane.b32.xlu0 %v4406, 32
      %v4497 = vpop.permute.xlu0 %4496
      %4498 = vrot.lane.b32.xlu0 %v4407, 32
      %v4499 = vpop.permute.xlu0 %4498
      %4500 = vrot.lane.b32.xlu0 %v4408, 32
      %v4501 = vpop.permute.xlu0 %4500
      %4502 = vrot.lane.b32.xlu0 %v4409, 32
      %v4503 = vpop.permute.xlu0 %4502
      %4504 = vrot.lane.b32.xlu0 %v4410, 32
      %v4505 = vpop.permute.xlu0 %4504
      %4506 = vrot.lane.b32.xlu0 %v4411, 32
      %v4507 = vpop.permute.xlu0 %4506
      %4508 = vrot.lane.b32.xlu0 %v4412, 32
      %v4509 = vpop.permute.xlu0 %4508
      %4510 = vrot.lane.b32.xlu0 %v4413, 32
      %v4511 = vpop.permute.xlu0 %4510
      %4512 = vrot.lane.b32.xlu0 %v4414, 32
      %v4513 = vpop.permute.xlu0 %4512
      %4514 = vrot.lane.b32.xlu0 %v4415, 32
      %v4515 = vpop.permute.xlu0 %4514
      %4516 = vrot.lane.b32.xlu0 %v4416, 32
      %v4517 = vpop.permute.xlu0 %4516
      %4518 = vrot.lane.b32.xlu0 %v4417, 32
      %v4519 = vpop.permute.xlu0 %4518
      %4520 = vrot.lane.b32.xlu0 %v4418, 32
      %v4521 = vpop.permute.xlu0 %4520
      %4522 = vrot.lane.b32.xlu0 %v4419, 32
      %v4523 = vpop.permute.xlu0 %4522
      %4524 = vrot.lane.b32.xlu0 %v4420, 32
      %v4525 = vpop.permute.xlu0 %4524
      %4526 = vrot.lane.b32.xlu0 %v4421, 32
      %v4527 = vpop.permute.xlu0 %4526
      %4528 = vrot.lane.b32.xlu0 %v4422, 32
      %v4529 = vpop.permute.xlu0 %4528
      %4530 = vrot.lane.b32.xlu0 %v4423, 32
      %v4531 = vpop.permute.xlu0 %4530
      %v4568 = vmul.f32 %v4281, %v4461
      %v4569 = vmul.f32 %v4283, %v4463
      %v4570 = vmul.f32 %v4285, %v4465
      %v4571 = vmul.f32 %v4287, %v4467
      %v4572 = vmul.f32 %v4289, %v4469
      %v4573 = vmul.f32 %v4291, %v4471
      %v4574 = vmul.f32 %v4293, %v4473
      %v4575 = vmul.f32 %v4295, %v4475
      %v4576 = vmul.f32 %v4297, %v4477
      %v4577 = vmul.f32 %v4299, %v4479
      %v4578 = vmul.f32 %v4301, %v4481
      %v4579 = vmul.f32 %v4303, %v4483
      %v4580 = vmul.f32 %v4305, %v4485
      %v4581 = vmul.f32 %v4307, %v4487
      %v4582 = vmul.f32 %v4309, %v4489
      %v4583 = vmul.f32 %v4311, %v4491
      %v4584 = vmul.f32 %v4313, %v4493
      %v4585 = vmul.f32 %v4315, %v4495
      %v4586 = vmul.f32 %v4317, %v4497
      %v4587 = vmul.f32 %v4319, %v4499
      %v4588 = vmul.f32 %v4321, %v4501
      %v4589 = vmul.f32 %v4323, %v4503
      %v4590 = vmul.f32 %v4325, %v4505
      %v4591 = vmul.f32 %v4327, %v4507
      %v4592 = vmul.f32 %v4329, %v4509
      %v4593 = vmul.f32 %v4331, %v4511
      %v4594 = vmul.f32 %v4333, %v4513
      %v4595 = vmul.f32 %v4335, %v4515
      %v4596 = vmul.f32 %v4337, %v4517
      %v4597 = vmul.f32 %v4339, %v4519
      %v4598 = vmul.f32 %v4341, %v4521
      %v4599 = vmul.f32 %v4343, %v4523
      %v4600 = vmul.f32 %v4345, %v4525
      %v4601 = vmul.f32 %v4347, %v4527
      %v4602 = vmul.f32 %v4349, %v4529
      %v4603 = vmul.f32 %v4351, %v4531
      %4640 = vrot.lane.b32.xlu0 %v4352, 64
      %v4641 = vpop.permute.xlu0 %4640
      %4642 = vrot.lane.b32.xlu0 %v4353, 64
      %v4643 = vpop.permute.xlu0 %4642
      %4644 = vrot.lane.b32.xlu0 %v4354, 64
      %v4645 = vpop.permute.xlu0 %4644
      %4646 = vrot.lane.b32.xlu0 %v4355, 64
      %v4647 = vpop.permute.xlu0 %4646
      %4648 = vrot.lane.b32.xlu0 %v4356, 64
      %v4649 = vpop.permute.xlu0 %4648
      %4650 = vrot.lane.b32.xlu0 %v4357, 64
      %v4651 = vpop.permute.xlu0 %4650
      %4652 = vrot.lane.b32.xlu0 %v4358, 64
      %v4653 = vpop.permute.xlu0 %4652
      %4654 = vrot.lane.b32.xlu0 %v4359, 64
      %v4655 = vpop.permute.xlu0 %4654
      %4656 = vrot.lane.b32.xlu0 %v4360, 64
      %v4657 = vpop.permute.xlu0 %4656
      %4658 = vrot.lane.b32.xlu0 %v4361, 64
      %v4659 = vpop.permute.xlu0 %4658
      %4660 = vrot.lane.b32.xlu0 %v4362, 64
      %v4661 = vpop.permute.xlu0 %4660
      %4662 = vrot.lane.b32.xlu0 %v4363, 64
      %v4663 = vpop.permute.xlu0 %4662
      %4664 = vrot.lane.b32.xlu0 %v4364, 64
      %v4665 = vpop.permute.xlu0 %4664
      %4666 = vrot.lane.b32.xlu0 %v4365, 64
      %v4667 = vpop.permute.xlu0 %4666
      %4668 = vrot.lane.b32.xlu0 %v4366, 64
      %v4669 = vpop.permute.xlu0 %4668
      %4670 = vrot.lane.b32.xlu0 %v4367, 64
      %v4671 = vpop.permute.xlu0 %4670
      %4672 = vrot.lane.b32.xlu0 %v4368, 64
      %v4673 = vpop.permute.xlu0 %4672
      %4674 = vrot.lane.b32.xlu0 %v4369, 64
      %v4675 = vpop.permute.xlu0 %4674
      %4676 = vrot.lane.b32.xlu0 %v4370, 64
      %v4677 = vpop.permute.xlu0 %4676
      %4678 = vrot.lane.b32.xlu0 %v4371, 64
      %v4679 = vpop.permute.xlu0 %4678
      %4680 = vrot.lane.b32.xlu0 %v4372, 64
      %v4681 = vpop.permute.xlu0 %4680
      %4682 = vrot.lane.b32.xlu0 %v4373, 64
      %v4683 = vpop.permute.xlu0 %4682
      %4684 = vrot.lane.b32.xlu0 %v4374, 64
      %v4685 = vpop.permute.xlu0 %4684
      %4686 = vrot.lane.b32.xlu0 %v4375, 64
      %v4687 = vpop.permute.xlu0 %4686
      %4688 = vrot.lane.b32.xlu0 %v4376, 64
      %v4689 = vpop.permute.xlu0 %4688
      %4690 = vrot.lane.b32.xlu0 %v4377, 64
      %v4691 = vpop.permute.xlu0 %4690
      %4692 = vrot.lane.b32.xlu0 %v4378, 64
      %v4693 = vpop.permute.xlu0 %4692
      %4694 = vrot.lane.b32.xlu0 %v4379, 64
      %v4695 = vpop.permute.xlu0 %4694
      %4696 = vrot.lane.b32.xlu0 %v4380, 64
      %v4697 = vpop.permute.xlu0 %4696
      %4698 = vrot.lane.b32.xlu0 %v4381, 64
      %v4699 = vpop.permute.xlu0 %4698
      %4700 = vrot.lane.b32.xlu0 %v4382, 64
      %v4701 = vpop.permute.xlu0 %4700
      %4702 = vrot.lane.b32.xlu0 %v4383, 64
      %v4703 = vpop.permute.xlu0 %4702
      %4704 = vrot.lane.b32.xlu0 %v4384, 64
      %v4705 = vpop.permute.xlu0 %4704
      %4706 = vrot.lane.b32.xlu0 %v4385, 64
      %v4707 = vpop.permute.xlu0 %4706
      %4708 = vrot.lane.b32.xlu0 %v4386, 64
      %v4709 = vpop.permute.xlu0 %4708
      %4710 = vrot.lane.b32.xlu0 %v4387, 64
      %v4711 = vpop.permute.xlu0 %4710
      %v4748 = vmul.f32 %v4281, %v4641
      %v4749 = vmul.f32 %v4283, %v4643
      %v4750 = vmul.f32 %v4285, %v4645
      %v4751 = vmul.f32 %v4287, %v4647
      %v4752 = vmul.f32 %v4289, %v4649
      %v4753 = vmul.f32 %v4291, %v4651
      %v4754 = vmul.f32 %v4293, %v4653
      %v4755 = vmul.f32 %v4295, %v4655
      %v4756 = vmul.f32 %v4297, %v4657
      %v4757 = vmul.f32 %v4299, %v4659
      %v4758 = vmul.f32 %v4301, %v4661
      %v4759 = vmul.f32 %v4303, %v4663
      %v4760 = vmul.f32 %v4305, %v4665
      %v4761 = vmul.f32 %v4307, %v4667
      %v4762 = vmul.f32 %v4309, %v4669
      %v4763 = vmul.f32 %v4311, %v4671
      %v4764 = vmul.f32 %v4313, %v4673
      %v4765 = vmul.f32 %v4315, %v4675
      %v4766 = vmul.f32 %v4317, %v4677
      %v4767 = vmul.f32 %v4319, %v4679
      %v4768 = vmul.f32 %v4321, %v4681
      %v4769 = vmul.f32 %v4323, %v4683
      %v4770 = vmul.f32 %v4325, %v4685
      %v4771 = vmul.f32 %v4327, %v4687
      %v4772 = vmul.f32 %v4329, %v4689
      %v4773 = vmul.f32 %v4331, %v4691
      %v4774 = vmul.f32 %v4333, %v4693
      %v4775 = vmul.f32 %v4335, %v4695
      %v4776 = vmul.f32 %v4337, %v4697
      %v4777 = vmul.f32 %v4339, %v4699
      %v4778 = vmul.f32 %v4341, %v4701
      %v4779 = vmul.f32 %v4343, %v4703
      %v4780 = vmul.f32 %v4345, %v4705
      %v4781 = vmul.f32 %v4347, %v4707
      %v4782 = vmul.f32 %v4349, %v4709
      %v4783 = vmul.f32 %v4351, %v4711
      %4820 = vrot.lane.b32.xlu0 %v4748, 32
      %v4821 = vpop.permute.xlu0 %4820
      %4822 = vrot.lane.b32.xlu0 %v4749, 32
      %v4823 = vpop.permute.xlu0 %4822
      %4824 = vrot.lane.b32.xlu0 %v4750, 32
      %v4825 = vpop.permute.xlu0 %4824
      %4826 = vrot.lane.b32.xlu0 %v4751, 32
      %v4827 = vpop.permute.xlu0 %4826
      %4828 = vrot.lane.b32.xlu0 %v4752, 32
      %v4829 = vpop.permute.xlu0 %4828
      %4830 = vrot.lane.b32.xlu0 %v4753, 32
      %v4831 = vpop.permute.xlu0 %4830
      %4832 = vrot.lane.b32.xlu0 %v4754, 32
      %v4833 = vpop.permute.xlu0 %4832
      %4834 = vrot.lane.b32.xlu0 %v4755, 32
      %v4835 = vpop.permute.xlu0 %4834
      %4836 = vrot.lane.b32.xlu0 %v4756, 32
      %v4837 = vpop.permute.xlu0 %4836
      %4838 = vrot.lane.b32.xlu0 %v4757, 32
      %v4839 = vpop.permute.xlu0 %4838
      %4840 = vrot.lane.b32.xlu0 %v4758, 32
      %v4841 = vpop.permute.xlu0 %4840
      %4842 = vrot.lane.b32.xlu0 %v4759, 32
      %v4843 = vpop.permute.xlu0 %4842
      %4844 = vrot.lane.b32.xlu0 %v4760, 32
      %v4845 = vpop.permute.xlu0 %4844
      %4846 = vrot.lane.b32.xlu0 %v4761, 32
      %v4847 = vpop.permute.xlu0 %4846
      %4848 = vrot.lane.b32.xlu0 %v4762, 32
      %v4849 = vpop.permute.xlu0 %4848
      %4850 = vrot.lane.b32.xlu0 %v4763, 32
      %v4851 = vpop.permute.xlu0 %4850
      %4852 = vrot.lane.b32.xlu0 %v4764, 32
      %v4853 = vpop.permute.xlu0 %4852
      %4854 = vrot.lane.b32.xlu0 %v4765, 32
      %v4855 = vpop.permute.xlu0 %4854
      %4856 = vrot.lane.b32.xlu0 %v4766, 32
      %v4857 = vpop.permute.xlu0 %4856
      %4858 = vrot.lane.b32.xlu0 %v4767, 32
      %v4859 = vpop.permute.xlu0 %4858
      %4860 = vrot.lane.b32.xlu0 %v4768, 32
      %v4861 = vpop.permute.xlu0 %4860
      %4862 = vrot.lane.b32.xlu0 %v4769, 32
      %v4863 = vpop.permute.xlu0 %4862
      %4864 = vrot.lane.b32.xlu0 %v4770, 32
      %v4865 = vpop.permute.xlu0 %4864
      %4866 = vrot.lane.b32.xlu0 %v4771, 32
      %v4867 = vpop.permute.xlu0 %4866
      %4868 = vrot.lane.b32.xlu0 %v4772, 32
      %v4869 = vpop.permute.xlu0 %4868
      %4870 = vrot.lane.b32.xlu0 %v4773, 32
      %v4871 = vpop.permute.xlu0 %4870
      %4872 = vrot.lane.b32.xlu0 %v4774, 32
      %v4873 = vpop.permute.xlu0 %4872
      %4874 = vrot.lane.b32.xlu0 %v4775, 32
      %v4875 = vpop.permute.xlu0 %4874
      %4876 = vrot.lane.b32.xlu0 %v4776, 32
      %v4877 = vpop.permute.xlu0 %4876
      %4878 = vrot.lane.b32.xlu0 %v4777, 32
      %v4879 = vpop.permute.xlu0 %4878
      %4880 = vrot.lane.b32.xlu0 %v4778, 32
      %v4881 = vpop.permute.xlu0 %4880
      %4882 = vrot.lane.b32.xlu0 %v4779, 32
      %v4883 = vpop.permute.xlu0 %4882
      %4884 = vrot.lane.b32.xlu0 %v4780, 32
      %v4885 = vpop.permute.xlu0 %4884
      %4886 = vrot.lane.b32.xlu0 %v4781, 32
      %v4887 = vpop.permute.xlu0 %4886
      %4888 = vrot.lane.b32.xlu0 %v4782, 32
      %v4889 = vpop.permute.xlu0 %4888
      %4890 = vrot.lane.b32.xlu0 %v4783, 32
      %v4891 = vpop.permute.xlu0 %4890
      %v4928 = vadd.f32 %v4568, %v4821
      %v4929 = vadd.f32 %v4569, %v4823
      %v4930 = vadd.f32 %v4570, %v4825
      %v4931 = vadd.f32 %v4571, %v4827
      %v4932 = vadd.f32 %v4572, %v4829
      %v4933 = vadd.f32 %v4573, %v4831
      %v4934 = vadd.f32 %v4574, %v4833
      %v4935 = vadd.f32 %v4575, %v4835
      %v4936 = vadd.f32 %v4576, %v4837
      %v4937 = vadd.f32 %v4577, %v4839
      %v4938 = vadd.f32 %v4578, %v4841
      %v4939 = vadd.f32 %v4579, %v4843
      %v4940 = vadd.f32 %v4580, %v4845
      %v4941 = vadd.f32 %v4581, %v4847
      %v4942 = vadd.f32 %v4582, %v4849
      %v4943 = vadd.f32 %v4583, %v4851
      %v4944 = vadd.f32 %v4584, %v4853
      %v4945 = vadd.f32 %v4585, %v4855
      %v4946 = vadd.f32 %v4586, %v4857
      %v4947 = vadd.f32 %v4587, %v4859
      %v4948 = vadd.f32 %v4588, %v4861
      %v4949 = vadd.f32 %v4589, %v4863
      %v4950 = vadd.f32 %v4590, %v4865
      %v4951 = vadd.f32 %v4591, %v4867
      %v4952 = vadd.f32 %v4592, %v4869
      %v4953 = vadd.f32 %v4593, %v4871
      %v4954 = vadd.f32 %v4594, %v4873
      %v4955 = vadd.f32 %v4595, %v4875
      %v4956 = vadd.f32 %v4596, %v4877
      %v4957 = vadd.f32 %v4597, %v4879
      %v4958 = vadd.f32 %v4598, %v4881
      %v4959 = vadd.f32 %v4599, %v4883
      %v4960 = vadd.f32 %v4600, %v4885
      %v4961 = vadd.f32 %v4601, %v4887
      %v4962 = vadd.f32 %v4602, %v4889
      %v4963 = vadd.f32 %v4603, %v4891
      %v4964 = vtanh.pop %v4928
      %v4965 = vtanh.pop %v4929
      %v4966 = vtanh.pop %v4930
      %v4967 = vtanh.pop %v4931
      %v4968 = vtanh.pop %v4932
      %v4969 = vtanh.pop %v4933
      %v4970 = vtanh.pop %v4934
      %v4971 = vtanh.pop %v4935
      %v4972 = vtanh.pop %v4936
      %v4973 = vtanh.pop %v4937
      %v4974 = vtanh.pop %v4938
      %v4975 = vtanh.pop %v4939
      %v4976 = vtanh.pop %v4940
      %v4977 = vtanh.pop %v4941
      %v4978 = vtanh.pop %v4942
      %v4979 = vtanh.pop %v4943
      %v4980 = vtanh.pop %v4944
      %v4981 = vtanh.pop %v4945
      %v4982 = vtanh.pop %v4946
      %v4983 = vtanh.pop %v4947
      %v4984 = vtanh.pop %v4948
      %v4985 = vtanh.pop %v4949
      %v4986 = vtanh.pop %v4950
      %v4987 = vtanh.pop %v4951
      %v4988 = vtanh.pop %v4952
      %v4989 = vtanh.pop %v4953
      %v4990 = vtanh.pop %v4954
      %v4991 = vtanh.pop %v4955
      %v4992 = vtanh.pop %v4956
      %v4993 = vtanh.pop %v4957
      %v4994 = vtanh.pop %v4958
      %v4995 = vtanh.pop %v4959
      %v4996 = vtanh.pop %v4960
      %v4997 = vtanh.pop %v4961
      %v4998 = vtanh.pop %v4962
      %v4999 = vtanh.pop %v4963
      %5036 = vrot.lane.b32.xlu0 %v4964, 64
      %v5037 = vpop.permute.xlu0 %5036
      %5038 = vrot.lane.b32.xlu0 %v4965, 64
      %v5039 = vpop.permute.xlu0 %5038
      %5040 = vrot.lane.b32.xlu0 %v4966, 64
      %v5041 = vpop.permute.xlu0 %5040
      %5042 = vrot.lane.b32.xlu0 %v4967, 64
      %v5043 = vpop.permute.xlu0 %5042
      %5044 = vrot.lane.b32.xlu0 %v4968, 64
      %v5045 = vpop.permute.xlu0 %5044
      %5046 = vrot.lane.b32.xlu0 %v4969, 64
      %v5047 = vpop.permute.xlu0 %5046
      %5048 = vrot.lane.b32.xlu0 %v4970, 64
      %v5049 = vpop.permute.xlu0 %5048
      %5050 = vrot.lane.b32.xlu0 %v4971, 64
      %v5051 = vpop.permute.xlu0 %5050
      %5052 = vrot.lane.b32.xlu0 %v4972, 64
      %v5053 = vpop.permute.xlu0 %5052
      %5054 = vrot.lane.b32.xlu0 %v4973, 64
      %v5055 = vpop.permute.xlu0 %5054
      %5056 = vrot.lane.b32.xlu0 %v4974, 64
      %v5057 = vpop.permute.xlu0 %5056
      %5058 = vrot.lane.b32.xlu0 %v4975, 64
      %v5059 = vpop.permute.xlu0 %5058
      %5060 = vrot.lane.b32.xlu0 %v4976, 64
      %v5061 = vpop.permute.xlu0 %5060
      %5062 = vrot.lane.b32.xlu0 %v4977, 64
      %v5063 = vpop.permute.xlu0 %5062
      %5064 = vrot.lane.b32.xlu0 %v4978, 64
      %v5065 = vpop.permute.xlu0 %5064
      %5066 = vrot.lane.b32.xlu0 %v4979, 64
      %v5067 = vpop.permute.xlu0 %5066
      %5068 = vrot.lane.b32.xlu0 %v4980, 64
      %v5069 = vpop.permute.xlu0 %5068
      %5070 = vrot.lane.b32.xlu0 %v4981, 64
      %v5071 = vpop.permute.xlu0 %5070
      %5072 = vrot.lane.b32.xlu0 %v4982, 64
      %v5073 = vpop.permute.xlu0 %5072
      %5074 = vrot.lane.b32.xlu0 %v4983, 64
      %v5075 = vpop.permute.xlu0 %5074
      %5076 = vrot.lane.b32.xlu0 %v4984, 64
      %v5077 = vpop.permute.xlu0 %5076
      %5078 = vrot.lane.b32.xlu0 %v4985, 64
      %v5079 = vpop.permute.xlu0 %5078
      %5080 = vrot.lane.b32.xlu0 %v4986, 64
      %v5081 = vpop.permute.xlu0 %5080
      %5082 = vrot.lane.b32.xlu0 %v4987, 64
      %v5083 = vpop.permute.xlu0 %5082
      %5084 = vrot.lane.b32.xlu0 %v4988, 64
      %v5085 = vpop.permute.xlu0 %5084
      %5086 = vrot.lane.b32.xlu0 %v4989, 64
      %v5087 = vpop.permute.xlu0 %5086
      %5088 = vrot.lane.b32.xlu0 %v4990, 64
      %v5089 = vpop.permute.xlu0 %5088
      %5090 = vrot.lane.b32.xlu0 %v4991, 64
      %v5091 = vpop.permute.xlu0 %5090
      %5092 = vrot.lane.b32.xlu0 %v4992, 64
      %v5093 = vpop.permute.xlu0 %5092
      %5094 = vrot.lane.b32.xlu0 %v4993, 64
      %v5095 = vpop.permute.xlu0 %5094
      %5096 = vrot.lane.b32.xlu0 %v4994, 64
      %v5097 = vpop.permute.xlu0 %5096
      %5098 = vrot.lane.b32.xlu0 %v4995, 64
      %v5099 = vpop.permute.xlu0 %5098
      %5100 = vrot.lane.b32.xlu0 %v4996, 64
      %v5101 = vpop.permute.xlu0 %5100
      %5102 = vrot.lane.b32.xlu0 %v4997, 64
      %v5103 = vpop.permute.xlu0 %5102
      %5104 = vrot.lane.b32.xlu0 %v4998, 64
      %v5105 = vpop.permute.xlu0 %5104
      %5106 = vrot.lane.b32.xlu0 %v4999, 64
      %v5107 = vpop.permute.xlu0 %5106
      %v5144 = vmul.f32 %v4281, %v5037
      %v5145 = vmul.f32 %v4283, %v5039
      %v5146 = vmul.f32 %v4285, %v5041
      %v5147 = vmul.f32 %v4287, %v5043
      %v5148 = vmul.f32 %v4289, %v5045
      %v5149 = vmul.f32 %v4291, %v5047
      %v5150 = vmul.f32 %v4293, %v5049
      %v5151 = vmul.f32 %v4295, %v5051
      %v5152 = vmul.f32 %v4297, %v5053
      %v5153 = vmul.f32 %v4299, %v5055
      %v5154 = vmul.f32 %v4301, %v5057
      %v5155 = vmul.f32 %v4303, %v5059
      %v5156 = vmul.f32 %v4305, %v5061
      %v5157 = vmul.f32 %v4307, %v5063
      %v5158 = vmul.f32 %v4309, %v5065
      %v5159 = vmul.f32 %v4311, %v5067
      %v5160 = vmul.f32 %v4313, %v5069
      %v5161 = vmul.f32 %v4315, %v5071
      %v5162 = vmul.f32 %v4317, %v5073
      %v5163 = vmul.f32 %v4319, %v5075
      %v5164 = vmul.f32 %v4321, %v5077
      %v5165 = vmul.f32 %v4323, %v5079
      %v5166 = vmul.f32 %v4325, %v5081
      %v5167 = vmul.f32 %v4327, %v5083
      %v5168 = vmul.f32 %v4329, %v5085
      %v5169 = vmul.f32 %v4331, %v5087
      %v5170 = vmul.f32 %v4333, %v5089
      %v5171 = vmul.f32 %v4335, %v5091
      %v5172 = vmul.f32 %v4337, %v5093
      %v5173 = vmul.f32 %v4339, %v5095
      %v5174 = vmul.f32 %v4341, %v5097
      %v5175 = vmul.f32 %v4343, %v5099
      %v5176 = vmul.f32 %v4345, %v5101
      %v5177 = vmul.f32 %v4347, %v5103
      %v5178 = vmul.f32 %v4349, %v5105
      %v5179 = vmul.f32 %v4351, %v5107
      %5216 = vrot.lane.b32.xlu0 %v4928, 96
      %v5217 = vpop.permute.xlu0 %5216
      %5218 = vrot.lane.b32.xlu0 %v4929, 96
      %v5219 = vpop.permute.xlu0 %5218
      %5220 = vrot.lane.b32.xlu0 %v4930, 96
      %v5221 = vpop.permute.xlu0 %5220
      %5222 = vrot.lane.b32.xlu0 %v4931, 96
      %v5223 = vpop.permute.xlu0 %5222
      %5224 = vrot.lane.b32.xlu0 %v4932, 96
      %v5225 = vpop.permute.xlu0 %5224
      %5226 = vrot.lane.b32.xlu0 %v4933, 96
      %v5227 = vpop.permute.xlu0 %5226
      %5228 = vrot.lane.b32.xlu0 %v4934, 96
      %v5229 = vpop.permute.xlu0 %5228
      %5230 = vrot.lane.b32.xlu0 %v4935, 96
      %v5231 = vpop.permute.xlu0 %5230
      %5232 = vrot.lane.b32.xlu0 %v4936, 96
      %v5233 = vpop.permute.xlu0 %5232
      %5234 = vrot.lane.b32.xlu0 %v4937, 96
      %v5235 = vpop.permute.xlu0 %5234
      %5236 = vrot.lane.b32.xlu0 %v4938, 96
      %v5237 = vpop.permute.xlu0 %5236
      %5238 = vrot.lane.b32.xlu0 %v4939, 96
      %v5239 = vpop.permute.xlu0 %5238
      %5240 = vrot.lane.b32.xlu0 %v4940, 96
      %v5241 = vpop.permute.xlu0 %5240
      %5242 = vrot.lane.b32.xlu0 %v4941, 96
      %v5243 = vpop.permute.xlu0 %5242
      %5244 = vrot.lane.b32.xlu0 %v4942, 96
      %v5245 = vpop.permute.xlu0 %5244
      %5246 = vrot.lane.b32.xlu0 %v4943, 96
      %v5247 = vpop.permute.xlu0 %5246
      %5248 = vrot.lane.b32.xlu0 %v4944, 96
      %v5249 = vpop.permute.xlu0 %5248
      %5250 = vrot.lane.b32.xlu0 %v4945, 96
      %v5251 = vpop.permute.xlu0 %5250
      %5252 = vrot.lane.b32.xlu0 %v4946, 96
      %v5253 = vpop.permute.xlu0 %5252
      %5254 = vrot.lane.b32.xlu0 %v4947, 96
      %v5255 = vpop.permute.xlu0 %5254
      %5256 = vrot.lane.b32.xlu0 %v4948, 96
      %v5257 = vpop.permute.xlu0 %5256
      %5258 = vrot.lane.b32.xlu0 %v4949, 96
      %v5259 = vpop.permute.xlu0 %5258
      %5260 = vrot.lane.b32.xlu0 %v4950, 96
      %v5261 = vpop.permute.xlu0 %5260
      %5262 = vrot.lane.b32.xlu0 %v4951, 96
      %v5263 = vpop.permute.xlu0 %5262
      %5264 = vrot.lane.b32.xlu0 %v4952, 96
      %v5265 = vpop.permute.xlu0 %5264
      %5266 = vrot.lane.b32.xlu0 %v4953, 96
      %v5267 = vpop.permute.xlu0 %5266
      %5268 = vrot.lane.b32.xlu0 %v4954, 96
      %v5269 = vpop.permute.xlu0 %5268
      %5270 = vrot.lane.b32.xlu0 %v4955, 96
      %v5271 = vpop.permute.xlu0 %5270
      %5272 = vrot.lane.b32.xlu0 %v4956, 96
      %v5273 = vpop.permute.xlu0 %5272
      %5274 = vrot.lane.b32.xlu0 %v4957, 96
      %v5275 = vpop.permute.xlu0 %5274
      %5276 = vrot.lane.b32.xlu0 %v4958, 96
      %v5277 = vpop.permute.xlu0 %5276
      %5278 = vrot.lane.b32.xlu0 %v4959, 96
      %v5279 = vpop.permute.xlu0 %5278
      %5280 = vrot.lane.b32.xlu0 %v4960, 96
      %v5281 = vpop.permute.xlu0 %5280
      %5282 = vrot.lane.b32.xlu0 %v4961, 96
      %v5283 = vpop.permute.xlu0 %5282
      %5284 = vrot.lane.b32.xlu0 %v4962, 96
      %v5285 = vpop.permute.xlu0 %5284
      %5286 = vrot.lane.b32.xlu0 %v4963, 96
      %v5287 = vpop.permute.xlu0 %5286
      %vm5324 = vcmask 261120
      %5325 = vst.msk [vmem:[%s257] sm:$0xff] %vm5324, %v5217
      %5326 = vst.msk [vmem:[%s257 + $0x8] sm:$0xff] %vm5324, %v5219
      %5327 = vst.msk [vmem:[%s257 + $0x10] sm:$0xff] %vm5324, %v5221
      %5328 = vst.msk [vmem:[%s257 + $0x18] sm:$0xff] %vm5324, %v5223
      %5329 = vst.msk [vmem:[%s257 + $0x20] sm:$0xff] %vm5324, %v5225
      %5330 = vst.msk [vmem:[%s257 + $0x28] sm:$0xff] %vm5324, %v5227
      %5331 = vst.msk [vmem:[%s257 + $0x30] sm:$0xff] %vm5324, %v5229
      %5332 = vst.msk [vmem:[%s257 + $0x38] sm:$0xff] %vm5324, %v5231
      %5333 = vst.msk [vmem:[%s257 + $0x40] sm:$0xff] %vm5324, %v5233
      %5334 = vst.msk [vmem:[%s257 + $0x48] sm:$0xff] %vm5324, %v5235
      %5335 = vst.msk [vmem:[%s257 + $0x50] sm:$0xff] %vm5324, %v5237
      %5336 = vst.msk [vmem:[%s257 + $0x58] sm:$0xff] %vm5324, %v5239
      %5337 = vst.msk [vmem:[%s257 + $0x60] sm:$0xff] %vm5324, %v5241
      %5338 = vst.msk [vmem:[%s257 + $0x68] sm:$0xff] %vm5324, %v5243
      %5339 = vst.msk [vmem:[%s257 + $0x70] sm:$0xff] %vm5324, %v5245
      %5340 = vst.msk [vmem:[%s257 + $0x78] sm:$0xff] %vm5324, %v5247
      %5341 = vst.msk [vmem:[%s257 + $0x80] sm:$0xff] %vm5324, %v5249
      %5342 = vst.msk [vmem:[%s257 + $0x88] sm:$0xff] %vm5324, %v5251
      %5343 = vst.msk [vmem:[%s257 + $0x90] sm:$0xff] %vm5324, %v5253
      %5344 = vst.msk [vmem:[%s257 + $0x98] sm:$0xff] %vm5324, %v5255
      %5345 = vst.msk [vmem:[%s257 + $0xa0] sm:$0xff] %vm5324, %v5257
      %5346 = vst.msk [vmem:[%s257 + $0xa8] sm:$0xff] %vm5324, %v5259
      %5347 = vst.msk [vmem:[%s257 + $0xb0] sm:$0xff] %vm5324, %v5261
      %5348 = vst.msk [vmem:[%s257 + $0xb8] sm:$0xff] %vm5324, %v5263
      %5349 = vst.msk [vmem:[%s257 + $0xc0] sm:$0xff] %vm5324, %v5265
      %5350 = vst.msk [vmem:[%s257 + $0xc8] sm:$0xff] %vm5324, %v5267
      %5351 = vst.msk [vmem:[%s257 + $0xd0] sm:$0xff] %vm5324, %v5269
      %5352 = vst.msk [vmem:[%s257 + $0xd8] sm:$0xff] %vm5324, %v5271
      %5353 = vst.msk [vmem:[%s257 + $0xe0] sm:$0xff] %vm5324, %v5273
      %5354 = vst.msk [vmem:[%s257 + $0xe8] sm:$0xff] %vm5324, %v5275
      %5355 = vst.msk [vmem:[%s257 + $0xf0] sm:$0xff] %vm5324, %v5277
      %5356 = vst.msk [vmem:[%s257 + $0xf8] sm:$0xff] %vm5324, %v5279
      %5357 = vst.msk [vmem:[%s257 + $0x100] sm:$0xff] %vm5324, %v5281
      %5358 = vst.msk [vmem:[%s257 + $0x108] sm:$0xff] %vm5324, %v5283
      %5359 = vst.msk [vmem:[%s257 + $0x110] sm:$0xff] %vm5324, %v5285
      %5360 = vst.msk [vmem:[%s257 + $0x118] sm:$0xff] %vm5324, %v5287
      %5397 = vrot.lane.b32.xlu0 %v5144, 32
      %v5398 = vpop.permute.xlu0 %5397
      %5399 = vrot.lane.b32.xlu0 %v5145, 32
      %v5400 = vpop.permute.xlu0 %5399
      %5401 = vrot.lane.b32.xlu0 %v5146, 32
      %v5402 = vpop.permute.xlu0 %5401
      %5403 = vrot.lane.b32.xlu0 %v5147, 32
      %v5404 = vpop.permute.xlu0 %5403
      %5405 = vrot.lane.b32.xlu0 %v5148, 32
      %v5406 = vpop.permute.xlu0 %5405
      %5407 = vrot.lane.b32.xlu0 %v5149, 32
      %v5408 = vpop.permute.xlu0 %5407
      %5409 = vrot.lane.b32.xlu0 %v5150, 32
      %v5410 = vpop.permute.xlu0 %5409
      %5411 = vrot.lane.b32.xlu0 %v5151, 32
      %v5412 = vpop.permute.xlu0 %5411
      %5413 = vrot.lane.b32.xlu0 %v5152, 32
      %v5414 = vpop.permute.xlu0 %5413
      %5415 = vrot.lane.b32.xlu0 %v5153, 32
      %v5416 = vpop.permute.xlu0 %5415
      %5417 = vrot.lane.b32.xlu0 %v5154, 32
      %v5418 = vpop.permute.xlu0 %5417
      %5419 = vrot.lane.b32.xlu0 %v5155, 32
      %v5420 = vpop.permute.xlu0 %5419
      %5421 = vrot.lane.b32.xlu0 %v5156, 32
      %v5422 = vpop.permute.xlu0 %5421
      %5423 = vrot.lane.b32.xlu0 %v5157, 32
      %v5424 = vpop.permute.xlu0 %5423
      %5425 = vrot.lane.b32.xlu0 %v5158, 32
      %v5426 = vpop.permute.xlu0 %5425
      %5427 = vrot.lane.b32.xlu0 %v5159, 32
      %v5428 = vpop.permute.xlu0 %5427
      %5429 = vrot.lane.b32.xlu0 %v5160, 32
      %v5430 = vpop.permute.xlu0 %5429
      %5431 = vrot.lane.b32.xlu0 %v5161, 32
      %v5432 = vpop.permute.xlu0 %5431
      %5433 = vrot.lane.b32.xlu0 %v5162, 32
      %v5434 = vpop.permute.xlu0 %5433
      %5435 = vrot.lane.b32.xlu0 %v5163, 32
      %v5436 = vpop.permute.xlu0 %5435
      %5437 = vrot.lane.b32.xlu0 %v5164, 32
      %v5438 = vpop.permute.xlu0 %5437
      %5439 = vrot.lane.b32.xlu0 %v5165, 32
      %v5440 = vpop.permute.xlu0 %5439
      %5441 = vrot.lane.b32.xlu0 %v5166, 32
      %v5442 = vpop.permute.xlu0 %5441
      %5443 = vrot.lane.b32.xlu0 %v5167, 32
      %v5444 = vpop.permute.xlu0 %5443
      %5445 = vrot.lane.b32.xlu0 %v5168, 32
      %v5446 = vpop.permute.xlu0 %5445
      %5447 = vrot.lane.b32.xlu0 %v5169, 32
      %v5448 = vpop.permute.xlu0 %5447
      %5449 = vrot.lane.b32.xlu0 %v5170, 32
      %v5450 = vpop.permute.xlu0 %5449
      %5451 = vrot.lane.b32.xlu0 %v5171, 32
      %v5452 = vpop.permute.xlu0 %5451
      %5453 = vrot.lane.b32.xlu0 %v5172, 32
      %v5454 = vpop.permute.xlu0 %5453
      %5455 = vrot.lane.b32.xlu0 %v5173, 32
      %v5456 = vpop.permute.xlu0 %5455
      %5457 = vrot.lane.b32.xlu0 %v5174, 32
      %v5458 = vpop.permute.xlu0 %5457
      %5459 = vrot.lane.b32.xlu0 %v5175, 32
      %v5460 = vpop.permute.xlu0 %5459
      %5461 = vrot.lane.b32.xlu0 %v5176, 32
      %v5462 = vpop.permute.xlu0 %5461
      %5463 = vrot.lane.b32.xlu0 %v5177, 32
      %v5464 = vpop.permute.xlu0 %5463
      %5465 = vrot.lane.b32.xlu0 %v5178, 32
      %v5466 = vpop.permute.xlu0 %5465
      %5467 = vrot.lane.b32.xlu0 %v5179, 32
      %v5468 = vpop.permute.xlu0 %5467
      %5505 = vst.msk [vmem:[%s252] sm:$0xff] %vm5324, %v5398
      %5506 = vst.msk [vmem:[%s252 + $0x8] sm:$0xff] %vm5324, %v5400
      %5507 = vst.msk [vmem:[%s252 + $0x10] sm:$0xff] %vm5324, %v5402
      %5508 = vst.msk [vmem:[%s252 + $0x18] sm:$0xff] %vm5324, %v5404
      %5509 = vst.msk [vmem:[%s252 + $0x20] sm:$0xff] %vm5324, %v5406
      %5510 = vst.msk [vmem:[%s252 + $0x28] sm:$0xff] %vm5324, %v5408
      %5511 = vst.msk [vmem:[%s252 + $0x30] sm:$0xff] %vm5324, %v5410
      %5512 = vst.msk [vmem:[%s252 + $0x38] sm:$0xff] %vm5324, %v5412
      %5513 = vst.msk [vmem:[%s252 + $0x40] sm:$0xff] %vm5324, %v5414
      %5514 = vst.msk [vmem:[%s252 + $0x48] sm:$0xff] %vm5324, %v5416
      %5515 = vst.msk [vmem:[%s252 + $0x50] sm:$0xff] %vm5324, %v5418
      %5516 = vst.msk [vmem:[%s252 + $0x58] sm:$0xff] %vm5324, %v5420
      %5517 = vst.msk [vmem:[%s252 + $0x60] sm:$0xff] %vm5324, %v5422
      %5518 = vst.msk [vmem:[%s252 + $0x68] sm:$0xff] %vm5324, %v5424
      %5519 = vst.msk [vmem:[%s252 + $0x70] sm:$0xff] %vm5324, %v5426
      %5520 = vst.msk [vmem:[%s252 + $0x78] sm:$0xff] %vm5324, %v5428
      %5521 = vst.msk [vmem:[%s252 + $0x80] sm:$0xff] %vm5324, %v5430
      %5522 = vst.msk [vmem:[%s252 + $0x88] sm:$0xff] %vm5324, %v5432
      %5523 = vst.msk [vmem:[%s252 + $0x90] sm:$0xff] %vm5324, %v5434
      %5524 = vst.msk [vmem:[%s252 + $0x98] sm:$0xff] %vm5324, %v5436
      %5525 = vst.msk [vmem:[%s252 + $0xa0] sm:$0xff] %vm5324, %v5438
      %5526 = vst.msk [vmem:[%s252 + $0xa8] sm:$0xff] %vm5324, %v5440
      %5527 = vst.msk [vmem:[%s252 + $0xb0] sm:$0xff] %vm5324, %v5442
      %5528 = vst.msk [vmem:[%s252 + $0xb8] sm:$0xff] %vm5324, %v5444
      %5529 = vst.msk [vmem:[%s252 + $0xc0] sm:$0xff] %vm5324, %v5446
      %5530 = vst.msk [vmem:[%s252 + $0xc8] sm:$0xff] %vm5324, %v5448
      %5531 = vst.msk [vmem:[%s252 + $0xd0] sm:$0xff] %vm5324, %v5450
      %5532 = vst.msk [vmem:[%s252 + $0xd8] sm:$0xff] %vm5324, %v5452
      %5533 = vst.msk [vmem:[%s252 + $0xe0] sm:$0xff] %vm5324, %v5454
      %5534 = vst.msk [vmem:[%s252 + $0xe8] sm:$0xff] %vm5324, %v5456
      %5535 = vst.msk [vmem:[%s252 + $0xf0] sm:$0xff] %vm5324, %v5458
      %5536 = vst.msk [vmem:[%s252 + $0xf8] sm:$0xff] %vm5324, %v5460
      %5537 = vst.msk [vmem:[%s252 + $0x100] sm:$0xff] %vm5324, %v5462
      %5538 = vst.msk [vmem:[%s252 + $0x108] sm:$0xff] %vm5324, %v5464
      %5539 = vst.msk [vmem:[%s252 + $0x110] sm:$0xff] %vm5324, %v5466
      %5540 = vst.msk [vmem:[%s252 + $0x118] sm:$0xff] %vm5324, %v5468
      %p5541 = scmp.lt.s32.totalorder %s17, 1
      %s5542 = scalar_select %p5541, %s17, 1
      %s5543 = smul.addr %s5542, 36
      %s5544 = smul.addr %s5543, 8
      %s5545 = scalar_lea.vmem %s4, %s5544
      %p5546 = scmp.lt.s32.totalorder %s17, 1
      %s5547 = scalar_select %p5546, %s17, 1
      %s5548 = smul.addr %s5547, 36
      %s5549 = smul.addr %s5548, 8
      %s5550 = scalar_lea.vmem %s5, %s5549
      // Predicated region
      $region37: #{conv_lstm_forward.8} parent=35 // pred_check
        %p5551 = pneg %p129
      $region38: #{conv_lstm_forward.8} parent=35 // pred_check_branch
        %5553 = sbr.rel (%p5551) target = $region40
      $region39: #{conv_lstm_forward.8} parent=35 // pred_region
        _
      $region40: #{conv_lstm_forward.8} parent=35 // pred_fallthru
        _
      // Predicated region
      $region41: #{conv_lstm_forward.8} parent=35 // pred_check
        %p5554 = pneg %p155
      $region42: #{conv_lstm_forward.8} parent=35 // pred_check_branch
        %5556 = sbr.rel (%p5554) target = $region44
      $region43: #{conv_lstm_forward.8} parent=35 // pred_region
        _
      $region44: #{conv_lstm_forward.8} parent=35 // pred_fallthru
        _
    $region36: #{conv_lstm_forward.8} parent=5 // pred_fallthru
      _
    %p5557 = scmp.le.s32.totalorder 2, %s12
    // Predicated region
    $region45: #{conv_lstm_forward.8} parent=5 // pred_check
      %p5558 = pneg %p5557
    $region46: #{conv_lstm_forward.8} parent=5 // pred_check_branch
      %5560 = sbr.rel (%p5558) target = $region48
    $region47: #{conv_lstm_forward.8} parent=5 // pred_region
      %s5561 = ssub.s32 %s12, 2
      // Predicated region
      $region49: #{conv_lstm_forward.8} parent=47 // pred_check
        %p5562 = pneg %p135
      $region50: #{conv_lstm_forward.8} parent=47 // pred_check_branch
        %5564 = sbr.rel (%p5562) target = $region52
      $region51: #{conv_lstm_forward.8} parent=47 // pred_region
        %p5565 = scmp.lt.s32.totalorder %s18, 1
        %s5566 = scalar_select %p5565, %s18, 1
        %s5567 = smul.addr %s5566, 36
        %s5568 = smul.addr %s5567, 8
        %s5569 = scalar_lea.vmem %s4, %s5568
      $region52: #{conv_lstm_forward.8} parent=47 // pred_fallthru
        _
      // Predicated region
      $region53: #{conv_lstm_forward.8} parent=47 // pred_check
        %p5570 = pneg %p161
      $region54: #{conv_lstm_forward.8} parent=47 // pred_check_branch
        %5572 = sbr.rel (%p5570) target = $region56
      $region55: #{conv_lstm_forward.8} parent=47 // pred_region
        %p5573 = scmp.lt.s32.totalorder %s18, 1
        %s5574 = scalar_select %p5573, %s18, 1
        %s5575 = smul.addr %s5574, 36
        %s5576 = smul.addr %s5575, 8
        %s5577 = scalar_lea.vmem %s5, %s5576
      $region56: #{conv_lstm_forward.8} parent=47 // pred_fallthru
        _
    $region48: #{conv_lstm_forward.8} parent=5 // pred_fallthru
      _
  $region6: #{conv_lstm_forward.8} parent=0 // loop_footer
    %s16 = sadd.s32 1, %s12
  $region7: #{conv_lstm_forward.8} parent=0 // loop_footer_branch
    %11 = sbr.rel target = $region3
  $region8: #{conv_lstm_forward.8} parent=0 // loop_exit
    _

</llo_original>
